<compile_context>
chip_gen: v6e
topology: v6e:2x2x1
jax: 0.10.0
libtpu: 0.0.40
codegen_flags: <defaults>
</compile_context>

<pallas_src>
import functools

import jax
import jax.numpy as jnp
from jax import lax
from jax.experimental import pallas as pl
from jax.experimental.pallas import tpu as pltpu

EXPANSION = 4
BN_EPS = 1e-5


# ----------------------------- Pallas kernel -------------------------------

def _bottleneck_kernel(x_ref, w1_ref, w2_ref, w3_ref,
                       s1_ref, b1_ref, s2_ref, b2_ref, s3_ref, b3_ref,
                       o_ref, pad_ref):
    """Fused Bottleneck forward for one image tile resident in VMEM.

    x_ref   : (H, W, Cin)       bf16  input tile (batch dim squeezed away)
    w1_ref  : (Cin, Cmid)       bf16  1x1 conv1
    w2_ref  : (9*Cmid, Cmid)    bf16  3x3 conv2, taps flattened into K (tap-major)
    w3_ref  : (Cmid, Cexp)      bf16  1x1 conv3
    s*/b*   : (1, C)            f32   folded BatchNorm scale / bias
    o_ref   : (H, W, Cexp)      bf16  output tile
    pad_ref : (H+2, W+2, Cmid)  f32   scratch: zero-padded conv1 output (halo)
    """
    H, W, Cin = x_ref.shape
    Cmid = w1_ref.shape[1]
    Cexp = w3_ref.shape[1]
    M = H * W

    x = x_ref[...]                                     # (H, W, Cin) bf16, one HBM read
    x2 = x.reshape(M, Cin)

    # ---- stage 1: 1x1 conv + BN + ReLU (bf16 MXU inputs, f32 accumulate) ----
    y1 = jnp.dot(x2, w1_ref[...], preferred_element_type=jnp.float32)
    y1 = jnp.maximum(y1 * s1_ref[...] + b1_ref[...], 0.0)

    # Stash conv1 output into the zero-padded halo buffer (padding=1 for the 3x3).
    pad_ref[...] = jnp.zeros(pad_ref.shape, pad_ref.dtype)
    pad_ref[1:H + 1, 1:W + 1, :] = y1.reshape(H, W, Cmid)

    # ---- stage 2: 3x3 conv as ONE (M, 9*Cmid) x (9*Cmid, Cmid) MXU matmul ----
    # Taps are built in-kernel from the halo buffer (no HBM im2col blowup);
    # tap order kh*3 + kw matches w2_ref's flattened leading axis.
    taps = [pad_ref[kh:kh + H, kw:kw + W, :]
            .reshape(M, Cmid).astype(w2_ref.dtype)
            for kh in range(3) for kw in range(3)]
    patches = jnp.concatenate(taps, axis=-1)           # (M, 9*Cmid) bf16, lane-aligned
    y2 = jnp.dot(patches, w2_ref[...], preferred_element_type=jnp.float32)
    y2 = jnp.maximum(y2 * s2_ref[...] + b2_ref[...], 0.0)

    # ---- stage 3: 1x1 conv + BN + residual (reused from VMEM) + ReLU ----
    y3 = jnp.dot(y2.astype(w3_ref.dtype), w3_ref[...],
                 preferred_element_type=jnp.float32)
    y3 = y3 * s3_ref[...] + b3_ref[...] + x2.astype(jnp.float32)
    o_ref[...] = jnp.maximum(y3, 0.0).reshape(H, W, Cexp).astype(o_ref.dtype)


# ----------------------------- parameters ----------------------------------

def _fold_bn(gamma, beta, mean, var, eps=BN_EPS):
    scale = gamma / jnp.sqrt(var + eps)
    bias = beta - mean * scale
    return scale[None, :], bias[None, :]               # (1, C) f32 for in-kernel bcast


def init_params(key, in_channels, out_channels):
    c_exp = out_channels * EXPANSION
    ks = jax.random.split(key, 6)
    w_std = 0.05
    params = {
        # conv weights stored channels-last-friendly: (Cin, Cout) / (9, Cin, Cout)
        "w1": w_std * jax.random.normal(ks[0], (in_channels, out_channels), jnp.float32),
        "w2": w_std * jax.random.normal(ks[1], (9, out_channels, out_channels), jnp.float32),
        "w3": w_std * jax.random.normal(ks[2], (out_channels, c_exp), jnp.float32),
    }

    def bn_params(k, c):
        k1, k2, k3, k4 = jax.random.split(k, 4)
        gamma = jax.random.uniform(k1, (c,), jnp.float32, 0.5, 1.5)
        beta = 0.1 * jax.random.normal(k2, (c,), jnp.float32)
        mean = 0.1 * jax.random.normal(k3, (c,), jnp.float32)
        var = jax.random.uniform(k4, (c,), jnp.float32, 0.5, 1.5)
        return gamma, beta, mean, var

    params["bn1"] = bn_params(ks[3], out_channels)
    params["bn2"] = bn_params(ks[4], out_channels)
    params["bn3"] = bn_params(ks[5], c_exp)
    return params


# ----------------------------- forward pass --------------------------------

@functools.partial(jax.jit, static_argnames=("stride",))
def bottleneck_forward(x_nchw, params, stride=1):
    # TODO(synk): stride>1 / downsample branch not implemented (downsample=None
    #             requires stride==1 and in_channels == expansion*out_channels).
    assert stride == 1
    N, Cin, H, W = x_nchw.shape
    Cmid = params["w1"].shape[1]
    Cexp = params["w3"].shape[1]
    assert Cexp == Cin, "residual add with downsample=None needs Cin == 4*Cout"

    cdt = jnp.bfloat16                                  # HBM / MXU-input dtype
    x_nhwc = jnp.transpose(x_nchw, (0, 2, 3, 1)).astype(cdt)
    w1 = params["w1"].astype(cdt)
    w2 = params["w2"].astype(cdt).reshape(9 * Cmid, Cmid)   # taps folded into K
    w3 = params["w3"].astype(cdt)
    s1, b1 = _fold_bn(*params["bn1"])
    s2, b2 = _fold_bn(*params["bn2"])
    s3, b3 = _fold_bn(*params["bn3"])

    def _full(a):   # whole-array block, constant index map (weights / BN vectors)
        return pl.BlockSpec(a.shape, lambda n, nd=a.ndim: (0,) * nd)

    grid_spec = pltpu.PrefetchScalarGridSpec(
        num_scalar_prefetch=0,
        grid=(N,),
        in_specs=[
            pl.BlockSpec((None, H, W, Cin), lambda n: (n, 0, 0, 0)),
            _full(w1), _full(w2), _full(w3),
            _full(s1), _full(b1), _full(s2), _full(b2), _full(s3), _full(b3),
        ],
        out_specs=pl.BlockSpec((None, H, W, Cexp), lambda n: (n, 0, 0, 0)),
        scratch_shapes=[pltpu.VMEM((H + 2, W + 2, Cmid), jnp.float32)],
    )

    out = pl.pallas_call(
        _bottleneck_kernel,
        out_shape=jax.ShapeDtypeStruct((N, H, W, Cexp), cdt),
        grid_spec=grid_spec,
        compiler_params=pltpu.CompilerParams(
            dimension_semantics=("parallel",),          # shard batch across TCs (v7x)
            vmem_limit_bytes=32 * 1024 * 1024,          # fits v7x's smaller VMEM
        ),
    )(x_nhwc, w1, w2, w3, s1, b1, s2, b2, s3, b3)

    return jnp.transpose(out, (0, 3, 1, 2)).astype(jnp.float32)


# ----------------------------- pure-JAX reference --------------------------

def bottleneck_reference(x_nchw, params):
    # Precision-matched reference: same bf16 quantization of the inputs/weights
    # as the kernel, but all conv arithmetic in f32 via XLA.
    q = lambda a: a.astype(jnp.bfloat16).astype(jnp.float32)
    x = q(jnp.transpose(x_nchw, (0, 2, 3, 1)))
    w1, w2, w3 = q(params["w1"]), q(params["w2"]), q(params["w3"])

    def bn(y, prm):
        gamma, beta, mean, var = prm
        return (y - mean) / jnp.sqrt(var + BN_EPS) * gamma + beta

    o = jnp.einsum("nhwc,cd->nhwd", x, w1, precision=lax.Precision.HIGHEST)
    o = jax.nn.relu(bn(o, params["bn1"]))
    w2_hwio = w2.reshape(3, 3, o.shape[-1], -1)
    o = lax.conv_general_dilated(o, w2_hwio, (1, 1), "SAME",
                                 dimension_numbers=("NHWC", "HWIO", "NHWC"),
                                 precision=lax.Precision.HIGHEST)
    o = jax.nn.relu(bn(o, params["bn2"]))
    o = jnp.einsum("nhwc,cd->nhwd", o, w3, precision=lax.Precision.HIGHEST)
    o = jax.nn.relu(bn(o, params["bn3"]) + x)
    return jnp.transpose(o, (0, 3, 1, 2))


# ----------------------------- main -----------------------------------------

if __name__ == "__main__":
    key = jax.random.PRNGKey(0)
    kx, kp = jax.random.split(key)

    # Small spatial extent but realistic, 128-aligned bottleneck channel counts
    # (ResNet-50 conv3_x widths) so the MXU contraction depth and the lane axis
    # are actually filled; downsample=None requires Cin == expansion * Cout.
    N, H, W = 2, 16, 16
    out_channels = 128
    in_channels = out_channels * EXPANSION              # 512

    x = jax.random.normal(kx, (N, in_channels, H, W), jnp.float32)
    params = init_params(kp, in_channels, out_channels)

    y = jax.block_until_ready(bottleneck_forward(x, params, stride=1))
    y_ref = bottleneck_reference(x, params)

    assert y.shape == (N, in_channels, H, W)
    err = float(jnp.max(jnp.abs(y - y_ref)))
    assert jnp.allclose(y, y_ref, rtol=2e-2, atol=2e-2), f"max abs err {err}"

    print("KERNEL_OK")
</pallas_src>

<mosaic_0001>
module attributes {stable_mosaic.version = 11 : i64} {
  func.func @_bottleneck_kernel(%arg0: i32, %arg1: memref<1x16x16x512xbf16, #tpu.memory_space<vmem>>, %arg2: memref<512x128xbf16, #tpu.memory_space<vmem>>, %arg3: memref<1152x128xbf16, #tpu.memory_space<vmem>>, %arg4: memref<128x512xbf16, #tpu.memory_space<vmem>>, %arg5: memref<1x128xf32, #tpu.memory_space<vmem>>, %arg6: memref<1x128xf32, #tpu.memory_space<vmem>>, %arg7: memref<1x128xf32, #tpu.memory_space<vmem>>, %arg8: memref<1x128xf32, #tpu.memory_space<vmem>>, %arg9: memref<1x512xf32, #tpu.memory_space<vmem>>, %arg10: memref<1x512xf32, #tpu.memory_space<vmem>>, %arg11: memref<1x16x16x512xbf16, #tpu.memory_space<vmem>>, %arg12: memref<18x18x128xf32, #tpu.memory_space<vmem>>) attributes {dimension_semantics = [#tpu.dimension_semantics<parallel>], iteration_bounds = array<i64: 2>, scalar_prefetch = 0 : i64, scratch_operands = 1 : i64, tpu.core_type = #tpu.core_type<tc>, window_params = [{transform_indices = @transform_0, window_bounds = array<i64: 1, 16, 16, 512>}, {pipeline_mode = #tpu.pipeline_mode<synchronous>, transform_indices = @transform_1, window_bounds = array<i64: 512, 128>}, {pipeline_mode = #tpu.pipeline_mode<synchronous>, transform_indices = @transform_2, window_bounds = array<i64: 1152, 128>}, {pipeline_mode = #tpu.pipeline_mode<synchronous>, transform_indices = @transform_3, window_bounds = array<i64: 128, 512>}, {pipeline_mode = #tpu.pipeline_mode<synchronous>, transform_indices = @transform_4, window_bounds = array<i64: 1, 128>}, {pipeline_mode = #tpu.pipeline_mode<synchronous>, transform_indices = @transform_5, window_bounds = array<i64: 1, 128>}, {pipeline_mode = #tpu.pipeline_mode<synchronous>, transform_indices = @transform_6, window_bounds = array<i64: 1, 128>}, {pipeline_mode = #tpu.pipeline_mode<synchronous>, transform_indices = @transform_7, window_bounds = array<i64: 1, 128>}, {pipeline_mode = #tpu.pipeline_mode<synchronous>, transform_indices = @transform_8, window_bounds = array<i64: 1, 512>}, {pipeline_mode = #tpu.pipeline_mode<synchronous>, transform_indices = @transform_9, window_bounds = array<i64: 1, 512>}, {transform_indices = @transform_10, window_bounds = array<i64: 1, 16, 16, 512>}]} {
    %c0 = arith.constant 0 : index
    %c0_0 = arith.constant 0 : index
    %c0_1 = arith.constant 0 : index
    %c0_2 = arith.constant 0 : index
    %0 = vector.load %arg1[%c0, %c0_0, %c0_1, %c0_2] : memref<1x16x16x512xbf16, #tpu.memory_space<vmem>>, vector<1x16x16x512xbf16>
    %1 = vector.shape_cast %0 : vector<1x16x16x512xbf16> to vector<16x16x512xbf16>
    %2 = vector.shape_cast %1 : vector<16x16x512xbf16> to vector<256x512xbf16>
    %c0_3 = arith.constant 0 : index
    %c0_4 = arith.constant 0 : index
    %3 = vector.load %arg2[%c0_3, %c0_4] : memref<512x128xbf16, #tpu.memory_space<vmem>>, vector<512x128xbf16>
    %cst = arith.constant dense<0.000000e+00> : vector<256x128xf32>
    %4 = tpu.matmul %2, %3, %cst {dimension_numbers = #tpu.dot_dimension_numbers<[1], [0], [0], [1], [0, 0, 1, 1], [], []>} : vector<256x512xbf16>, vector<512x128xbf16>, vector<256x128xf32> -> vector<256x128xf32>
    %c0_5 = arith.constant 0 : index
    %c0_6 = arith.constant 0 : index
    %5 = vector.load %arg5[%c0_5, %c0_6] : memref<1x128xf32, #tpu.memory_space<vmem>>, vector<1x128xf32>
    %6 = vector.broadcast %5 : vector<1x128xf32> to vector<256x128xf32>
    %7 = arith.mulf %4, %6 : vector<256x128xf32>
    %c0_7 = arith.constant 0 : index
    %c0_8 = arith.constant 0 : index
    %8 = vector.load %arg6[%c0_7, %c0_8] : memref<1x128xf32, #tpu.memory_space<vmem>>, vector<1x128xf32>
    %9 = vector.broadcast %8 : vector<1x128xf32> to vector<256x128xf32>
    %10 = arith.addf %7, %9 : vector<256x128xf32>
    %cst_9 = arith.constant 0.000000e+00 : f32
    %11 = vector.broadcast %cst_9 : f32 to vector<256x128xf32>
    %12 = arith.maximumf %10, %11 : vector<256x128xf32>
    %cst_10 = arith.constant 0.000000e+00 : f32
    %13 = vector.broadcast %cst_10 : f32 to vector<18x18x128xf32>
    %c0_11 = arith.constant 0 : index
    %c0_12 = arith.constant 0 : index
    %c0_13 = arith.constant 0 : index
    %14 = vector.load %arg12[%c0_11, %c0_12, %c0_13] : memref<18x18x128xf32, #tpu.memory_space<vmem>>, vector<18x18x128xf32>
    tpu.vector_store %arg12[%c0_11, %c0_12, %c0_13], %13 {strides = array<i32>} : memref<18x18x128xf32, #tpu.memory_space<vmem>>, vector<18x18x128xf32>,
    %15 = vector.shape_cast %12 : vector<256x128xf32> to vector<16x16x128xf32>
    %c1 = arith.constant 1 : index
    %c1_14 = arith.constant 1 : index
    %c0_15 = arith.constant 0 : index
    %16 = vector.load %arg12[%c1, %c1_14, %c0_15] : memref<18x18x128xf32, #tpu.memory_space<vmem>>, vector<16x16x128xf32>
    tpu.vector_store %arg12[%c1, %c1_14, %c0_15], %15 {strides = array<i32>} : memref<18x18x128xf32, #tpu.memory_space<vmem>>, vector<16x16x128xf32>,
    %c0_16 = arith.constant 0 : index
    %c0_17 = arith.constant 0 : index
    %c0_18 = arith.constant 0 : index
    %17 = vector.load %arg12[%c0_16, %c0_17, %c0_18] : memref<18x18x128xf32, #tpu.memory_space<vmem>>, vector<16x16x128xf32>
    %18 = vector.shape_cast %17 : vector<16x16x128xf32> to vector<256x128xf32>
    %19 = arith.truncf %18 : vector<256x128xf32> to vector<256x128xbf16>
    %c0_19 = arith.constant 0 : index
    %c1_20 = arith.constant 1 : index
    %c0_21 = arith.constant 0 : index
    %20 = vector.load %arg12[%c0_19, %c1_20, %c0_21] : memref<18x18x128xf32, #tpu.memory_space<vmem>>, vector<16x16x128xf32>
    %21 = vector.shape_cast %20 : vector<16x16x128xf32> to vector<256x128xf32>
    %22 = arith.truncf %21 : vector<256x128xf32> to vector<256x128xbf16>
    %c0_22 = arith.constant 0 : index
    %c2 = arith.constant 2 : index
    %c0_23 = arith.constant 0 : index
    %23 = vector.load %arg12[%c0_22, %c2, %c0_23] : memref<18x18x128xf32, #tpu.memory_space<vmem>>, vector<16x16x128xf32>
    %24 = vector.shape_cast %23 : vector<16x16x128xf32> to vector<256x128xf32>
    %25 = arith.truncf %24 : vector<256x128xf32> to vector<256x128xbf16>
    %c1_24 = arith.constant 1 : index
    %c0_25 = arith.constant 0 : index
    %c0_26 = arith.constant 0 : index
    %26 = vector.load %arg12[%c1_24, %c0_25, %c0_26] : memref<18x18x128xf32, #tpu.memory_space<vmem>>, vector<16x16x128xf32>
    %27 = vector.shape_cast %26 : vector<16x16x128xf32> to vector<256x128xf32>
    %28 = arith.truncf %27 : vector<256x128xf32> to vector<256x128xbf16>
    %c1_27 = arith.constant 1 : index
    %c1_28 = arith.constant 1 : index
    %c0_29 = arith.constant 0 : index
    %29 = vector.load %arg12[%c1_27, %c1_28, %c0_29] : memref<18x18x128xf32, #tpu.memory_space<vmem>>, vector<16x16x128xf32>
    %30 = vector.shape_cast %29 : vector<16x16x128xf32> to vector<256x128xf32>
    %31 = arith.truncf %30 : vector<256x128xf32> to vector<256x128xbf16>
    %c1_30 = arith.constant 1 : index
    %c2_31 = arith.constant 2 : index
    %c0_32 = arith.constant 0 : index
    %32 = vector.load %arg12[%c1_30, %c2_31, %c0_32] : memref<18x18x128xf32, #tpu.memory_space<vmem>>, vector<16x16x128xf32>
    %33 = vector.shape_cast %32 : vector<16x16x128xf32> to vector<256x128xf32>
    %34 = arith.truncf %33 : vector<256x128xf32> to vector<256x128xbf16>
    %c2_33 = arith.constant 2 : index
    %c0_34 = arith.constant 0 : index
    %c0_35 = arith.constant 0 : index
    %35 = vector.load %arg12[%c2_33, %c0_34, %c0_35] : memref<18x18x128xf32, #tpu.memory_space<vmem>>, vector<16x16x128xf32>
    %36 = vector.shape_cast %35 : vector<16x16x128xf32> to vector<256x128xf32>
    %37 = arith.truncf %36 : vector<256x128xf32> to vector<256x128xbf16>
    %c2_36 = arith.constant 2 : index
    %c1_37 = arith.constant 1 : index
    %c0_38 = arith.constant 0 : index
    %38 = vector.load %arg12[%c2_36, %c1_37, %c0_38] : memref<18x18x128xf32, #tpu.memory_space<vmem>>, vector<16x16x128xf32>
    %39 = vector.shape_cast %38 : vector<16x16x128xf32> to vector<256x128xf32>
    %40 = arith.truncf %39 : vector<256x128xf32> to vector<256x128xbf16>
    %c2_39 = arith.constant 2 : index
    %c2_40 = arith.constant 2 : index
    %c0_41 = arith.constant 0 : index
    %41 = vector.load %arg12[%c2_39, %c2_40, %c0_41] : memref<18x18x128xf32, #tpu.memory_space<vmem>>, vector<16x16x128xf32>
    %42 = vector.shape_cast %41 : vector<16x16x128xf32> to vector<256x128xf32>
    %43 = arith.truncf %42 : vector<256x128xf32> to vector<256x128xbf16>
    %44 = tpu.concatenate %19, %22, %25, %28, %31, %34, %37, %40, %43 in 1 : vector<256x128xbf16>, vector<256x128xbf16>, vector<256x128xbf16>, vector<256x128xbf16>, vector<256x128xbf16>, vector<256x128xbf16>, vector<256x128xbf16>, vector<256x128xbf16>, vector<256x128xbf16> -> vector<256x1152xbf16>
    %c0_42 = arith.constant 0 : index
    %c0_43 = arith.constant 0 : index
    %45 = vector.load %arg3[%c0_42, %c0_43] : memref<1152x128xbf16, #tpu.memory_space<vmem>>, vector<1152x128xbf16>
    %cst_44 = arith.constant dense<0.000000e+00> : vector<256x128xf32>
    %46 = tpu.matmul %44, %45, %cst_44 {dimension_numbers = #tpu.dot_dimension_numbers<[1], [0], [0], [1], [0, 0, 1, 1], [], []>} : vector<256x1152xbf16>, vector<1152x128xbf16>, vector<256x128xf32> -> vector<256x128xf32>
    %c0_45 = arith.constant 0 : index
    %c0_46 = arith.constant 0 : index
    %47 = vector.load %arg7[%c0_45, %c0_46] : memref<1x128xf32, #tpu.memory_space<vmem>>, vector<1x128xf32>
    %48 = vector.broadcast %47 : vector<1x128xf32> to vector<256x128xf32>
    %49 = arith.mulf %46, %48 : vector<256x128xf32>
    %c0_47 = arith.constant 0 : index
    %c0_48 = arith.constant 0 : index
    %50 = vector.load %arg8[%c0_47, %c0_48] : memref<1x128xf32, #tpu.memory_space<vmem>>, vector<1x128xf32>
    %51 = vector.broadcast %50 : vector<1x128xf32> to vector<256x128xf32>
    %52 = arith.addf %49, %51 : vector<256x128xf32>
    %cst_49 = arith.constant 0.000000e+00 : f32
    %53 = vector.broadcast %cst_49 : f32 to vector<256x128xf32>
    %54 = arith.maximumf %52, %53 : vector<256x128xf32>
    %55 = arith.truncf %54 : vector<256x128xf32> to vector<256x128xbf16>
    %c0_50 = arith.constant 0 : index
    %c0_51 = arith.constant 0 : index
    %56 = vector.load %arg4[%c0_50, %c0_51] : memref<128x512xbf16, #tpu.memory_space<vmem>>, vector<128x512xbf16>
    %cst_52 = arith.constant dense<0.000000e+00> : vector<256x512xf32>
    %57 = tpu.matmul %55, %56, %cst_52 {dimension_numbers = #tpu.dot_dimension_numbers<[1], [0], [0], [1], [0, 0, 1, 1], [], []>} : vector<256x128xbf16>, vector<128x512xbf16>, vector<256x512xf32> -> vector<256x512xf32>
    %c0_53 = arith.constant 0 : index
    %c0_54 = arith.constant 0 : index
    %58 = vector.load %arg9[%c0_53, %c0_54] : memref<1x512xf32, #tpu.memory_space<vmem>>, vector<1x512xf32>
    %59 = vector.broadcast %58 : vector<1x512xf32> to vector<256x512xf32>
    %60 = arith.mulf %57, %59 : vector<256x512xf32>
    %c0_55 = arith.constant 0 : index
    %c0_56 = arith.constant 0 : index
    %61 = vector.load %arg10[%c0_55, %c0_56] : memref<1x512xf32, #tpu.memory_space<vmem>>, vector<1x512xf32>
    %62 = vector.broadcast %61 : vector<1x512xf32> to vector<256x512xf32>
    %63 = arith.addf %60, %62 : vector<256x512xf32>
    %64 = arith.extf %2 : vector<256x512xbf16> to vector<256x512xf32>
    %65 = arith.addf %63, %64 : vector<256x512xf32>
    %cst_57 = arith.constant 0.000000e+00 : f32
    %66 = vector.broadcast %cst_57 : f32 to vector<256x512xf32>
    %67 = arith.maximumf %65, %66 : vector<256x512xf32>
    %68 = vector.shape_cast %67 : vector<256x512xf32> to vector<16x16x512xf32>
    %69 = arith.truncf %68 : vector<16x16x512xf32> to vector<16x16x512xbf16>
    %c0_58 = arith.constant 0 : index
    %c0_59 = arith.constant 0 : index
    %c0_60 = arith.constant 0 : index
    %c0_61 = arith.constant 0 : index
    %70 = vector.load %arg11[%c0_58, %c0_59, %c0_60, %c0_61] : memref<1x16x16x512xbf16, #tpu.memory_space<vmem>>, vector<1x16x16x512xbf16>
    %71 = vector.shape_cast %70 : vector<1x16x16x512xbf16> to vector<16x16x512xbf16>
    %72 = vector.shape_cast %69 : vector<16x16x512xbf16> to vector<1x16x16x512xbf16>
    tpu.vector_store %arg11[%c0_58, %c0_59, %c0_60, %c0_61], %72 {strides = array<i32>} : memref<1x16x16x512xbf16, #tpu.memory_space<vmem>>, vector<1x16x16x512xbf16>,
    return
  }
  func.func @transform_0(%arg0: i32) -> (i32, i32, i32, i32) {
    %c0_i32 = arith.constant 0 : i32
    %c0_i32_0 = arith.constant 0 : i32
    %c0_i32_1 = arith.constant 0 : i32
    %c0_i32_2 = arith.constant 0 : i32
    return %arg0, %c0_i32, %c0_i32_0, %c0_i32_1 : i32, i32, i32, i32
  }
  func.func @transform_1(%arg0: i32) -> (i32, i32) {
    %c0_i32 = arith.constant 0 : i32
    %c0_i32_0 = arith.constant 0 : i32
    %c0_i32_1 = arith.constant 0 : i32
    return %c0_i32, %c0_i32_0 : i32, i32
  }
  func.func @transform_2(%arg0: i32) -> (i32, i32) {
    %c0_i32 = arith.constant 0 : i32
    %c0_i32_0 = arith.constant 0 : i32
    %c0_i32_1 = arith.constant 0 : i32
    return %c0_i32, %c0_i32_0 : i32, i32
  }
  func.func @transform_3(%arg0: i32) -> (i32, i32) {
    %c0_i32 = arith.constant 0 : i32
    %c0_i32_0 = arith.constant 0 : i32
    %c0_i32_1 = arith.constant 0 : i32
    return %c0_i32, %c0_i32_0 : i32, i32
  }
  func.func @transform_4(%arg0: i32) -> (i32, i32) {
    %c0_i32 = arith.constant 0 : i32
    %c0_i32_0 = arith.constant 0 : i32
    %c0_i32_1 = arith.constant 0 : i32
    return %c0_i32, %c0_i32_0 : i32, i32
  }
  func.func @transform_5(%arg0: i32) -> (i32, i32) {
    %c0_i32 = arith.constant 0 : i32
    %c0_i32_0 = arith.constant 0 : i32
    %c0_i32_1 = arith.constant 0 : i32
    return %c0_i32, %c0_i32_0 : i32, i32
  }
  func.func @transform_6(%arg0: i32) -> (i32, i32) {
    %c0_i32 = arith.constant 0 : i32
    %c0_i32_0 = arith.constant 0 : i32
    %c0_i32_1 = arith.constant 0 : i32
    return %c0_i32, %c0_i32_0 : i32, i32
  }
  func.func @transform_7(%arg0: i32) -> (i32, i32) {
    %c0_i32 = arith.constant 0 : i32
    %c0_i32_0 = arith.constant 0 : i32
    %c0_i32_1 = arith.constant 0 : i32
    return %c0_i32, %c0_i32_0 : i32, i32
  }
  func.func @transform_8(%arg0: i32) -> (i32, i32) {
    %c0_i32 = arith.constant 0 : i32
    %c0_i32_0 = arith.constant 0 : i32
    %c0_i32_1 = arith.constant 0 : i32
    return %c0_i32, %c0_i32_0 : i32, i32
  }
  func.func @transform_9(%arg0: i32) -> (i32, i32) {
    %c0_i32 = arith.constant 0 : i32
    %c0_i32_0 = arith.constant 0 : i32
    %c0_i32_1 = arith.constant 0 : i32
    return %c0_i32, %c0_i32_0 : i32, i32
  }
  func.func @transform_10(%arg0: i32) -> (i32, i32, i32, i32) {
    %c0_i32 = arith.constant 0 : i32
    %c0_i32_0 = arith.constant 0 : i32
    %c0_i32_1 = arith.constant 0 : i32
    %c0_i32_2 = arith.constant 0 : i32
    return %arg0, %c0_i32, %c0_i32_0, %c0_i32_1 : i32, i32, i32, i32
  }
}

</mosaic_0001>

<llo_original>
// kernel: bottleneck_forward.1
$region0: #{bottleneck_forward.1}
  #allocation0 [shape = 'u32[]', space=smem, size = 0x4, offset = 0x4, fixed_abs, tag = 'smem constant byte address 0x4 - core index']
  #allocation1 [shape = 'u32[144,128]{1,0:T(1,128)}', space=vmem, size = 0x12000, scoped, tag = 'internal scratch']
  #allocation2 [shape = 'f32[18,18,128]{2,1,0:T(8,128)}', space=vmem, size = 0x36000, scoped, tag = 'scratch operand']
  %s0 = inlined_call_operand.vmem [shape: bf16[2,16,16,512], index: 0, kind: input, shape index: {}]
  %s1 = inlined_call_operand.vmem [shape: bf16[512,128], index: 1, kind: input, shape index: {}]
  %s2 = inlined_call_operand.vmem [shape: bf16[1152,128], index: 2, kind: input, shape index: {}]
  %s3 = inlined_call_operand.vmem [shape: bf16[128,512], index: 3, kind: input, shape index: {}]
  %s4 = inlined_call_operand.vmem [shape: f32[1,128], index: 4, kind: input, shape index: {}]
  %s5 = inlined_call_operand.vmem [shape: f32[1,128], index: 5, kind: input, shape index: {}]
  %s6 = inlined_call_operand.vmem [shape: f32[1,128], index: 6, kind: input, shape index: {}]
  %s7 = inlined_call_operand.vmem [shape: f32[1,128], index: 7, kind: input, shape index: {}]
  %s8 = inlined_call_operand.vmem [shape: f32[1,512], index: 8, kind: input, shape index: {}]
  %s9 = inlined_call_operand.vmem [shape: f32[1,512], index: 9, kind: input, shape index: {}]
  %s10 = inlined_call_operand.vmem [shape: bf16[2,16,16,512], index: 10, kind: output, shape index: {}]
  %s11 = sld [smem:[#allocation0]]
  $region73: #{bottleneck_forward.1} parent=0
    _
  %s13 = ssub.s32 1, %s11
  %s14 = scalar_select 0, %s13, %s11
  loop: start=0, step=1, limit=4
  $region2: #{bottleneck_forward.1} parent=0 // loop_pre_header
    _
  $region3: #{bottleneck_forward.1} parent=0 // loop_header
    %s16 = sphi 0, %s20
    %p17 = scmp.ge.s32.totalorder %s16, 4
    %s26 = sphi 0, %s28
    %s29 = sphi 0, %s26
    %s30 = sphi 0, %s29
    %s46 = sphi 0, %s30
    %s50 = sphi 0, %s50
    %s52 = sphi 0, %s50
    %s53 = sphi 0, %s52
    %s67 = sphi 0, %s53
    %s71 = sphi 0, %s71
    %s73 = sphi 0, %s71
    %s74 = sphi 0, %s73
    %s88 = sphi 0, %s74
    %s92 = sphi 0, %s92
    %s94 = sphi 0, %s92
    %s95 = sphi 0, %s94
    %s109 = sphi 0, %s95
    %s113 = sphi 0, %s113
    %s115 = sphi 0, %s113
    %s116 = sphi 0, %s115
    %s130 = sphi 0, %s116
    %s134 = sphi 0, %s134
    %s136 = sphi 0, %s134
    %s137 = sphi 0, %s136
    %s151 = sphi 0, %s137
    %s155 = sphi 0, %s155
    %s157 = sphi 0, %s155
    %s158 = sphi 0, %s157
    %s172 = sphi 0, %s158
    %s176 = sphi 0, %s176
    %s178 = sphi 0, %s176
    %s179 = sphi 0, %s178
    %s193 = sphi 0, %s179
    %s197 = sphi 0, %s197
    %s199 = sphi 0, %s197
    %s200 = sphi 0, %s199
    %s214 = sphi 0, %s200
    %s218 = sphi 0, %s218
    %s220 = sphi 0, %s218
    %s221 = sphi 0, %s220
    %s235 = sphi 0, %s221
    %s241 = sphi 0, %s243
    %s244 = sphi 0, %s241
    %s245 = sphi 0, %s244
    %s261 = sphi 0, %s245
  $region4: #{bottleneck_forward.1} parent=0 // loop_header_branch
    %19 = sbr.rel (%p17) target = $region8
  $region5: #{bottleneck_forward.1} parent=0 // loop_body
    %s21 = ssub.s32 %s16, 1
    %s22 = ssub.s32 %s16, 2
    %s23 = sadd.s32 %s16, 1
    %s24 = ssub.s32 %s16, %s23
    %p25 = scmp.eq.s32.totalorder %s24, 0
    %s27 = sadd.s32 %s26, 1
    %s28 = scalar_select %p25, %s26, %s27
    %p31 = pneg %p25
    %p32 = scmp.eq.s32.totalorder %s16, 1
    %p33 = por %p31, %p32
    %p34 = scmp.ne.s32.totalorder %s26, %s29
    %p35 = scmp.eq.s32.totalorder %s16, 0
    %p36 = por %p34, %p35
    %p37 = scmp.ne.s32.totalorder %s26, %s29
    %p38 = scmp.eq.s32.totalorder %s21, 1
    %p39 = por %p37, %p38
    %p40 = scmp.ne.s32.totalorder %s29, %s30
    %p41 = scmp.eq.s32.totalorder %s21, 0
    %p42 = por %p40, %p41
    %p43 = scmp.ne.s32.totalorder %s29, %s30
    %p44 = scmp.eq.s32.totalorder %s22, 1
    %p45 = por %p43, %p44
    %p47 = scmp.ne.s32.totalorder %s30, %s46
    %p48 = scmp.eq.s32.totalorder %s22, 0
    %p49 = por %p47, %p48
    %s51 = sadd.s32 %s50, 1
    %p54 = scmp.eq.s32.totalorder %s16, 1
    %p55 = scmp.ne.s32.totalorder %s50, %s52
    %p56 = scmp.eq.s32.totalorder %s16, 0
    %p57 = por %p55, %p56
    %p58 = scmp.ne.s32.totalorder %s50, %s52
    %p59 = scmp.eq.s32.totalorder %s21, 1
    %p60 = por %p58, %p59
    %p61 = scmp.ne.s32.totalorder %s52, %s53
    %p62 = scmp.eq.s32.totalorder %s21, 0
    %p63 = por %p61, %p62
    %p64 = scmp.ne.s32.totalorder %s52, %s53
    %p65 = scmp.eq.s32.totalorder %s22, 1
    %p66 = por %p64, %p65
    %p68 = scmp.ne.s32.totalorder %s53, %s67
    %p69 = scmp.eq.s32.totalorder %s22, 0
    %p70 = por %p68, %p69
    %s72 = sadd.s32 %s71, 1
    %p75 = scmp.eq.s32.totalorder %s16, 1
    %p76 = scmp.ne.s32.totalorder %s71, %s73
    %p77 = scmp.eq.s32.totalorder %s16, 0
    %p78 = por %p76, %p77
    %p79 = scmp.ne.s32.totalorder %s71, %s73
    %p80 = scmp.eq.s32.totalorder %s21, 1
    %p81 = por %p79, %p80
    %p82 = scmp.ne.s32.totalorder %s73, %s74
    %p83 = scmp.eq.s32.totalorder %s21, 0
    %p84 = por %p82, %p83
    %p85 = scmp.ne.s32.totalorder %s73, %s74
    %p86 = scmp.eq.s32.totalorder %s22, 1
    %p87 = por %p85, %p86
    %p89 = scmp.ne.s32.totalorder %s74, %s88
    %p90 = scmp.eq.s32.totalorder %s22, 0
    %p91 = por %p89, %p90
    %s93 = sadd.s32 %s92, 1
    %p96 = scmp.eq.s32.totalorder %s16, 1
    %p97 = scmp.ne.s32.totalorder %s92, %s94
    %p98 = scmp.eq.s32.totalorder %s16, 0
    %p99 = por %p97, %p98
    %p100 = scmp.ne.s32.totalorder %s92, %s94
    %p101 = scmp.eq.s32.totalorder %s21, 1
    %p102 = por %p100, %p101
    %p103 = scmp.ne.s32.totalorder %s94, %s95
    %p104 = scmp.eq.s32.totalorder %s21, 0
    %p105 = por %p103, %p104
    %p106 = scmp.ne.s32.totalorder %s94, %s95
    %p107 = scmp.eq.s32.totalorder %s22, 1
    %p108 = por %p106, %p107
    %p110 = scmp.ne.s32.totalorder %s95, %s109
    %p111 = scmp.eq.s32.totalorder %s22, 0
    %p112 = por %p110, %p111
    %s114 = sadd.s32 %s113, 1
    %p117 = scmp.eq.s32.totalorder %s16, 1
    %p118 = scmp.ne.s32.totalorder %s113, %s115
    %p119 = scmp.eq.s32.totalorder %s16, 0
    %p120 = por %p118, %p119
    %p121 = scmp.ne.s32.totalorder %s113, %s115
    %p122 = scmp.eq.s32.totalorder %s21, 1
    %p123 = por %p121, %p122
    %p124 = scmp.ne.s32.totalorder %s115, %s116
    %p125 = scmp.eq.s32.totalorder %s21, 0
    %p126 = por %p124, %p125
    %p127 = scmp.ne.s32.totalorder %s115, %s116
    %p128 = scmp.eq.s32.totalorder %s22, 1
    %p129 = por %p127, %p128
    %p131 = scmp.ne.s32.totalorder %s116, %s130
    %p132 = scmp.eq.s32.totalorder %s22, 0
    %p133 = por %p131, %p132
    %s135 = sadd.s32 %s134, 1
    %p138 = scmp.eq.s32.totalorder %s16, 1
    %p139 = scmp.ne.s32.totalorder %s134, %s136
    %p140 = scmp.eq.s32.totalorder %s16, 0
    %p141 = por %p139, %p140
    %p142 = scmp.ne.s32.totalorder %s134, %s136
    %p143 = scmp.eq.s32.totalorder %s21, 1
    %p144 = por %p142, %p143
    %p145 = scmp.ne.s32.totalorder %s136, %s137
    %p146 = scmp.eq.s32.totalorder %s21, 0
    %p147 = por %p145, %p146
    %p148 = scmp.ne.s32.totalorder %s136, %s137
    %p149 = scmp.eq.s32.totalorder %s22, 1
    %p150 = por %p148, %p149
    %p152 = scmp.ne.s32.totalorder %s137, %s151
    %p153 = scmp.eq.s32.totalorder %s22, 0
    %p154 = por %p152, %p153
    %s156 = sadd.s32 %s155, 1
    %p159 = scmp.eq.s32.totalorder %s16, 1
    %p160 = scmp.ne.s32.totalorder %s155, %s157
    %p161 = scmp.eq.s32.totalorder %s16, 0
    %p162 = por %p160, %p161
    %p163 = scmp.ne.s32.totalorder %s155, %s157
    %p164 = scmp.eq.s32.totalorder %s21, 1
    %p165 = por %p163, %p164
    %p166 = scmp.ne.s32.totalorder %s157, %s158
    %p167 = scmp.eq.s32.totalorder %s21, 0
    %p168 = por %p166, %p167
    %p169 = scmp.ne.s32.totalorder %s157, %s158
    %p170 = scmp.eq.s32.totalorder %s22, 1
    %p171 = por %p169, %p170
    %p173 = scmp.ne.s32.totalorder %s158, %s172
    %p174 = scmp.eq.s32.totalorder %s22, 0
    %p175 = por %p173, %p174
    %s177 = sadd.s32 %s176, 1
    %p180 = scmp.eq.s32.totalorder %s16, 1
    %p181 = scmp.ne.s32.totalorder %s176, %s178
    %p182 = scmp.eq.s32.totalorder %s16, 0
    %p183 = por %p181, %p182
    %p184 = scmp.ne.s32.totalorder %s176, %s178
    %p185 = scmp.eq.s32.totalorder %s21, 1
    %p186 = por %p184, %p185
    %p187 = scmp.ne.s32.totalorder %s178, %s179
    %p188 = scmp.eq.s32.totalorder %s21, 0
    %p189 = por %p187, %p188
    %p190 = scmp.ne.s32.totalorder %s178, %s179
    %p191 = scmp.eq.s32.totalorder %s22, 1
    %p192 = por %p190, %p191
    %p194 = scmp.ne.s32.totalorder %s179, %s193
    %p195 = scmp.eq.s32.totalorder %s22, 0
    %p196 = por %p194, %p195
    %s198 = sadd.s32 %s197, 1
    %p201 = scmp.eq.s32.totalorder %s16, 1
    %p202 = scmp.ne.s32.totalorder %s197, %s199
    %p203 = scmp.eq.s32.totalorder %s16, 0
    %p204 = por %p202, %p203
    %p205 = scmp.ne.s32.totalorder %s197, %s199
    %p206 = scmp.eq.s32.totalorder %s21, 1
    %p207 = por %p205, %p206
    %p208 = scmp.ne.s32.totalorder %s199, %s200
    %p209 = scmp.eq.s32.totalorder %s21, 0
    %p210 = por %p208, %p209
    %p211 = scmp.ne.s32.totalorder %s199, %s200
    %p212 = scmp.eq.s32.totalorder %s22, 1
    %p213 = por %p211, %p212
    %p215 = scmp.ne.s32.totalorder %s200, %s214
    %p216 = scmp.eq.s32.totalorder %s22, 0
    %p217 = por %p215, %p216
    %s219 = sadd.s32 %s218, 1
    %p222 = scmp.eq.s32.totalorder %s16, 1
    %p223 = scmp.ne.s32.totalorder %s218, %s220
    %p224 = scmp.eq.s32.totalorder %s16, 0
    %p225 = por %p223, %p224
    %p226 = scmp.ne.s32.totalorder %s218, %s220
    %p227 = scmp.eq.s32.totalorder %s21, 1
    %p228 = por %p226, %p227
    %p229 = scmp.ne.s32.totalorder %s220, %s221
    %p230 = scmp.eq.s32.totalorder %s21, 0
    %p231 = por %p229, %p230
    %p232 = scmp.ne.s32.totalorder %s220, %s221
    %p233 = scmp.eq.s32.totalorder %s22, 1
    %p234 = por %p232, %p233
    %p236 = scmp.ne.s32.totalorder %s221, %s235
    %p237 = scmp.eq.s32.totalorder %s22, 0
    %p238 = por %p236, %p237
    %s239 = ssub.s32 %s16, %s23
    %p240 = scmp.eq.s32.totalorder %s239, 0
    %s242 = sadd.s32 %s241, 1
    %s243 = scalar_select %p240, %s241, %s242
    %p246 = pneg %p240
    %p247 = scmp.eq.s32.totalorder %s16, 1
    %p248 = por %p246, %p247
    %p249 = scmp.ne.s32.totalorder %s241, %s244
    %p250 = scmp.eq.s32.totalorder %s16, 0
    %p251 = por %p249, %p250
    %p252 = scmp.ne.s32.totalorder %s241, %s244
    %p253 = scmp.eq.s32.totalorder %s21, 1
    %p254 = por %p252, %p253
    %p255 = scmp.ne.s32.totalorder %s244, %s245
    %p256 = scmp.eq.s32.totalorder %s21, 0
    %p257 = por %p255, %p256
    %p258 = scmp.ne.s32.totalorder %s244, %s245
    %p259 = scmp.eq.s32.totalorder %s22, 1
    %p260 = por %p258, %p259
    %p262 = scmp.ne.s32.totalorder %s245, %s261
    %p263 = scmp.eq.s32.totalorder %s22, 0
    %p264 = por %p262, %p263
    %p265 = scmp.le.s32.totalorder 1, %s16
    %p266 = scmp.lt.s32.totalorder %s16, 3
    %p267 = pnand %p265, %p266
    %p268 = pneg %p267
    // Predicated region
    $region9: #{bottleneck_forward.1} parent=5 // pred_check
      _
    $region10: #{bottleneck_forward.1} parent=5 // pred_check_branch
      %270 = sbr.rel (%p267) target = $region12
    $region11: #{bottleneck_forward.1} parent=5 // pred_region
      %s271 = ssub.s32 %s16, 1
      // Predicated region
      $region13: #{bottleneck_forward.1} parent=11 // pred_check
        %p272 = pneg %p63
      $region14: #{bottleneck_forward.1} parent=11 // pred_check_branch
        %274 = sbr.rel (%p272) target = $region16
      $region15: #{bottleneck_forward.1} parent=11 // pred_region
        _
      $region16: #{bottleneck_forward.1} parent=11 // pred_fallthru
        _
      // Predicated region
      $region17: #{bottleneck_forward.1} parent=11 // pred_check
        %p275 = pneg %p84
      $region18: #{bottleneck_forward.1} parent=11 // pred_check_branch
        %277 = sbr.rel (%p275) target = $region20
      $region19: #{bottleneck_forward.1} parent=11 // pred_region
        _
      $region20: #{bottleneck_forward.1} parent=11 // pred_fallthru
        _
      // Predicated region
      $region21: #{bottleneck_forward.1} parent=11 // pred_check
        %p278 = pneg %p105
      $region22: #{bottleneck_forward.1} parent=11 // pred_check_branch
        %280 = sbr.rel (%p278) target = $region24
      $region23: #{bottleneck_forward.1} parent=11 // pred_region
        _
      $region24: #{bottleneck_forward.1} parent=11 // pred_fallthru
        _
      // Predicated region
      $region25: #{bottleneck_forward.1} parent=11 // pred_check
        %p281 = pneg %p126
      $region26: #{bottleneck_forward.1} parent=11 // pred_check_branch
        %283 = sbr.rel (%p281) target = $region28
      $region27: #{bottleneck_forward.1} parent=11 // pred_region
        _
      $region28: #{bottleneck_forward.1} parent=11 // pred_fallthru
        _
      // Predicated region
      $region29: #{bottleneck_forward.1} parent=11 // pred_check
        %p284 = pneg %p147
      $region30: #{bottleneck_forward.1} parent=11 // pred_check_branch
        %286 = sbr.rel (%p284) target = $region32
      $region31: #{bottleneck_forward.1} parent=11 // pred_region
        _
      $region32: #{bottleneck_forward.1} parent=11 // pred_fallthru
        _
      // Predicated region
      $region33: #{bottleneck_forward.1} parent=11 // pred_check
        %p287 = pneg %p168
      $region34: #{bottleneck_forward.1} parent=11 // pred_check_branch
        %289 = sbr.rel (%p287) target = $region36
      $region35: #{bottleneck_forward.1} parent=11 // pred_region
        _
      $region36: #{bottleneck_forward.1} parent=11 // pred_fallthru
        _
      // Predicated region
      $region37: #{bottleneck_forward.1} parent=11 // pred_check
        %p290 = pneg %p189
      $region38: #{bottleneck_forward.1} parent=11 // pred_check_branch
        %292 = sbr.rel (%p290) target = $region40
      $region39: #{bottleneck_forward.1} parent=11 // pred_region
        _
      $region40: #{bottleneck_forward.1} parent=11 // pred_fallthru
        _
      // Predicated region
      $region41: #{bottleneck_forward.1} parent=11 // pred_check
        %p293 = pneg %p210
      $region42: #{bottleneck_forward.1} parent=11 // pred_check_branch
        %295 = sbr.rel (%p293) target = $region44
      $region43: #{bottleneck_forward.1} parent=11 // pred_region
        _
      $region44: #{bottleneck_forward.1} parent=11 // pred_fallthru
        _
      // Predicated region
      $region45: #{bottleneck_forward.1} parent=11 // pred_check
        %p296 = pneg %p231
      $region46: #{bottleneck_forward.1} parent=11 // pred_check_branch
        %298 = sbr.rel (%p296) target = $region48
      $region47: #{bottleneck_forward.1} parent=11 // pred_region
        _
      $region48: #{bottleneck_forward.1} parent=11 // pred_fallthru
        _
    $region12: #{bottleneck_forward.1} parent=5 // pred_fallthru
      _
    %p299 = scmp.lt.s32.totalorder %s16, 2
    // Predicated region
    $region49: #{bottleneck_forward.1} parent=5 // pred_check
      %p300 = pneg %p299
    $region50: #{bottleneck_forward.1} parent=5 // pred_check_branch
      %302 = sbr.rel (%p300) target = $region52
    $region51: #{bottleneck_forward.1} parent=5 // pred_region
      // Predicated region
      $region53: #{bottleneck_forward.1} parent=51 // pred_check
        %p303 = pneg %p36
      $region54: #{bottleneck_forward.1} parent=51 // pred_check_branch
        %305 = sbr.rel (%p303) target = $region56
      $region55: #{bottleneck_forward.1} parent=51 // pred_region
        %p306 = scmp.lt.s32.totalorder %s16, 1
        %s307 = scalar_select %p306, %s16, 1
        %s308 = smul.addr %s307, 128
        %s309 = smul.addr %s308, 4
        %s310 = scalar_lea.vmem %s0, %s309
      $region56: #{bottleneck_forward.1} parent=51 // pred_fallthru
        _
    $region52: #{bottleneck_forward.1} parent=5 // pred_fallthru
      _
    %p311 = scmp.le.s32.totalorder 1, %s16
    %p312 = scmp.lt.s32.totalorder %s16, 3
    %p313 = pnand %p311, %p312
    %p314 = pneg %p313
    // Predicated region
    $region57: #{bottleneck_forward.1} parent=5 // pred_check
      _
    $region58: #{bottleneck_forward.1} parent=5 // pred_check_branch
      %316 = sbr.rel (%p313) target = $region60
    $region59: #{bottleneck_forward.1} parent=5 // pred_region
      %s317 = ssub.s32 %s16, 1
      %p318 = scmp.lt.s32.totalorder %s21, 1
      %s319 = scalar_select %p318, %s21, 1
      %s320 = smul.addr %s319, 128
      %s321 = smul.addr %s320, 4
      %s322 = scalar_lea.vmem %s0, %s321
      %p323 = pneg %p42
      %p324 = pneg %p39
      %p325 = pneg %p63
      %p326 = pneg %p60
      %p327 = pneg %p84
      %p328 = pneg %p81
      %p329 = pneg %p105
      %p330 = pneg %p102
      %p331 = pneg %p126
      %p332 = pneg %p123
      %p333 = pneg %p147
      %p334 = pneg %p144
      %p335 = pneg %p168
      %p336 = pneg %p165
      %p337 = pneg %p189
      %p338 = pneg %p186
      %p339 = pneg %p210
      %p340 = pneg %p207
      %p341 = pneg %p231
      %p342 = pneg %p228
      %p343 = pneg %p257
      %p344 = pneg %p254
      %p345 = scmp.lt.s32.totalorder %s21, 1
      %s346 = scalar_select %p345, %s21, 1
      %s347 = smul.addr %s346, 128
      %s348 = smul.addr %s347, 4
      %s349 = scalar_lea.vmem %s10, %s348
      %p350 = scmp.lt.s32.totalorder %s21, 1
      %s351 = scalar_select %p350, %s21, 1
      %s352 = smul.addr %s351, 128
      %s353 = smul.addr %s352, 4
      %s354 = scalar_lea.vmem %s0, %s353
      %p355 = scmp.lt.s32.totalorder %s21, 1
      %s356 = scalar_select %p355, %s21, 1
      %s357 = smul.addr %s356, 128
      %s358 = smul.addr %s357, 4
      %s359 = scalar_lea.vmem %s10, %s358
      %v361 = vld [vmem:[%s354] sm:$0xff]
      %v362 = vld [vmem:[%s354 + $0x8] sm:$0xff]
      %v363 = vld [vmem:[%s354 + $0x10] sm:$0xff]
      %v364 = vld [vmem:[%s354 + $0x18] sm:$0xff]
      %v365 = vld [vmem:[%s354 + $0x20] sm:$0xff]
      %v366 = vld [vmem:[%s354 + $0x28] sm:$0xff]
      %v367 = vld [vmem:[%s354 + $0x30] sm:$0xff]
      %v368 = vld [vmem:[%s354 + $0x38] sm:$0xff]
      %v369 = vld [vmem:[%s354 + $0x40] sm:$0xff]
      %v370 = vld [vmem:[%s354 + $0x48] sm:$0xff]
      %v371 = vld [vmem:[%s354 + $0x50] sm:$0xff]
      %v372 = vld [vmem:[%s354 + $0x58] sm:$0xff]
      %v373 = vld [vmem:[%s354 + $0x60] sm:$0xff]
      %v374 = vld [vmem:[%s354 + $0x68] sm:$0xff]
      %v375 = vld [vmem:[%s354 + $0x70] sm:$0xff]
      %v376 = vld [vmem:[%s354 + $0x78] sm:$0xff]
      %v377 = vld [vmem:[%s354 + $0x80] sm:$0xff]
      %v378 = vld [vmem:[%s354 + $0x88] sm:$0xff]
      %v379 = vld [vmem:[%s354 + $0x90] sm:$0xff]
      %v380 = vld [vmem:[%s354 + $0x98] sm:$0xff]
      %v381 = vld [vmem:[%s354 + $0xa0] sm:$0xff]
      %v382 = vld [vmem:[%s354 + $0xa8] sm:$0xff]
      %v383 = vld [vmem:[%s354 + $0xb0] sm:$0xff]
      %v384 = vld [vmem:[%s354 + $0xb8] sm:$0xff]
      %v385 = vld [vmem:[%s354 + $0xc0] sm:$0xff]
      %v386 = vld [vmem:[%s354 + $0xc8] sm:$0xff]
      %v387 = vld [vmem:[%s354 + $0xd0] sm:$0xff]
      %v388 = vld [vmem:[%s354 + $0xd8] sm:$0xff]
      %v389 = vld [vmem:[%s354 + $0xe0] sm:$0xff]
      %v390 = vld [vmem:[%s354 + $0xe8] sm:$0xff]
      %v391 = vld [vmem:[%s354 + $0xf0] sm:$0xff]
      %v392 = vld [vmem:[%s354 + $0xf8] sm:$0xff]
      %v393 = vld [vmem:[%s354 + $0x100] sm:$0xff]
      %v394 = vld [vmem:[%s354 + $0x108] sm:$0xff]
      %v395 = vld [vmem:[%s354 + $0x110] sm:$0xff]
      %v396 = vld [vmem:[%s354 + $0x118] sm:$0xff]
      %v397 = vld [vmem:[%s354 + $0x120] sm:$0xff]
      %v398 = vld [vmem:[%s354 + $0x128] sm:$0xff]
      %v399 = vld [vmem:[%s354 + $0x130] sm:$0xff]
      %v400 = vld [vmem:[%s354 + $0x138] sm:$0xff]
      %v401 = vld [vmem:[%s354 + $0x140] sm:$0xff]
      %v402 = vld [vmem:[%s354 + $0x148] sm:$0xff]
      %v403 = vld [vmem:[%s354 + $0x150] sm:$0xff]
      %v404 = vld [vmem:[%s354 + $0x158] sm:$0xff]
      %v405 = vld [vmem:[%s354 + $0x160] sm:$0xff]
      %v406 = vld [vmem:[%s354 + $0x168] sm:$0xff]
      %v407 = vld [vmem:[%s354 + $0x170] sm:$0xff]
      %v408 = vld [vmem:[%s354 + $0x178] sm:$0xff]
      %v409 = vld [vmem:[%s354 + $0x180] sm:$0xff]
      %v410 = vld [vmem:[%s354 + $0x188] sm:$0xff]
      %v411 = vld [vmem:[%s354 + $0x190] sm:$0xff]
      %v412 = vld [vmem:[%s354 + $0x198] sm:$0xff]
      %v413 = vld [vmem:[%s354 + $0x1a0] sm:$0xff]
      %v414 = vld [vmem:[%s354 + $0x1a8] sm:$0xff]
      %v415 = vld [vmem:[%s354 + $0x1b0] sm:$0xff]
      %v416 = vld [vmem:[%s354 + $0x1b8] sm:$0xff]
      %v417 = vld [vmem:[%s354 + $0x1c0] sm:$0xff]
      %v418 = vld [vmem:[%s354 + $0x1c8] sm:$0xff]
      %v419 = vld [vmem:[%s354 + $0x1d0] sm:$0xff]
      %v420 = vld [vmem:[%s354 + $0x1d8] sm:$0xff]
      %v421 = vld [vmem:[%s354 + $0x1e0] sm:$0xff]
      %v422 = vld [vmem:[%s354 + $0x1e8] sm:$0xff]
      %v423 = vld [vmem:[%s354 + $0x1f0] sm:$0xff]
      %v424 = vld [vmem:[%s354 + $0x1f8] sm:$0xff]
      %v425 = vld [vmem:[%s1] sm:$0xf]
      %v426 = vld [vmem:[%s1 + $0x4] sm:$0xf]
      %v427 = vld [vmem:[%s1 + $0x8] sm:$0xf]
      %v428 = vld [vmem:[%s1 + $0xc] sm:$0xf]
      %v429 = vld [vmem:[%s1 + $0x10] sm:$0xf]
      %v430 = vld [vmem:[%s1 + $0x14] sm:$0xf]
      %v431 = vld [vmem:[%s1 + $0x18] sm:$0xf]
      %v432 = vld [vmem:[%s1 + $0x1c] sm:$0xf]
      %v433 = vld [vmem:[%s1 + $0x20] sm:$0xf]
      %v434 = vld [vmem:[%s1 + $0x24] sm:$0xf]
      %v435 = vld [vmem:[%s1 + $0x28] sm:$0xf]
      %v436 = vld [vmem:[%s1 + $0x2c] sm:$0xf]
      %v437 = vld [vmem:[%s1 + $0x30] sm:$0xf]
      %v438 = vld [vmem:[%s1 + $0x34] sm:$0xf]
      %v439 = vld [vmem:[%s1 + $0x38] sm:$0xf]
      %v440 = vld [vmem:[%s1 + $0x3c] sm:$0xf]
      %v441 = vld [vmem:[%s1 + $0x40] sm:$0xf]
      %v442 = vld [vmem:[%s1 + $0x44] sm:$0xf]
      %v443 = vld [vmem:[%s1 + $0x48] sm:$0xf]
      %v444 = vld [vmem:[%s1 + $0x4c] sm:$0xf]
      %v445 = vld [vmem:[%s1 + $0x50] sm:$0xf]
      %v446 = vld [vmem:[%s1 + $0x54] sm:$0xf]
      %v447 = vld [vmem:[%s1 + $0x58] sm:$0xf]
      %v448 = vld [vmem:[%s1 + $0x5c] sm:$0xf]
      %v449 = vld [vmem:[%s1 + $0x60] sm:$0xf]
      %v450 = vld [vmem:[%s1 + $0x64] sm:$0xf]
      %v451 = vld [vmem:[%s1 + $0x68] sm:$0xf]
      %v452 = vld [vmem:[%s1 + $0x6c] sm:$0xf]
      %v453 = vld [vmem:[%s1 + $0x70] sm:$0xf]
      %v454 = vld [vmem:[%s1 + $0x74] sm:$0xf]
      %v455 = vld [vmem:[%s1 + $0x78] sm:$0xf]
      %v456 = vld [vmem:[%s1 + $0x7c] sm:$0xf]
      %v457 = vld [vmem:[%s1 + $0x80] sm:$0xf]
      %v458 = vld [vmem:[%s1 + $0x84] sm:$0xf]
      %v459 = vld [vmem:[%s1 + $0x88] sm:$0xf]
      %v460 = vld [vmem:[%s1 + $0x8c] sm:$0xf]
      %v461 = vld [vmem:[%s1 + $0x90] sm:$0xf]
      %v462 = vld [vmem:[%s1 + $0x94] sm:$0xf]
      %v463 = vld [vmem:[%s1 + $0x98] sm:$0xf]
      %v464 = vld [vmem:[%s1 + $0x9c] sm:$0xf]
      %v465 = vld [vmem:[%s1 + $0xa0] sm:$0xf]
      %v466 = vld [vmem:[%s1 + $0xa4] sm:$0xf]
      %v467 = vld [vmem:[%s1 + $0xa8] sm:$0xf]
      %v468 = vld [vmem:[%s1 + $0xac] sm:$0xf]
      %v469 = vld [vmem:[%s1 + $0xb0] sm:$0xf]
      %v470 = vld [vmem:[%s1 + $0xb4] sm:$0xf]
      %v471 = vld [vmem:[%s1 + $0xb8] sm:$0xf]
      %v472 = vld [vmem:[%s1 + $0xbc] sm:$0xf]
      %v473 = vld [vmem:[%s1 + $0xc0] sm:$0xf]
      %v474 = vld [vmem:[%s1 + $0xc4] sm:$0xf]
      %v475 = vld [vmem:[%s1 + $0xc8] sm:$0xf]
      %v476 = vld [vmem:[%s1 + $0xcc] sm:$0xf]
      %v477 = vld [vmem:[%s1 + $0xd0] sm:$0xf]
      %v478 = vld [vmem:[%s1 + $0xd4] sm:$0xf]
      %v479 = vld [vmem:[%s1 + $0xd8] sm:$0xf]
      %v480 = vld [vmem:[%s1 + $0xdc] sm:$0xf]
      %v481 = vld [vmem:[%s1 + $0xe0] sm:$0xf]
      %v482 = vld [vmem:[%s1 + $0xe4] sm:$0xf]
      %v483 = vld [vmem:[%s1 + $0xe8] sm:$0xf]
      %v484 = vld [vmem:[%s1 + $0xec] sm:$0xf]
      %v485 = vld [vmem:[%s1 + $0xf0] sm:$0xf]
      %v486 = vld [vmem:[%s1 + $0xf4] sm:$0xf]
      %v487 = vld [vmem:[%s1 + $0xf8] sm:$0xf]
      %v488 = vld [vmem:[%s1 + $0xfc] sm:$0xf]
      %v553 = vunpack.c.l.b16 %v361
      %v554 = vunpack.c.h.b16 %v361
      %v555 = vunpack.c.l.b16 %v362
      %v556 = vunpack.c.h.b16 %v362
      %v557 = vunpack.c.l.b16 %v363
      %v558 = vunpack.c.h.b16 %v363
      %v559 = vunpack.c.l.b16 %v364
      %v560 = vunpack.c.h.b16 %v364
      %v561 = vunpack.c.l.b16 %v365
      %v562 = vunpack.c.h.b16 %v365
      %v563 = vunpack.c.l.b16 %v366
      %v564 = vunpack.c.h.b16 %v366
      %v565 = vunpack.c.l.b16 %v367
      %v566 = vunpack.c.h.b16 %v367
      %v567 = vunpack.c.l.b16 %v368
      %v568 = vunpack.c.h.b16 %v368
      %v569 = vunpack.c.l.b16 %v369
      %v570 = vunpack.c.h.b16 %v369
      %v571 = vunpack.c.l.b16 %v370
      %v572 = vunpack.c.h.b16 %v370
      %v573 = vunpack.c.l.b16 %v371
      %v574 = vunpack.c.h.b16 %v371
      %v575 = vunpack.c.l.b16 %v372
      %v576 = vunpack.c.h.b16 %v372
      %v577 = vunpack.c.l.b16 %v373
      %v578 = vunpack.c.h.b16 %v373
      %v579 = vunpack.c.l.b16 %v374
      %v580 = vunpack.c.h.b16 %v374
      %v581 = vunpack.c.l.b16 %v375
      %v582 = vunpack.c.h.b16 %v375
      %v583 = vunpack.c.l.b16 %v376
      %v584 = vunpack.c.h.b16 %v376
      %v585 = vunpack.c.l.b16 %v377
      %v586 = vunpack.c.h.b16 %v377
      %v587 = vunpack.c.l.b16 %v378
      %v588 = vunpack.c.h.b16 %v378
      %v589 = vunpack.c.l.b16 %v379
      %v590 = vunpack.c.h.b16 %v379
      %v591 = vunpack.c.l.b16 %v380
      %v592 = vunpack.c.h.b16 %v380
      %v593 = vunpack.c.l.b16 %v381
      %v594 = vunpack.c.h.b16 %v381
      %v595 = vunpack.c.l.b16 %v382
      %v596 = vunpack.c.h.b16 %v382
      %v597 = vunpack.c.l.b16 %v383
      %v598 = vunpack.c.h.b16 %v383
      %v599 = vunpack.c.l.b16 %v384
      %v600 = vunpack.c.h.b16 %v384
      %v601 = vunpack.c.l.b16 %v385
      %v602 = vunpack.c.h.b16 %v385
      %v603 = vunpack.c.l.b16 %v386
      %v604 = vunpack.c.h.b16 %v386
      %v605 = vunpack.c.l.b16 %v387
      %v606 = vunpack.c.h.b16 %v387
      %v607 = vunpack.c.l.b16 %v388
      %v608 = vunpack.c.h.b16 %v388
      %v609 = vunpack.c.l.b16 %v389
      %v610 = vunpack.c.h.b16 %v389
      %v611 = vunpack.c.l.b16 %v390
      %v612 = vunpack.c.h.b16 %v390
      %v613 = vunpack.c.l.b16 %v391
      %v614 = vunpack.c.h.b16 %v391
      %v615 = vunpack.c.l.b16 %v392
      %v616 = vunpack.c.h.b16 %v392
      %v617 = vunpack.c.l.b16 %v393
      %v618 = vunpack.c.h.b16 %v393
      %v619 = vunpack.c.l.b16 %v394
      %v620 = vunpack.c.h.b16 %v394
      %v621 = vunpack.c.l.b16 %v395
      %v622 = vunpack.c.h.b16 %v395
      %v623 = vunpack.c.l.b16 %v396
      %v624 = vunpack.c.h.b16 %v396
      %v625 = vunpack.c.l.b16 %v397
      %v626 = vunpack.c.h.b16 %v397
      %v627 = vunpack.c.l.b16 %v398
      %v628 = vunpack.c.h.b16 %v398
      %v629 = vunpack.c.l.b16 %v399
      %v630 = vunpack.c.h.b16 %v399
      %v631 = vunpack.c.l.b16 %v400
      %v632 = vunpack.c.h.b16 %v400
      %v633 = vunpack.c.l.b16 %v401
      %v634 = vunpack.c.h.b16 %v401
      %v635 = vunpack.c.l.b16 %v402
      %v636 = vunpack.c.h.b16 %v402
      %v637 = vunpack.c.l.b16 %v403
      %v638 = vunpack.c.h.b16 %v403
      %v639 = vunpack.c.l.b16 %v404
      %v640 = vunpack.c.h.b16 %v404
      %v641 = vunpack.c.l.b16 %v405
      %v642 = vunpack.c.h.b16 %v405
      %v643 = vunpack.c.l.b16 %v406
      %v644 = vunpack.c.h.b16 %v406
      %v645 = vunpack.c.l.b16 %v407
      %v646 = vunpack.c.h.b16 %v407
      %v647 = vunpack.c.l.b16 %v408
      %v648 = vunpack.c.h.b16 %v408
      %v649 = vunpack.c.l.b16 %v409
      %v650 = vunpack.c.h.b16 %v409
      %v651 = vunpack.c.l.b16 %v410
      %v652 = vunpack.c.h.b16 %v410
      %v653 = vunpack.c.l.b16 %v411
      %v654 = vunpack.c.h.b16 %v411
      %v655 = vunpack.c.l.b16 %v412
      %v656 = vunpack.c.h.b16 %v412
      %v657 = vunpack.c.l.b16 %v413
      %v658 = vunpack.c.h.b16 %v413
      %v659 = vunpack.c.l.b16 %v414
      %v660 = vunpack.c.h.b16 %v414
      %v661 = vunpack.c.l.b16 %v415
      %v662 = vunpack.c.h.b16 %v415
      %v663 = vunpack.c.l.b16 %v416
      %v664 = vunpack.c.h.b16 %v416
      %v665 = vunpack.c.l.b16 %v417
      %v666 = vunpack.c.h.b16 %v417
      %v667 = vunpack.c.l.b16 %v418
      %v668 = vunpack.c.h.b16 %v418
      %v669 = vunpack.c.l.b16 %v419
      %v670 = vunpack.c.h.b16 %v419
      %v671 = vunpack.c.l.b16 %v420
      %v672 = vunpack.c.h.b16 %v420
      %v673 = vunpack.c.l.b16 %v421
      %v674 = vunpack.c.h.b16 %v421
      %v675 = vunpack.c.l.b16 %v422
      %v676 = vunpack.c.h.b16 %v422
      %v677 = vunpack.c.l.b16 %v423
      %v678 = vunpack.c.h.b16 %v423
      %v679 = vunpack.c.l.b16 %v424
      %v680 = vunpack.c.h.b16 %v424
      %v681 = vpack.c.b16 %v557, %v553
      %v682 = vpack.c.b16 %v558, %v554
      %v683 = vpack.c.b16 %v559, %v555
      %v684 = vpack.c.b16 %v560, %v556
      %v685 = vpack.c.b16 %v565, %v561
      %v686 = vpack.c.b16 %v566, %v562
      %v687 = vpack.c.b16 %v567, %v563
      %v688 = vpack.c.b16 %v568, %v564
      %v689 = vpack.c.b16 %v573, %v569
      %v690 = vpack.c.b16 %v574, %v570
      %v691 = vpack.c.b16 %v575, %v571
      %v692 = vpack.c.b16 %v576, %v572
      %v693 = vpack.c.b16 %v581, %v577
      %v694 = vpack.c.b16 %v582, %v578
      %v695 = vpack.c.b16 %v583, %v579
      %v696 = vpack.c.b16 %v584, %v580
      %v697 = vpack.c.b16 %v589, %v585
      %v698 = vpack.c.b16 %v590, %v586
      %v699 = vpack.c.b16 %v591, %v587
      %v700 = vpack.c.b16 %v592, %v588
      %v701 = vpack.c.b16 %v597, %v593
      %v702 = vpack.c.b16 %v598, %v594
      %v703 = vpack.c.b16 %v599, %v595
      %v704 = vpack.c.b16 %v600, %v596
      %v705 = vpack.c.b16 %v605, %v601
      %v706 = vpack.c.b16 %v606, %v602
      %v707 = vpack.c.b16 %v607, %v603
      %v708 = vpack.c.b16 %v608, %v604
      %v709 = vpack.c.b16 %v613, %v609
      %v710 = vpack.c.b16 %v614, %v610
      %v711 = vpack.c.b16 %v615, %v611
      %v712 = vpack.c.b16 %v616, %v612
      %v713 = vpack.c.b16 %v621, %v617
      %v714 = vpack.c.b16 %v622, %v618
      %v715 = vpack.c.b16 %v623, %v619
      %v716 = vpack.c.b16 %v624, %v620
      %v717 = vpack.c.b16 %v629, %v625
      %v718 = vpack.c.b16 %v630, %v626
      %v719 = vpack.c.b16 %v631, %v627
      %v720 = vpack.c.b16 %v632, %v628
      %v721 = vpack.c.b16 %v637, %v633
      %v722 = vpack.c.b16 %v638, %v634
      %v723 = vpack.c.b16 %v639, %v635
      %v724 = vpack.c.b16 %v640, %v636
      %v725 = vpack.c.b16 %v645, %v641
      %v726 = vpack.c.b16 %v646, %v642
      %v727 = vpack.c.b16 %v647, %v643
      %v728 = vpack.c.b16 %v648, %v644
      %v729 = vpack.c.b16 %v653, %v649
      %v730 = vpack.c.b16 %v654, %v650
      %v731 = vpack.c.b16 %v655, %v651
      %v732 = vpack.c.b16 %v656, %v652
      %v733 = vpack.c.b16 %v661, %v657
      %v734 = vpack.c.b16 %v662, %v658
      %v735 = vpack.c.b16 %v663, %v659
      %v736 = vpack.c.b16 %v664, %v660
      %v737 = vpack.c.b16 %v669, %v665
      %v738 = vpack.c.b16 %v670, %v666
      %v739 = vpack.c.b16 %v671, %v667
      %v740 = vpack.c.b16 %v672, %v668
      %v741 = vpack.c.b16 %v677, %v673
      %v742 = vpack.c.b16 %v678, %v674
      %v743 = vpack.c.b16 %v679, %v675
      %v744 = vpack.c.b16 %v680, %v676
      %v873 = vunpack.c.l.b16 %v425
      %v874 = vunpack.c.l.b16 %v426
      %v875 = vunpack.c.l.b16 %v427
      %v876 = vunpack.c.l.b16 %v428
      %v877 = vunpack.c.l.b16 %v429
      %v878 = vunpack.c.l.b16 %v430
      %v879 = vunpack.c.l.b16 %v431
      %v880 = vunpack.c.l.b16 %v432
      %v881 = vunpack.c.l.b16 %v433
      %v882 = vunpack.c.l.b16 %v434
      %v883 = vunpack.c.l.b16 %v435
      %v884 = vunpack.c.l.b16 %v436
      %v885 = vunpack.c.l.b16 %v437
      %v886 = vunpack.c.l.b16 %v438
      %v887 = vunpack.c.l.b16 %v439
      %v888 = vunpack.c.l.b16 %v440
      %v889 = vunpack.c.l.b16 %v441
      %v890 = vunpack.c.l.b16 %v442
      %v891 = vunpack.c.l.b16 %v443
      %v892 = vunpack.c.l.b16 %v444
      %v893 = vunpack.c.l.b16 %v445
      %v894 = vunpack.c.l.b16 %v446
      %v895 = vunpack.c.l.b16 %v447
      %v896 = vunpack.c.l.b16 %v448
      %v897 = vunpack.c.l.b16 %v449
      %v898 = vunpack.c.l.b16 %v450
      %v899 = vunpack.c.l.b16 %v451
      %v900 = vunpack.c.l.b16 %v452
      %v901 = vunpack.c.l.b16 %v453
      %v902 = vunpack.c.l.b16 %v454
      %v903 = vunpack.c.l.b16 %v455
      %v904 = vunpack.c.l.b16 %v456
      %v905 = vunpack.c.l.b16 %v457
      %v906 = vunpack.c.l.b16 %v458
      %v907 = vunpack.c.l.b16 %v459
      %v908 = vunpack.c.l.b16 %v460
      %v909 = vunpack.c.l.b16 %v461
      %v910 = vunpack.c.l.b16 %v462
      %v911 = vunpack.c.l.b16 %v463
      %v912 = vunpack.c.l.b16 %v464
      %v913 = vunpack.c.l.b16 %v465
      %v914 = vunpack.c.l.b16 %v466
      %v915 = vunpack.c.l.b16 %v467
      %v916 = vunpack.c.l.b16 %v468
      %v917 = vunpack.c.l.b16 %v469
      %v918 = vunpack.c.l.b16 %v470
      %v919 = vunpack.c.l.b16 %v471
      %v920 = vunpack.c.l.b16 %v472
      %v921 = vunpack.c.l.b16 %v473
      %v922 = vunpack.c.l.b16 %v474
      %v923 = vunpack.c.l.b16 %v475
      %v924 = vunpack.c.l.b16 %v476
      %v925 = vunpack.c.l.b16 %v477
      %v926 = vunpack.c.l.b16 %v478
      %v927 = vunpack.c.l.b16 %v479
      %v928 = vunpack.c.l.b16 %v480
      %v929 = vunpack.c.l.b16 %v481
      %v930 = vunpack.c.l.b16 %v482
      %v931 = vunpack.c.l.b16 %v483
      %v932 = vunpack.c.l.b16 %v484
      %v933 = vunpack.c.l.b16 %v485
      %v934 = vunpack.c.l.b16 %v486
      %v935 = vunpack.c.l.b16 %v487
      %v936 = vunpack.c.l.b16 %v488
      %v937 = vpack.c.b16 %v874, %v873
      %v938 = vpack.c.b16 %v876, %v875
      %v939 = vpack.c.b16 %v878, %v877
      %v940 = vpack.c.b16 %v880, %v879
      %v941 = vpack.c.b16 %v882, %v881
      %v942 = vpack.c.b16 %v884, %v883
      %v943 = vpack.c.b16 %v886, %v885
      %v944 = vpack.c.b16 %v888, %v887
      %v945 = vpack.c.b16 %v890, %v889
      %v946 = vpack.c.b16 %v892, %v891
      %v947 = vpack.c.b16 %v894, %v893
      %v948 = vpack.c.b16 %v896, %v895
      %v949 = vpack.c.b16 %v898, %v897
      %v950 = vpack.c.b16 %v900, %v899
      %v951 = vpack.c.b16 %v902, %v901
      %v952 = vpack.c.b16 %v904, %v903
      %v953 = vpack.c.b16 %v906, %v905
      %v954 = vpack.c.b16 %v908, %v907
      %v955 = vpack.c.b16 %v910, %v909
      %v956 = vpack.c.b16 %v912, %v911
      %v957 = vpack.c.b16 %v914, %v913
      %v958 = vpack.c.b16 %v916, %v915
      %v959 = vpack.c.b16 %v918, %v917
      %v960 = vpack.c.b16 %v920, %v919
      %v961 = vpack.c.b16 %v922, %v921
      %v962 = vpack.c.b16 %v924, %v923
      %v963 = vpack.c.b16 %v926, %v925
      %v964 = vpack.c.b16 %v928, %v927
      %v965 = vpack.c.b16 %v930, %v929
      %v966 = vpack.c.b16 %v932, %v931
      %v967 = vpack.c.b16 %v934, %v933
      %v968 = vpack.c.b16 %v936, %v935
      %1001 = vmatprep.subr.bf16.mxu0 0
      %1002 = vmatpush1.bf16.msra.mxu0 %v944
      %1003 = vmatprep.subr.bf16.mxu0 0
      %1004 = vmatpush1.bf16.msra.mxu0 %v943
      %1005 = vmatprep.subr.bf16.mxu0 0
      %1006 = vmatpush1.bf16.msra.mxu0 %v942
      %1007 = vmatprep.subr.bf16.mxu0 0
      %1008 = vmatpush1.bf16.msra.mxu0 %v941
      %1009 = vmatprep.subr.bf16.mxu0 0
      %1010 = vmatpush1.bf16.msra.mxu0 %v940
      %1011 = vmatprep.subr.bf16.mxu0 0
      %1012 = vmatpush1.bf16.msra.mxu0 %v939
      %1013 = vmatprep.subr.bf16.mxu0 0
      %1014 = vmatpush1.bf16.msra.mxu0 %v938
      %1015 = vmatprep.subr.bf16.mxu0 0
      %1016 = vmatpush1.bf16.msra.mxu0 %v937
      %1017 = vmatprep.subr.bf16.mxu0 0
      %1018 = vmatpush2.bf16.msra.mxu0 %v952
      %1019 = vmatprep.subr.bf16.mxu0 0
      %1020 = vmatpush2.bf16.msra.mxu0 %v951
      %1021 = vmatprep.subr.bf16.mxu0 0
      %1022 = vmatpush2.bf16.msra.mxu0 %v950
      %1023 = vmatprep.subr.bf16.mxu0 0
      %1024 = vmatpush2.bf16.msra.mxu0 %v949
      %1025 = vmatprep.subr.bf16.mxu0 0
      %1026 = vmatpush2.bf16.msra.mxu0 %v948
      %1027 = vmatprep.subr.bf16.mxu0 0
      %1028 = vmatpush2.bf16.msra.mxu0 %v947
      %1029 = vmatprep.subr.bf16.mxu0 0
      %1030 = vmatpush2.bf16.msra.mxu0 %v946
      %1031 = vmatprep.subr.bf16.mxu0 0
      %1032 = vmatpush2.bf16.msra.mxu0 %v945
      %1033 = vmatprep.mubr.bf16.mxu0 %v682
      %1034 = vmatmul.mubr.bf16.gmra.mxu0 %v681
      %v1035 = vpop.f32.mrf.mxu0
      %v1036 = vadd.f32 0.0, %v1035
      %v1037 = vpop.f32.mrf.mxu0
      %v1038 = vpop.f32.mrf.mxu0
      %v1039 = vadd.f32 0.0, %v1038
      %v1040 = vpop.f32.mrf.mxu0
      %1041 = vmatprep.mubr.bf16.mxu0 %v686
      %1042 = vmatmul.mubr.bf16.gmra.mxu0 %v685
      %v1043 = vpop.f32.mrf.mxu0
      %v1044 = vadd.f32 0.0, %v1043
      %v1045 = vpop.f32.mrf.mxu0
      %v1046 = vpop.f32.mrf.mxu0
      %v1047 = vadd.f32 0.0, %v1046
      %v1048 = vpop.f32.mrf.mxu0
      %1049 = vmatprep.mubr.bf16.mxu0 %v690
      %1050 = vmatmul.mubr.bf16.gmra.mxu0 %v689
      %v1051 = vpop.f32.mrf.mxu0
      %v1052 = vadd.f32 0.0, %v1051
      %v1053 = vpop.f32.mrf.mxu0
      %v1054 = vpop.f32.mrf.mxu0
      %v1055 = vadd.f32 0.0, %v1054
      %v1056 = vpop.f32.mrf.mxu0
      %1057 = vmatprep.mubr.bf16.mxu0 %v694
      %1058 = vmatmul.mubr.bf16.gmra.mxu0 %v693
      %v1059 = vpop.f32.mrf.mxu0
      %v1060 = vadd.f32 0.0, %v1059
      %v1061 = vpop.f32.mrf.mxu0
      %v1062 = vpop.f32.mrf.mxu0
      %v1063 = vadd.f32 0.0, %v1062
      %v1064 = vpop.f32.mrf.mxu0
      %1065 = vmatprep.mubr.bf16.mxu0 %v698
      %1066 = vmatmul.mubr.bf16.gmra.mxu0 %v697
      %v1067 = vpop.f32.mrf.mxu0
      %v1068 = vadd.f32 0.0, %v1067
      %v1069 = vpop.f32.mrf.mxu0
      %v1070 = vpop.f32.mrf.mxu0
      %v1071 = vadd.f32 0.0, %v1070
      %v1072 = vpop.f32.mrf.mxu0
      %1073 = vmatprep.mubr.bf16.mxu0 %v702
      %1074 = vmatmul.mubr.bf16.gmra.mxu0 %v701
      %v1075 = vpop.f32.mrf.mxu0
      %v1076 = vadd.f32 0.0, %v1075
      %v1077 = vpop.f32.mrf.mxu0
      %v1078 = vpop.f32.mrf.mxu0
      %v1079 = vadd.f32 0.0, %v1078
      %v1080 = vpop.f32.mrf.mxu0
      %1081 = vmatprep.mubr.bf16.mxu0 %v706
      %1082 = vmatmul.mubr.bf16.gmra.mxu0 %v705
      %v1083 = vpop.f32.mrf.mxu0
      %v1084 = vadd.f32 0.0, %v1083
      %v1085 = vpop.f32.mrf.mxu0
      %v1086 = vpop.f32.mrf.mxu0
      %v1087 = vadd.f32 0.0, %v1086
      %v1088 = vpop.f32.mrf.mxu0
      %1089 = vmatprep.mubr.bf16.mxu0 %v710
      %1090 = vmatmul.mubr.bf16.gmra.mxu0 %v709
      %v1091 = vpop.f32.mrf.mxu0
      %v1092 = vadd.f32 0.0, %v1091
      %v1093 = vpop.f32.mrf.mxu0
      %v1094 = vpop.f32.mrf.mxu0
      %v1095 = vadd.f32 0.0, %v1094
      %v1096 = vpop.f32.mrf.mxu0
      %1097 = vmatprep.mubr.bf16.mxu0 %v714
      %1098 = vmatmul.mubr.bf16.gmra.mxu0 %v713
      %v1099 = vpop.f32.mrf.mxu0
      %v1100 = vadd.f32 0.0, %v1099
      %v1101 = vpop.f32.mrf.mxu0
      %v1102 = vpop.f32.mrf.mxu0
      %v1103 = vadd.f32 0.0, %v1102
      %v1104 = vpop.f32.mrf.mxu0
      %1105 = vmatprep.mubr.bf16.mxu0 %v718
      %1106 = vmatmul.mubr.bf16.gmra.mxu0 %v717
      %v1107 = vpop.f32.mrf.mxu0
      %v1108 = vadd.f32 0.0, %v1107
      %v1109 = vpop.f32.mrf.mxu0
      %v1110 = vpop.f32.mrf.mxu0
      %v1111 = vadd.f32 0.0, %v1110
      %v1112 = vpop.f32.mrf.mxu0
      %1113 = vmatprep.mubr.bf16.mxu0 %v722
      %1114 = vmatmul.mubr.bf16.gmra.mxu0 %v721
      %v1115 = vpop.f32.mrf.mxu0
      %v1116 = vadd.f32 0.0, %v1115
      %v1117 = vpop.f32.mrf.mxu0
      %v1118 = vpop.f32.mrf.mxu0
      %v1119 = vadd.f32 0.0, %v1118
      %v1120 = vpop.f32.mrf.mxu0
      %1121 = vmatprep.mubr.bf16.mxu0 %v726
      %1122 = vmatmul.mubr.bf16.gmra.mxu0 %v725
      %v1123 = vpop.f32.mrf.mxu0
      %v1124 = vadd.f32 0.0, %v1123
      %v1125 = vpop.f32.mrf.mxu0
      %v1126 = vpop.f32.mrf.mxu0
      %v1127 = vadd.f32 0.0, %v1126
      %v1128 = vpop.f32.mrf.mxu0
      %1129 = vmatprep.mubr.bf16.mxu0 %v730
      %1130 = vmatmul.mubr.bf16.gmra.mxu0 %v729
      %v1131 = vpop.f32.mrf.mxu0
      %v1132 = vadd.f32 0.0, %v1131
      %v1133 = vpop.f32.mrf.mxu0
      %v1134 = vpop.f32.mrf.mxu0
      %v1135 = vadd.f32 0.0, %v1134
      %v1136 = vpop.f32.mrf.mxu0
      %1137 = vmatprep.mubr.bf16.mxu0 %v734
      %1138 = vmatmul.mubr.bf16.gmra.mxu0 %v733
      %v1139 = vpop.f32.mrf.mxu0
      %v1140 = vadd.f32 0.0, %v1139
      %v1141 = vpop.f32.mrf.mxu0
      %v1142 = vpop.f32.mrf.mxu0
      %v1143 = vadd.f32 0.0, %v1142
      %v1144 = vpop.f32.mrf.mxu0
      %1145 = vmatprep.mubr.bf16.mxu0 %v738
      %1146 = vmatmul.mubr.bf16.gmra.mxu0 %v737
      %v1147 = vpop.f32.mrf.mxu0
      %v1148 = vadd.f32 0.0, %v1147
      %v1149 = vpop.f32.mrf.mxu0
      %v1150 = vpop.f32.mrf.mxu0
      %v1151 = vadd.f32 0.0, %v1150
      %v1152 = vpop.f32.mrf.mxu0
      %1153 = vmatprep.mubr.bf16.mxu0 %v742
      %1154 = vmatmul.mubr.bf16.gmra.mxu0 %v741
      %v1155 = vpop.f32.mrf.mxu0
      %v1156 = vadd.f32 0.0, %v1155
      %v1157 = vpop.f32.mrf.mxu0
      %v1158 = vpop.f32.mrf.mxu0
      %v1159 = vadd.f32 0.0, %v1158
      %v1160 = vpop.f32.mrf.mxu0
      %1161 = vdwg.mxu0
      %1162 = vmatprep.subr.bf16.mxu0 0
      %1163 = vmatpush1.bf16.msra.mxu0 %v960
      %1164 = vmatprep.subr.bf16.mxu0 0
      %1165 = vmatpush1.bf16.msra.mxu0 %v959
      %1166 = vmatprep.subr.bf16.mxu0 0
      %1167 = vmatpush1.bf16.msra.mxu0 %v958
      %1168 = vmatprep.subr.bf16.mxu0 0
      %1169 = vmatpush1.bf16.msra.mxu0 %v957
      %1170 = vmatprep.subr.bf16.mxu0 0
      %1171 = vmatpush1.bf16.msra.mxu0 %v956
      %1172 = vmatprep.subr.bf16.mxu0 0
      %1173 = vmatpush1.bf16.msra.mxu0 %v955
      %1174 = vmatprep.subr.bf16.mxu0 0
      %1175 = vmatpush1.bf16.msra.mxu0 %v954
      %1176 = vmatprep.subr.bf16.mxu0 0
      %1177 = vmatpush1.bf16.msra.mxu0 %v953
      %1178 = vmatprep.subr.bf16.mxu0 0
      %1179 = vmatpush2.bf16.msra.mxu0 %v968
      %1180 = vmatprep.subr.bf16.mxu0 0
      %1181 = vmatpush2.bf16.msra.mxu0 %v967
      %1182 = vmatprep.subr.bf16.mxu0 0
      %1183 = vmatpush2.bf16.msra.mxu0 %v966
      %1184 = vmatprep.subr.bf16.mxu0 0
      %1185 = vmatpush2.bf16.msra.mxu0 %v965
      %1186 = vmatprep.subr.bf16.mxu0 0
      %1187 = vmatpush2.bf16.msra.mxu0 %v964
      %1188 = vmatprep.subr.bf16.mxu0 0
      %1189 = vmatpush2.bf16.msra.mxu0 %v963
      %1190 = vmatprep.subr.bf16.mxu0 0
      %1191 = vmatpush2.bf16.msra.mxu0 %v962
      %1192 = vmatprep.subr.bf16.mxu0 0
      %1193 = vmatpush2.bf16.msra.mxu0 %v961
      %1194 = vmatprep.mubr.bf16.mxu0 %v684
      %1195 = vmatmul.mubr.bf16.gmra.mxu0 %v683
      %v1196 = vpop.f32.mrf.mxu0
      %v1197 = vadd.f32 %v1036, %v1196
      %v1198 = vpop.f32.mrf.mxu0
      %v1199 = vpop.f32.mrf.mxu0
      %v1200 = vadd.f32 %v1039, %v1199
      %v1201 = vpop.f32.mrf.mxu0
      %1202 = vmatprep.mubr.bf16.mxu0 %v688
      %1203 = vmatmul.mubr.bf16.gmra.mxu0 %v687
      %v1204 = vpop.f32.mrf.mxu0
      %v1205 = vadd.f32 %v1044, %v1204
      %v1206 = vpop.f32.mrf.mxu0
      %v1207 = vpop.f32.mrf.mxu0
      %v1208 = vadd.f32 %v1047, %v1207
      %v1209 = vpop.f32.mrf.mxu0
      %1210 = vmatprep.mubr.bf16.mxu0 %v692
      %1211 = vmatmul.mubr.bf16.gmra.mxu0 %v691
      %v1212 = vpop.f32.mrf.mxu0
      %v1213 = vadd.f32 %v1052, %v1212
      %v1214 = vpop.f32.mrf.mxu0
      %v1215 = vpop.f32.mrf.mxu0
      %v1216 = vadd.f32 %v1055, %v1215
      %v1217 = vpop.f32.mrf.mxu0
      %1218 = vmatprep.mubr.bf16.mxu0 %v696
      %1219 = vmatmul.mubr.bf16.gmra.mxu0 %v695
      %v1220 = vpop.f32.mrf.mxu0
      %v1221 = vadd.f32 %v1060, %v1220
      %v1222 = vpop.f32.mrf.mxu0
      %v1223 = vpop.f32.mrf.mxu0
      %v1224 = vadd.f32 %v1063, %v1223
      %v1225 = vpop.f32.mrf.mxu0
      %1226 = vmatprep.mubr.bf16.mxu0 %v700
      %1227 = vmatmul.mubr.bf16.gmra.mxu0 %v699
      %v1228 = vpop.f32.mrf.mxu0
      %v1229 = vadd.f32 %v1068, %v1228
      %v1230 = vpop.f32.mrf.mxu0
      %v1231 = vpop.f32.mrf.mxu0
      %v1232 = vadd.f32 %v1071, %v1231
      %v1233 = vpop.f32.mrf.mxu0
      %1234 = vmatprep.mubr.bf16.mxu0 %v704
      %1235 = vmatmul.mubr.bf16.gmra.mxu0 %v703
      %v1236 = vpop.f32.mrf.mxu0
      %v1237 = vadd.f32 %v1076, %v1236
      %v1238 = vpop.f32.mrf.mxu0
      %v1239 = vpop.f32.mrf.mxu0
      %v1240 = vadd.f32 %v1079, %v1239
      %v1241 = vpop.f32.mrf.mxu0
      %1242 = vmatprep.mubr.bf16.mxu0 %v708
      %1243 = vmatmul.mubr.bf16.gmra.mxu0 %v707
      %v1244 = vpop.f32.mrf.mxu0
      %v1245 = vadd.f32 %v1084, %v1244
      %v1246 = vpop.f32.mrf.mxu0
      %v1247 = vpop.f32.mrf.mxu0
      %v1248 = vadd.f32 %v1087, %v1247
      %v1249 = vpop.f32.mrf.mxu0
      %1250 = vmatprep.mubr.bf16.mxu0 %v712
      %1251 = vmatmul.mubr.bf16.gmra.mxu0 %v711
      %v1252 = vpop.f32.mrf.mxu0
      %v1253 = vadd.f32 %v1092, %v1252
      %v1254 = vpop.f32.mrf.mxu0
      %v1255 = vpop.f32.mrf.mxu0
      %v1256 = vadd.f32 %v1095, %v1255
      %v1257 = vpop.f32.mrf.mxu0
      %1258 = vmatprep.mubr.bf16.mxu0 %v716
      %1259 = vmatmul.mubr.bf16.gmra.mxu0 %v715
      %v1260 = vpop.f32.mrf.mxu0
      %v1261 = vadd.f32 %v1100, %v1260
      %v1262 = vpop.f32.mrf.mxu0
      %v1263 = vpop.f32.mrf.mxu0
      %v1264 = vadd.f32 %v1103, %v1263
      %v1265 = vpop.f32.mrf.mxu0
      %1266 = vmatprep.mubr.bf16.mxu0 %v720
      %1267 = vmatmul.mubr.bf16.gmra.mxu0 %v719
      %v1268 = vpop.f32.mrf.mxu0
      %v1269 = vadd.f32 %v1108, %v1268
      %v1270 = vpop.f32.mrf.mxu0
      %v1271 = vpop.f32.mrf.mxu0
      %v1272 = vadd.f32 %v1111, %v1271
      %v1273 = vpop.f32.mrf.mxu0
      %1274 = vmatprep.mubr.bf16.mxu0 %v724
      %1275 = vmatmul.mubr.bf16.gmra.mxu0 %v723
      %v1276 = vpop.f32.mrf.mxu0
      %v1277 = vadd.f32 %v1116, %v1276
      %v1278 = vpop.f32.mrf.mxu0
      %v1279 = vpop.f32.mrf.mxu0
      %v1280 = vadd.f32 %v1119, %v1279
      %v1281 = vpop.f32.mrf.mxu0
      %1282 = vmatprep.mubr.bf16.mxu0 %v728
      %1283 = vmatmul.mubr.bf16.gmra.mxu0 %v727
      %v1284 = vpop.f32.mrf.mxu0
      %v1285 = vadd.f32 %v1124, %v1284
      %v1286 = vpop.f32.mrf.mxu0
      %v1287 = vpop.f32.mrf.mxu0
      %v1288 = vadd.f32 %v1127, %v1287
      %v1289 = vpop.f32.mrf.mxu0
      %1290 = vmatprep.mubr.bf16.mxu0 %v732
      %1291 = vmatmul.mubr.bf16.gmra.mxu0 %v731
      %v1292 = vpop.f32.mrf.mxu0
      %v1293 = vadd.f32 %v1132, %v1292
      %v1294 = vpop.f32.mrf.mxu0
      %v1295 = vpop.f32.mrf.mxu0
      %v1296 = vadd.f32 %v1135, %v1295
      %v1297 = vpop.f32.mrf.mxu0
      %1298 = vmatprep.mubr.bf16.mxu0 %v736
      %1299 = vmatmul.mubr.bf16.gmra.mxu0 %v735
      %v1300 = vpop.f32.mrf.mxu0
      %v1301 = vadd.f32 %v1140, %v1300
      %v1302 = vpop.f32.mrf.mxu0
      %v1303 = vpop.f32.mrf.mxu0
      %v1304 = vadd.f32 %v1143, %v1303
      %v1305 = vpop.f32.mrf.mxu0
      %1306 = vmatprep.mubr.bf16.mxu0 %v740
      %1307 = vmatmul.mubr.bf16.gmra.mxu0 %v739
      %v1308 = vpop.f32.mrf.mxu0
      %v1309 = vadd.f32 %v1148, %v1308
      %v1310 = vpop.f32.mrf.mxu0
      %v1311 = vpop.f32.mrf.mxu0
      %v1312 = vadd.f32 %v1151, %v1311
      %v1313 = vpop.f32.mrf.mxu0
      %1314 = vmatprep.mubr.bf16.mxu0 %v744
      %1315 = vmatmul.mubr.bf16.gmra.mxu0 %v743
      %v1316 = vpop.f32.mrf.mxu0
      %v1317 = vadd.f32 %v1156, %v1316
      %v1318 = vpop.f32.mrf.mxu0
      %v1319 = vpop.f32.mrf.mxu0
      %v1320 = vadd.f32 %v1159, %v1319
      %v1321 = vpop.f32.mrf.mxu0
      %1322 = vdwg.mxu0
      %v1323 = vld [vmem:[%s4] sm:$0x1]
      %v1325 = vlaneseq
      %v1326 = vshrl.u32 %v1325, 7
      %v1327 = vsub.s32 0, %v1326
      %v1328 = vrot.slane %v1323, %v1327
      %v1330 = vmul.f32 %v1197, %v1328
      %v1331 = vmul.f32 %v1200, %v1328
      %v1332 = vmul.f32 %v1205, %v1328
      %v1333 = vmul.f32 %v1208, %v1328
      %v1334 = vmul.f32 %v1213, %v1328
      %v1335 = vmul.f32 %v1216, %v1328
      %v1336 = vmul.f32 %v1221, %v1328
      %v1337 = vmul.f32 %v1224, %v1328
      %v1338 = vmul.f32 %v1229, %v1328
      %v1339 = vmul.f32 %v1232, %v1328
      %v1340 = vmul.f32 %v1237, %v1328
      %v1341 = vmul.f32 %v1240, %v1328
      %v1342 = vmul.f32 %v1245, %v1328
      %v1343 = vmul.f32 %v1248, %v1328
      %v1344 = vmul.f32 %v1253, %v1328
      %v1345 = vmul.f32 %v1256, %v1328
      %v1346 = vmul.f32 %v1261, %v1328
      %v1347 = vmul.f32 %v1264, %v1328
      %v1348 = vmul.f32 %v1269, %v1328
      %v1349 = vmul.f32 %v1272, %v1328
      %v1350 = vmul.f32 %v1277, %v1328
      %v1351 = vmul.f32 %v1280, %v1328
      %v1352 = vmul.f32 %v1285, %v1328
      %v1353 = vmul.f32 %v1288, %v1328
      %v1354 = vmul.f32 %v1293, %v1328
      %v1355 = vmul.f32 %v1296, %v1328
      %v1356 = vmul.f32 %v1301, %v1328
      %v1357 = vmul.f32 %v1304, %v1328
      %v1358 = vmul.f32 %v1309, %v1328
      %v1359 = vmul.f32 %v1312, %v1328
      %v1360 = vmul.f32 %v1317, %v1328
      %v1361 = vmul.f32 %v1320, %v1328
      %v1362 = vld [vmem:[%s5] sm:$0x1]
      %v1364 = vlaneseq
      %v1365 = vshrl.u32 %v1364, 7
      %v1366 = vsub.s32 0, %v1365
      %v1367 = vrot.slane %v1362, %v1366
      %v1369 = vadd.f32 %v1330, %v1367
      %v1370 = vadd.f32 %v1331, %v1367
      %v1371 = vadd.f32 %v1332, %v1367
      %v1372 = vadd.f32 %v1333, %v1367
      %v1373 = vadd.f32 %v1334, %v1367
      %v1374 = vadd.f32 %v1335, %v1367
      %v1375 = vadd.f32 %v1336, %v1367
      %v1376 = vadd.f32 %v1337, %v1367
      %v1377 = vadd.f32 %v1338, %v1367
      %v1378 = vadd.f32 %v1339, %v1367
      %v1379 = vadd.f32 %v1340, %v1367
      %v1380 = vadd.f32 %v1341, %v1367
      %v1381 = vadd.f32 %v1342, %v1367
      %v1382 = vadd.f32 %v1343, %v1367
      %v1383 = vadd.f32 %v1344, %v1367
      %v1384 = vadd.f32 %v1345, %v1367
      %v1385 = vadd.f32 %v1346, %v1367
      %v1386 = vadd.f32 %v1347, %v1367
      %v1387 = vadd.f32 %v1348, %v1367
      %v1388 = vadd.f32 %v1349, %v1367
      %v1389 = vadd.f32 %v1350, %v1367
      %v1390 = vadd.f32 %v1351, %v1367
      %v1391 = vadd.f32 %v1352, %v1367
      %v1392 = vadd.f32 %v1353, %v1367
      %v1393 = vadd.f32 %v1354, %v1367
      %v1394 = vadd.f32 %v1355, %v1367
      %v1395 = vadd.f32 %v1356, %v1367
      %v1396 = vadd.f32 %v1357, %v1367
      %v1397 = vadd.f32 %v1358, %v1367
      %v1398 = vadd.f32 %v1359, %v1367
      %v1399 = vadd.f32 %v1360, %v1367
      %v1400 = vadd.f32 %v1361, %v1367
      %v1401 = vmax.f32 %v1369, 0.0
      %v1402 = vmax.f32 %v1370, 0.0
      %v1403 = vmax.f32 %v1371, 0.0
      %v1404 = vmax.f32 %v1372, 0.0
      %v1405 = vmax.f32 %v1373, 0.0
      %v1406 = vmax.f32 %v1374, 0.0
      %v1407 = vmax.f32 %v1375, 0.0
      %v1408 = vmax.f32 %v1376, 0.0
      %v1409 = vmax.f32 %v1377, 0.0
      %v1410 = vmax.f32 %v1378, 0.0
      %v1411 = vmax.f32 %v1379, 0.0
      %v1412 = vmax.f32 %v1380, 0.0
      %v1413 = vmax.f32 %v1381, 0.0
      %v1414 = vmax.f32 %v1382, 0.0
      %v1415 = vmax.f32 %v1383, 0.0
      %v1416 = vmax.f32 %v1384, 0.0
      %v1417 = vmax.f32 %v1385, 0.0
      %v1418 = vmax.f32 %v1386, 0.0
      %v1419 = vmax.f32 %v1387, 0.0
      %v1420 = vmax.f32 %v1388, 0.0
      %v1421 = vmax.f32 %v1389, 0.0
      %v1422 = vmax.f32 %v1390, 0.0
      %v1423 = vmax.f32 %v1391, 0.0
      %v1424 = vmax.f32 %v1392, 0.0
      %v1425 = vmax.f32 %v1393, 0.0
      %v1426 = vmax.f32 %v1394, 0.0
      %v1427 = vmax.f32 %v1395, 0.0
      %v1428 = vmax.f32 %v1396, 0.0
      %v1429 = vmax.f32 %v1397, 0.0
      %v1430 = vmax.f32 %v1398, 0.0
      %v1431 = vmax.f32 %v1399, 0.0
      %v1432 = vmax.f32 %v1400, 0.0
      %1433 = vst [vmem:[#allocation2] sm:$0xff] 0.0
      %1434 = vst [vmem:[#allocation2 + $0x8] sm:$0xff] 0.0
      %1435 = vst [vmem:[#allocation2 + $0x10] sm:$0x3] 0.0
      %1436 = vst [vmem:[#allocation2 + $0x18] sm:$0xff] 0.0
      %1437 = vst [vmem:[#allocation2 + $0x20] sm:$0xff] 0.0
      %1438 = vst [vmem:[#allocation2 + $0x28] sm:$0x3] 0.0
      %1439 = vst [vmem:[#allocation2 + $0x30] sm:$0xff] 0.0
      %1440 = vst [vmem:[#allocation2 + $0x38] sm:$0xff] 0.0
      %1441 = vst [vmem:[#allocation2 + $0x40] sm:$0x3] 0.0
      %1442 = vst [vmem:[#allocation2 + $0x48] sm:$0xff] 0.0
      %1443 = vst [vmem:[#allocation2 + $0x50] sm:$0xff] 0.0
      %1444 = vst [vmem:[#allocation2 + $0x58] sm:$0x3] 0.0
      %1445 = vst [vmem:[#allocation2 + $0x60] sm:$0xff] 0.0
      %1446 = vst [vmem:[#allocation2 + $0x68] sm:$0xff] 0.0
      %1447 = vst [vmem:[#allocation2 + $0x70] sm:$0x3] 0.0
      %1448 = vst [vmem:[#allocation2 + $0x78] sm:$0xff] 0.0
      %1449 = vst [vmem:[#allocation2 + $0x80] sm:$0xff] 0.0
      %1450 = vst [vmem:[#allocation2 + $0x88] sm:$0x3] 0.0
      %1451 = vst [vmem:[#allocation2 + $0x90] sm:$0xff] 0.0
      %1452 = vst [vmem:[#allocation2 + $0x98] sm:$0xff] 0.0
      %1453 = vst [vmem:[#allocation2 + $0xa0] sm:$0x3] 0.0
      %1454 = vst [vmem:[#allocation2 + $0xa8] sm:$0xff] 0.0
      %1455 = vst [vmem:[#allocation2 + $0xb0] sm:$0xff] 0.0
      %1456 = vst [vmem:[#allocation2 + $0xb8] sm:$0x3] 0.0
      %1457 = vst [vmem:[#allocation2 + $0xc0] sm:$0xff] 0.0
      %1458 = vst [vmem:[#allocation2 + $0xc8] sm:$0xff] 0.0
      %1459 = vst [vmem:[#allocation2 + $0xd0] sm:$0x3] 0.0
      %1460 = vst [vmem:[#allocation2 + $0xd8] sm:$0xff] 0.0
      %1461 = vst [vmem:[#allocation2 + $0xe0] sm:$0xff] 0.0
      %1462 = vst [vmem:[#allocation2 + $0xe8] sm:$0x3] 0.0
      %1463 = vst [vmem:[#allocation2 + $0xf0] sm:$0xff] 0.0
      %1464 = vst [vmem:[#allocation2 + $0xf8] sm:$0xff] 0.0
      %1465 = vst [vmem:[#allocation2 + $0x100] sm:$0x3] 0.0
      %1466 = vst [vmem:[#allocation2 + $0x108] sm:$0xff] 0.0
      %1467 = vst [vmem:[#allocation2 + $0x110] sm:$0xff] 0.0
      %1468 = vst [vmem:[#allocation2 + $0x118] sm:$0x3] 0.0
      %1469 = vst [vmem:[#allocation2 + $0x120] sm:$0xff] 0.0
      %1470 = vst [vmem:[#allocation2 + $0x128] sm:$0xff] 0.0
      %1471 = vst [vmem:[#allocation2 + $0x130] sm:$0x3] 0.0
      %1472 = vst [vmem:[#allocation2 + $0x138] sm:$0xff] 0.0
      %1473 = vst [vmem:[#allocation2 + $0x140] sm:$0xff] 0.0
      %1474 = vst [vmem:[#allocation2 + $0x148] sm:$0x3] 0.0
      %1475 = vst [vmem:[#allocation2 + $0x150] sm:$0xff] 0.0
      %1476 = vst [vmem:[#allocation2 + $0x158] sm:$0xff] 0.0
      %1477 = vst [vmem:[#allocation2 + $0x160] sm:$0x3] 0.0
      %1478 = vst [vmem:[#allocation2 + $0x168] sm:$0xff] 0.0
      %1479 = vst [vmem:[#allocation2 + $0x170] sm:$0xff] 0.0
      %1480 = vst [vmem:[#allocation2 + $0x178] sm:$0x3] 0.0
      %1481 = vst [vmem:[#allocation2 + $0x180] sm:$0xff] 0.0
      %1482 = vst [vmem:[#allocation2 + $0x188] sm:$0xff] 0.0
      %1483 = vst [vmem:[#allocation2 + $0x190] sm:$0x3] 0.0
      %1484 = vst [vmem:[#allocation2 + $0x198] sm:$0xff] 0.0
      %1485 = vst [vmem:[#allocation2 + $0x1a0] sm:$0xff] 0.0
      %1486 = vst [vmem:[#allocation2 + $0x1a8] sm:$0x3] 0.0
      %s1487 = scalar_lea.vmem [#allocation2], 24
      %1488 = vst [vmem:[%s1487 + $0x1] sm:$0xff] %v1401
      %1489 = vst [vmem:[%s1487 + $0x9] sm:$0xff] %v1402
      %1490 = vst [vmem:[%s1487 + $0x19] sm:$0xff] %v1403
      %1491 = vst [vmem:[%s1487 + $0x21] sm:$0xff] %v1404
      %1492 = vst [vmem:[%s1487 + $0x31] sm:$0xff] %v1405
      %1493 = vst [vmem:[%s1487 + $0x39] sm:$0xff] %v1406
      %1494 = vst [vmem:[%s1487 + $0x49] sm:$0xff] %v1407
      %1495 = vst [vmem:[%s1487 + $0x51] sm:$0xff] %v1408
      %1496 = vst [vmem:[%s1487 + $0x61] sm:$0xff] %v1409
      %1497 = vst [vmem:[%s1487 + $0x69] sm:$0xff] %v1410
      %1498 = vst [vmem:[%s1487 + $0x79] sm:$0xff] %v1411
      %1499 = vst [vmem:[%s1487 + $0x81] sm:$0xff] %v1412
      %1500 = vst [vmem:[%s1487 + $0x91] sm:$0xff] %v1413
      %1501 = vst [vmem:[%s1487 + $0x99] sm:$0xff] %v1414
      %1502 = vst [vmem:[%s1487 + $0xa9] sm:$0xff] %v1415
      %1503 = vst [vmem:[%s1487 + $0xb1] sm:$0xff] %v1416
      %1504 = vst [vmem:[%s1487 + $0xc1] sm:$0xff] %v1417
      %1505 = vst [vmem:[%s1487 + $0xc9] sm:$0xff] %v1418
      %1506 = vst [vmem:[%s1487 + $0xd9] sm:$0xff] %v1419
      %1507 = vst [vmem:[%s1487 + $0xe1] sm:$0xff] %v1420
      %1508 = vst [vmem:[%s1487 + $0xf1] sm:$0xff] %v1421
      %1509 = vst [vmem:[%s1487 + $0xf9] sm:$0xff] %v1422
      %1510 = vst [vmem:[%s1487 + $0x109] sm:$0xff] %v1423
      %1511 = vst [vmem:[%s1487 + $0x111] sm:$0xff] %v1424
      %1512 = vst [vmem:[%s1487 + $0x121] sm:$0xff] %v1425
      %1513 = vst [vmem:[%s1487 + $0x129] sm:$0xff] %v1426
      %1514 = vst [vmem:[%s1487 + $0x139] sm:$0xff] %v1427
      %1515 = vst [vmem:[%s1487 + $0x141] sm:$0xff] %v1428
      %1516 = vst [vmem:[%s1487 + $0x151] sm:$0xff] %v1429
      %1517 = vst [vmem:[%s1487 + $0x159] sm:$0xff] %v1430
      %1518 = vst [vmem:[%s1487 + $0x169] sm:$0xff] %v1431
      %1519 = vst [vmem:[%s1487 + $0x171] sm:$0xff] %v1432
      %v1520 = vld [vmem:[#allocation2] sm:$0xff]
      %v1521 = vld [vmem:[#allocation2 + $0x8] sm:$0xff]
      %v1522 = vld [vmem:[#allocation2 + $0x18] sm:$0xff]
      %v1523 = vld [vmem:[#allocation2 + $0x20] sm:$0xff]
      %v1524 = vld [vmem:[#allocation2 + $0x30] sm:$0xff]
      %v1525 = vld [vmem:[#allocation2 + $0x38] sm:$0xff]
      %v1526 = vld [vmem:[#allocation2 + $0x48] sm:$0xff]
      %v1527 = vld [vmem:[#allocation2 + $0x50] sm:$0xff]
      %v1528 = vld [vmem:[#allocation2 + $0x60] sm:$0xff]
      %v1529 = vld [vmem:[#allocation2 + $0x68] sm:$0xff]
      %v1530 = vld [vmem:[#allocation2 + $0x78] sm:$0xff]
      %v1531 = vld [vmem:[#allocation2 + $0x80] sm:$0xff]
      %v1532 = vld [vmem:[#allocation2 + $0x90] sm:$0xff]
      %v1533 = vld [vmem:[#allocation2 + $0x98] sm:$0xff]
      %v1534 = vld [vmem:[#allocation2 + $0xa8] sm:$0xff]
      %v1535 = vld [vmem:[#allocation2 + $0xb0] sm:$0xff]
      %v1536 = vld [vmem:[#allocation2 + $0xc0] sm:$0xff]
      %v1537 = vld [vmem:[#allocation2 + $0xc8] sm:$0xff]
      %v1538 = vld [vmem:[#allocation2 + $0xd8] sm:$0xff]
      %v1539 = vld [vmem:[#allocation2 + $0xe0] sm:$0xff]
      %v1540 = vld [vmem:[#allocation2 + $0xf0] sm:$0xff]
      %v1541 = vld [vmem:[#allocation2 + $0xf8] sm:$0xff]
      %v1542 = vld [vmem:[#allocation2 + $0x108] sm:$0xff]
      %v1543 = vld [vmem:[#allocation2 + $0x110] sm:$0xff]
      %v1544 = vld [vmem:[#allocation2 + $0x120] sm:$0xff]
      %v1545 = vld [vmem:[#allocation2 + $0x128] sm:$0xff]
      %v1546 = vld [vmem:[#allocation2 + $0x138] sm:$0xff]
      %v1547 = vld [vmem:[#allocation2 + $0x140] sm:$0xff]
      %v1548 = vld [vmem:[#allocation2 + $0x150] sm:$0xff]
      %v1549 = vld [vmem:[#allocation2 + $0x158] sm:$0xff]
      %v1550 = vld [vmem:[#allocation2 + $0x168] sm:$0xff]
      %v1551 = vld [vmem:[#allocation2 + $0x170] sm:$0xff]
      %v1552 = vpack.c.bf16 %v1521, %v1520
      %v1553 = vpack.c.bf16 %v1523, %v1522
      %v1554 = vpack.c.bf16 %v1525, %v1524
      %v1555 = vpack.c.bf16 %v1527, %v1526
      %v1556 = vpack.c.bf16 %v1529, %v1528
      %v1557 = vpack.c.bf16 %v1531, %v1530
      %v1558 = vpack.c.bf16 %v1533, %v1532
      %v1559 = vpack.c.bf16 %v1535, %v1534
      %v1560 = vpack.c.bf16 %v1537, %v1536
      %v1561 = vpack.c.bf16 %v1539, %v1538
      %v1562 = vpack.c.bf16 %v1541, %v1540
      %v1563 = vpack.c.bf16 %v1543, %v1542
      %v1564 = vpack.c.bf16 %v1545, %v1544
      %v1565 = vpack.c.bf16 %v1547, %v1546
      %v1566 = vpack.c.bf16 %v1549, %v1548
      %v1567 = vpack.c.bf16 %v1551, %v1550
      %v1568 = vld [vmem:[#allocation2 + $0x1] sm:$0xff]
      %v1569 = vld [vmem:[#allocation2 + $0x9] sm:$0xff]
      %v1570 = vld [vmem:[#allocation2 + $0x19] sm:$0xff]
      %v1571 = vld [vmem:[#allocation2 + $0x21] sm:$0xff]
      %v1572 = vld [vmem:[#allocation2 + $0x31] sm:$0xff]
      %v1573 = vld [vmem:[#allocation2 + $0x39] sm:$0xff]
      %v1574 = vld [vmem:[#allocation2 + $0x49] sm:$0xff]
      %v1575 = vld [vmem:[#allocation2 + $0x51] sm:$0xff]
      %v1576 = vld [vmem:[#allocation2 + $0x61] sm:$0xff]
      %v1577 = vld [vmem:[#allocation2 + $0x69] sm:$0xff]
      %v1578 = vld [vmem:[#allocation2 + $0x79] sm:$0xff]
      %v1579 = vld [vmem:[#allocation2 + $0x81] sm:$0xff]
      %v1580 = vld [vmem:[#allocation2 + $0x91] sm:$0xff]
      %v1581 = vld [vmem:[#allocation2 + $0x99] sm:$0xff]
      %v1582 = vld [vmem:[#allocation2 + $0xa9] sm:$0xff]
      %v1583 = vld [vmem:[#allocation2 + $0xb1] sm:$0xff]
      %v1584 = vld [vmem:[#allocation2 + $0xc1] sm:$0xff]
      %v1585 = vld [vmem:[#allocation2 + $0xc9] sm:$0xff]
      %v1586 = vld [vmem:[#allocation2 + $0xd9] sm:$0xff]
      %v1587 = vld [vmem:[#allocation2 + $0xe1] sm:$0xff]
      %v1588 = vld [vmem:[#allocation2 + $0xf1] sm:$0xff]
      %v1589 = vld [vmem:[#allocation2 + $0xf9] sm:$0xff]
      %v1590 = vld [vmem:[#allocation2 + $0x109] sm:$0xff]
      %v1591 = vld [vmem:[#allocation2 + $0x111] sm:$0xff]
      %v1592 = vld [vmem:[#allocation2 + $0x121] sm:$0xff]
      %v1593 = vld [vmem:[#allocation2 + $0x129] sm:$0xff]
      %v1594 = vld [vmem:[#allocation2 + $0x139] sm:$0xff]
      %v1595 = vld [vmem:[#allocation2 + $0x141] sm:$0xff]
      %v1596 = vld [vmem:[#allocation2 + $0x151] sm:$0xff]
      %v1597 = vld [vmem:[#allocation2 + $0x159] sm:$0xff]
      %v1598 = vld [vmem:[#allocation2 + $0x169] sm:$0xff]
      %v1599 = vld [vmem:[#allocation2 + $0x171] sm:$0xff]
      %v1600 = vpack.c.bf16 %v1569, %v1568
      %v1601 = vpack.c.bf16 %v1571, %v1570
      %v1602 = vpack.c.bf16 %v1573, %v1572
      %v1603 = vpack.c.bf16 %v1575, %v1574
      %v1604 = vpack.c.bf16 %v1577, %v1576
      %v1605 = vpack.c.bf16 %v1579, %v1578
      %v1606 = vpack.c.bf16 %v1581, %v1580
      %v1607 = vpack.c.bf16 %v1583, %v1582
      %v1608 = vpack.c.bf16 %v1585, %v1584
      %v1609 = vpack.c.bf16 %v1587, %v1586
      %v1610 = vpack.c.bf16 %v1589, %v1588
      %v1611 = vpack.c.bf16 %v1591, %v1590
      %v1612 = vpack.c.bf16 %v1593, %v1592
      %v1613 = vpack.c.bf16 %v1595, %v1594
      %v1614 = vpack.c.bf16 %v1597, %v1596
      %v1615 = vpack.c.bf16 %v1599, %v1598
      %v1616 = vld [vmem:[#allocation2 + $0x2] sm:$0xff]
      %v1617 = vld [vmem:[#allocation2 + $0xa] sm:$0xff]
      %v1618 = vld [vmem:[#allocation2 + $0x1a] sm:$0xff]
      %v1619 = vld [vmem:[#allocation2 + $0x22] sm:$0xff]
      %v1620 = vld [vmem:[#allocation2 + $0x32] sm:$0xff]
      %v1621 = vld [vmem:[#allocation2 + $0x3a] sm:$0xff]
      %v1622 = vld [vmem:[#allocation2 + $0x4a] sm:$0xff]
      %v1623 = vld [vmem:[#allocation2 + $0x52] sm:$0xff]
      %v1624 = vld [vmem:[#allocation2 + $0x62] sm:$0xff]
      %v1625 = vld [vmem:[#allocation2 + $0x6a] sm:$0xff]
      %v1626 = vld [vmem:[#allocation2 + $0x7a] sm:$0xff]
      %v1627 = vld [vmem:[#allocation2 + $0x82] sm:$0xff]
      %v1628 = vld [vmem:[#allocation2 + $0x92] sm:$0xff]
      %v1629 = vld [vmem:[#allocation2 + $0x9a] sm:$0xff]
      %v1630 = vld [vmem:[#allocation2 + $0xaa] sm:$0xff]
      %v1631 = vld [vmem:[#allocation2 + $0xb2] sm:$0xff]
      %v1632 = vld [vmem:[#allocation2 + $0xc2] sm:$0xff]
      %v1633 = vld [vmem:[#allocation2 + $0xca] sm:$0xff]
      %v1634 = vld [vmem:[#allocation2 + $0xda] sm:$0xff]
      %v1635 = vld [vmem:[#allocation2 + $0xe2] sm:$0xff]
      %v1636 = vld [vmem:[#allocation2 + $0xf2] sm:$0xff]
      %v1637 = vld [vmem:[#allocation2 + $0xfa] sm:$0xff]
      %v1638 = vld [vmem:[#allocation2 + $0x10a] sm:$0xff]
      %v1639 = vld [vmem:[#allocation2 + $0x112] sm:$0xff]
      %v1640 = vld [vmem:[#allocation2 + $0x122] sm:$0xff]
      %v1641 = vld [vmem:[#allocation2 + $0x12a] sm:$0xff]
      %v1642 = vld [vmem:[#allocation2 + $0x13a] sm:$0xff]
      %v1643 = vld [vmem:[#allocation2 + $0x142] sm:$0xff]
      %v1644 = vld [vmem:[#allocation2 + $0x152] sm:$0xff]
      %v1645 = vld [vmem:[#allocation2 + $0x15a] sm:$0xff]
      %v1646 = vld [vmem:[#allocation2 + $0x16a] sm:$0xff]
      %v1647 = vld [vmem:[#allocation2 + $0x172] sm:$0xff]
      %v1648 = vpack.c.bf16 %v1617, %v1616
      %v1649 = vpack.c.bf16 %v1619, %v1618
      %v1650 = vpack.c.bf16 %v1621, %v1620
      %v1651 = vpack.c.bf16 %v1623, %v1622
      %v1652 = vpack.c.bf16 %v1625, %v1624
      %v1653 = vpack.c.bf16 %v1627, %v1626
      %v1654 = vpack.c.bf16 %v1629, %v1628
      %v1655 = vpack.c.bf16 %v1631, %v1630
      %v1656 = vpack.c.bf16 %v1633, %v1632
      %v1657 = vpack.c.bf16 %v1635, %v1634
      %v1658 = vpack.c.bf16 %v1637, %v1636
      %v1659 = vpack.c.bf16 %v1639, %v1638
      %v1660 = vpack.c.bf16 %v1641, %v1640
      %v1661 = vpack.c.bf16 %v1643, %v1642
      %v1662 = vpack.c.bf16 %v1645, %v1644
      %v1663 = vpack.c.bf16 %v1647, %v1646
      %v1664 = vld [vmem:[%s1487] sm:$0xff]
      %v1665 = vld [vmem:[%s1487 + $0x8] sm:$0xff]
      %v1666 = vld [vmem:[%s1487 + $0x18] sm:$0xff]
      %v1667 = vld [vmem:[%s1487 + $0x20] sm:$0xff]
      %v1668 = vld [vmem:[%s1487 + $0x30] sm:$0xff]
      %v1669 = vld [vmem:[%s1487 + $0x38] sm:$0xff]
      %v1670 = vld [vmem:[%s1487 + $0x48] sm:$0xff]
      %v1671 = vld [vmem:[%s1487 + $0x50] sm:$0xff]
      %v1672 = vld [vmem:[%s1487 + $0x60] sm:$0xff]
      %v1673 = vld [vmem:[%s1487 + $0x68] sm:$0xff]
      %v1674 = vld [vmem:[%s1487 + $0x78] sm:$0xff]
      %v1675 = vld [vmem:[%s1487 + $0x80] sm:$0xff]
      %v1676 = vld [vmem:[%s1487 + $0x90] sm:$0xff]
      %v1677 = vld [vmem:[%s1487 + $0x98] sm:$0xff]
      %v1678 = vld [vmem:[%s1487 + $0xa8] sm:$0xff]
      %v1679 = vld [vmem:[%s1487 + $0xb0] sm:$0xff]
      %v1680 = vld [vmem:[%s1487 + $0xc0] sm:$0xff]
      %v1681 = vld [vmem:[%s1487 + $0xc8] sm:$0xff]
      %v1682 = vld [vmem:[%s1487 + $0xd8] sm:$0xff]
      %v1683 = vld [vmem:[%s1487 + $0xe0] sm:$0xff]
      %v1684 = vld [vmem:[%s1487 + $0xf0] sm:$0xff]
      %v1685 = vld [vmem:[%s1487 + $0xf8] sm:$0xff]
      %v1686 = vld [vmem:[%s1487 + $0x108] sm:$0xff]
      %v1687 = vld [vmem:[%s1487 + $0x110] sm:$0xff]
      %v1688 = vld [vmem:[%s1487 + $0x120] sm:$0xff]
      %v1689 = vld [vmem:[%s1487 + $0x128] sm:$0xff]
      %v1690 = vld [vmem:[%s1487 + $0x138] sm:$0xff]
      %v1691 = vld [vmem:[%s1487 + $0x140] sm:$0xff]
      %v1692 = vld [vmem:[%s1487 + $0x150] sm:$0xff]
      %v1693 = vld [vmem:[%s1487 + $0x158] sm:$0xff]
      %v1694 = vld [vmem:[%s1487 + $0x168] sm:$0xff]
      %v1695 = vld [vmem:[%s1487 + $0x170] sm:$0xff]
      %v1696 = vpack.c.bf16 %v1665, %v1664
      %v1697 = vpack.c.bf16 %v1667, %v1666
      %v1698 = vpack.c.bf16 %v1669, %v1668
      %v1699 = vpack.c.bf16 %v1671, %v1670
      %v1700 = vpack.c.bf16 %v1673, %v1672
      %v1701 = vpack.c.bf16 %v1675, %v1674
      %v1702 = vpack.c.bf16 %v1677, %v1676
      %v1703 = vpack.c.bf16 %v1679, %v1678
      %v1704 = vpack.c.bf16 %v1681, %v1680
      %v1705 = vpack.c.bf16 %v1683, %v1682
      %v1706 = vpack.c.bf16 %v1685, %v1684
      %v1707 = vpack.c.bf16 %v1687, %v1686
      %v1708 = vpack.c.bf16 %v1689, %v1688
      %v1709 = vpack.c.bf16 %v1691, %v1690
      %v1710 = vpack.c.bf16 %v1693, %v1692
      %v1711 = vpack.c.bf16 %v1695, %v1694
      %v1712 = vld [vmem:[%s1487 + $0x1] sm:$0xff]
      %v1713 = vld [vmem:[%s1487 + $0x9] sm:$0xff]
      %v1714 = vld [vmem:[%s1487 + $0x19] sm:$0xff]
      %v1715 = vld [vmem:[%s1487 + $0x21] sm:$0xff]
      %v1716 = vld [vmem:[%s1487 + $0x31] sm:$0xff]
      %v1717 = vld [vmem:[%s1487 + $0x39] sm:$0xff]
      %v1718 = vld [vmem:[%s1487 + $0x49] sm:$0xff]
      %v1719 = vld [vmem:[%s1487 + $0x51] sm:$0xff]
      %v1720 = vld [vmem:[%s1487 + $0x61] sm:$0xff]
      %v1721 = vld [vmem:[%s1487 + $0x69] sm:$0xff]
      %v1722 = vld [vmem:[%s1487 + $0x79] sm:$0xff]
      %v1723 = vld [vmem:[%s1487 + $0x81] sm:$0xff]
      %v1724 = vld [vmem:[%s1487 + $0x91] sm:$0xff]
      %v1725 = vld [vmem:[%s1487 + $0x99] sm:$0xff]
      %v1726 = vld [vmem:[%s1487 + $0xa9] sm:$0xff]
      %v1727 = vld [vmem:[%s1487 + $0xb1] sm:$0xff]
      %v1728 = vld [vmem:[%s1487 + $0xc1] sm:$0xff]
      %v1729 = vld [vmem:[%s1487 + $0xc9] sm:$0xff]
      %v1730 = vld [vmem:[%s1487 + $0xd9] sm:$0xff]
      %v1731 = vld [vmem:[%s1487 + $0xe1] sm:$0xff]
      %v1732 = vld [vmem:[%s1487 + $0xf1] sm:$0xff]
      %v1733 = vld [vmem:[%s1487 + $0xf9] sm:$0xff]
      %v1734 = vld [vmem:[%s1487 + $0x109] sm:$0xff]
      %v1735 = vld [vmem:[%s1487 + $0x111] sm:$0xff]
      %v1736 = vld [vmem:[%s1487 + $0x121] sm:$0xff]
      %v1737 = vld [vmem:[%s1487 + $0x129] sm:$0xff]
      %v1738 = vld [vmem:[%s1487 + $0x139] sm:$0xff]
      %v1739 = vld [vmem:[%s1487 + $0x141] sm:$0xff]
      %v1740 = vld [vmem:[%s1487 + $0x151] sm:$0xff]
      %v1741 = vld [vmem:[%s1487 + $0x159] sm:$0xff]
      %v1742 = vld [vmem:[%s1487 + $0x169] sm:$0xff]
      %v1743 = vld [vmem:[%s1487 + $0x171] sm:$0xff]
      %v1744 = vpack.c.bf16 %v1713, %v1712
      %v1745 = vpack.c.bf16 %v1715, %v1714
      %v1746 = vpack.c.bf16 %v1717, %v1716
      %v1747 = vpack.c.bf16 %v1719, %v1718
      %v1748 = vpack.c.bf16 %v1721, %v1720
      %v1749 = vpack.c.bf16 %v1723, %v1722
      %v1750 = vpack.c.bf16 %v1725, %v1724
      %v1751 = vpack.c.bf16 %v1727, %v1726
      %v1752 = vpack.c.bf16 %v1729, %v1728
      %v1753 = vpack.c.bf16 %v1731, %v1730
      %v1754 = vpack.c.bf16 %v1733, %v1732
      %v1755 = vpack.c.bf16 %v1735, %v1734
      %v1756 = vpack.c.bf16 %v1737, %v1736
      %v1757 = vpack.c.bf16 %v1739, %v1738
      %v1758 = vpack.c.bf16 %v1741, %v1740
      %v1759 = vpack.c.bf16 %v1743, %v1742
      %v1760 = vld [vmem:[%s1487 + $0x2] sm:$0xff]
      %v1761 = vld [vmem:[%s1487 + $0xa] sm:$0xff]
      %v1762 = vld [vmem:[%s1487 + $0x1a] sm:$0xff]
      %v1763 = vld [vmem:[%s1487 + $0x22] sm:$0xff]
      %v1764 = vld [vmem:[%s1487 + $0x32] sm:$0xff]
      %v1765 = vld [vmem:[%s1487 + $0x3a] sm:$0xff]
      %v1766 = vld [vmem:[%s1487 + $0x4a] sm:$0xff]
      %v1767 = vld [vmem:[%s1487 + $0x52] sm:$0xff]
      %v1768 = vld [vmem:[%s1487 + $0x62] sm:$0xff]
      %v1769 = vld [vmem:[%s1487 + $0x6a] sm:$0xff]
      %v1770 = vld [vmem:[%s1487 + $0x7a] sm:$0xff]
      %v1771 = vld [vmem:[%s1487 + $0x82] sm:$0xff]
      %v1772 = vld [vmem:[%s1487 + $0x92] sm:$0xff]
      %v1773 = vld [vmem:[%s1487 + $0x9a] sm:$0xff]
      %v1774 = vld [vmem:[%s1487 + $0xaa] sm:$0xff]
      %v1775 = vld [vmem:[%s1487 + $0xb2] sm:$0xff]
      %v1776 = vld [vmem:[%s1487 + $0xc2] sm:$0xff]
      %v1777 = vld [vmem:[%s1487 + $0xca] sm:$0xff]
      %v1778 = vld [vmem:[%s1487 + $0xda] sm:$0xff]
      %v1779 = vld [vmem:[%s1487 + $0xe2] sm:$0xff]
      %v1780 = vld [vmem:[%s1487 + $0xf2] sm:$0xff]
      %v1781 = vld [vmem:[%s1487 + $0xfa] sm:$0xff]
      %v1782 = vld [vmem:[%s1487 + $0x10a] sm:$0xff]
      %v1783 = vld [vmem:[%s1487 + $0x112] sm:$0xff]
      %v1784 = vld [vmem:[%s1487 + $0x122] sm:$0xff]
      %v1785 = vld [vmem:[%s1487 + $0x12a] sm:$0xff]
      %v1786 = vld [vmem:[%s1487 + $0x13a] sm:$0xff]
      %v1787 = vld [vmem:[%s1487 + $0x142] sm:$0xff]
      %v1788 = vld [vmem:[%s1487 + $0x152] sm:$0xff]
      %v1789 = vld [vmem:[%s1487 + $0x15a] sm:$0xff]
      %v1790 = vld [vmem:[%s1487 + $0x16a] sm:$0xff]
      %v1791 = vld [vmem:[%s1487 + $0x172] sm:$0xff]
      %v1792 = vpack.c.bf16 %v1761, %v1760
      %v1793 = vpack.c.bf16 %v1763, %v1762
      %v1794 = vpack.c.bf16 %v1765, %v1764
      %v1795 = vpack.c.bf16 %v1767, %v1766
      %v1796 = vpack.c.bf16 %v1769, %v1768
      %v1797 = vpack.c.bf16 %v1771, %v1770
      %v1798 = vpack.c.bf16 %v1773, %v1772
      %v1799 = vpack.c.bf16 %v1775, %v1774
      %v1800 = vpack.c.bf16 %v1777, %v1776
      %v1801 = vpack.c.bf16 %v1779, %v1778
      %v1802 = vpack.c.bf16 %v1781, %v1780
      %v1803 = vpack.c.bf16 %v1783, %v1782
      %v1804 = vpack.c.bf16 %v1785, %v1784
      %v1805 = vpack.c.bf16 %v1787, %v1786
      %v1806 = vpack.c.bf16 %v1789, %v1788
      %v1807 = vpack.c.bf16 %v1791, %v1790
      %s1808 = scalar_lea.vmem [#allocation2], 48
      %v1809 = vld [vmem:[%s1808] sm:$0xff]
      %v1810 = vld [vmem:[%s1808 + $0x8] sm:$0xff]
      %v1811 = vld [vmem:[%s1808 + $0x18] sm:$0xff]
      %v1812 = vld [vmem:[%s1808 + $0x20] sm:$0xff]
      %v1813 = vld [vmem:[%s1808 + $0x30] sm:$0xff]
      %v1814 = vld [vmem:[%s1808 + $0x38] sm:$0xff]
      %v1815 = vld [vmem:[%s1808 + $0x48] sm:$0xff]
      %v1816 = vld [vmem:[%s1808 + $0x50] sm:$0xff]
      %v1817 = vld [vmem:[%s1808 + $0x60] sm:$0xff]
      %v1818 = vld [vmem:[%s1808 + $0x68] sm:$0xff]
      %v1819 = vld [vmem:[%s1808 + $0x78] sm:$0xff]
      %v1820 = vld [vmem:[%s1808 + $0x80] sm:$0xff]
      %v1821 = vld [vmem:[%s1808 + $0x90] sm:$0xff]
      %v1822 = vld [vmem:[%s1808 + $0x98] sm:$0xff]
      %v1823 = vld [vmem:[%s1808 + $0xa8] sm:$0xff]
      %v1824 = vld [vmem:[%s1808 + $0xb0] sm:$0xff]
      %v1825 = vld [vmem:[%s1808 + $0xc0] sm:$0xff]
      %v1826 = vld [vmem:[%s1808 + $0xc8] sm:$0xff]
      %v1827 = vld [vmem:[%s1808 + $0xd8] sm:$0xff]
      %v1828 = vld [vmem:[%s1808 + $0xe0] sm:$0xff]
      %v1829 = vld [vmem:[%s1808 + $0xf0] sm:$0xff]
      %v1830 = vld [vmem:[%s1808 + $0xf8] sm:$0xff]
      %v1831 = vld [vmem:[%s1808 + $0x108] sm:$0xff]
      %v1832 = vld [vmem:[%s1808 + $0x110] sm:$0xff]
      %v1833 = vld [vmem:[%s1808 + $0x120] sm:$0xff]
      %v1834 = vld [vmem:[%s1808 + $0x128] sm:$0xff]
      %v1835 = vld [vmem:[%s1808 + $0x138] sm:$0xff]
      %v1836 = vld [vmem:[%s1808 + $0x140] sm:$0xff]
      %v1837 = vld [vmem:[%s1808 + $0x150] sm:$0xff]
      %v1838 = vld [vmem:[%s1808 + $0x158] sm:$0xff]
      %v1839 = vld [vmem:[%s1808 + $0x168] sm:$0xff]
      %v1840 = vld [vmem:[%s1808 + $0x170] sm:$0xff]
      %v1841 = vpack.c.bf16 %v1810, %v1809
      %v1842 = vpack.c.bf16 %v1812, %v1811
      %v1843 = vpack.c.bf16 %v1814, %v1813
      %v1844 = vpack.c.bf16 %v1816, %v1815
      %v1845 = vpack.c.bf16 %v1818, %v1817
      %v1846 = vpack.c.bf16 %v1820, %v1819
      %v1847 = vpack.c.bf16 %v1822, %v1821
      %v1848 = vpack.c.bf16 %v1824, %v1823
      %v1849 = vpack.c.bf16 %v1826, %v1825
      %v1850 = vpack.c.bf16 %v1828, %v1827
      %v1851 = vpack.c.bf16 %v1830, %v1829
      %v1852 = vpack.c.bf16 %v1832, %v1831
      %v1853 = vpack.c.bf16 %v1834, %v1833
      %v1854 = vpack.c.bf16 %v1836, %v1835
      %v1855 = vpack.c.bf16 %v1838, %v1837
      %v1856 = vpack.c.bf16 %v1840, %v1839
      %v1857 = vld [vmem:[%s1808 + $0x1] sm:$0xff]
      %v1858 = vld [vmem:[%s1808 + $0x9] sm:$0xff]
      %v1859 = vld [vmem:[%s1808 + $0x19] sm:$0xff]
      %v1860 = vld [vmem:[%s1808 + $0x21] sm:$0xff]
      %v1861 = vld [vmem:[%s1808 + $0x31] sm:$0xff]
      %v1862 = vld [vmem:[%s1808 + $0x39] sm:$0xff]
      %v1863 = vld [vmem:[%s1808 + $0x49] sm:$0xff]
      %v1864 = vld [vmem:[%s1808 + $0x51] sm:$0xff]
      %v1865 = vld [vmem:[%s1808 + $0x61] sm:$0xff]
      %v1866 = vld [vmem:[%s1808 + $0x69] sm:$0xff]
      %v1867 = vld [vmem:[%s1808 + $0x79] sm:$0xff]
      %v1868 = vld [vmem:[%s1808 + $0x81] sm:$0xff]
      %v1869 = vld [vmem:[%s1808 + $0x91] sm:$0xff]
      %v1870 = vld [vmem:[%s1808 + $0x99] sm:$0xff]
      %v1871 = vld [vmem:[%s1808 + $0xa9] sm:$0xff]
      %v1872 = vld [vmem:[%s1808 + $0xb1] sm:$0xff]
      %v1873 = vld [vmem:[%s1808 + $0xc1] sm:$0xff]
      %v1874 = vld [vmem:[%s1808 + $0xc9] sm:$0xff]
      %v1875 = vld [vmem:[%s1808 + $0xd9] sm:$0xff]
      %v1876 = vld [vmem:[%s1808 + $0xe1] sm:$0xff]
      %v1877 = vld [vmem:[%s1808 + $0xf1] sm:$0xff]
      %v1878 = vld [vmem:[%s1808 + $0xf9] sm:$0xff]
      %v1879 = vld [vmem:[%s1808 + $0x109] sm:$0xff]
      %v1880 = vld [vmem:[%s1808 + $0x111] sm:$0xff]
      %v1881 = vld [vmem:[%s1808 + $0x121] sm:$0xff]
      %v1882 = vld [vmem:[%s1808 + $0x129] sm:$0xff]
      %v1883 = vld [vmem:[%s1808 + $0x139] sm:$0xff]
      %v1884 = vld [vmem:[%s1808 + $0x141] sm:$0xff]
      %v1885 = vld [vmem:[%s1808 + $0x151] sm:$0xff]
      %v1886 = vld [vmem:[%s1808 + $0x159] sm:$0xff]
      %v1887 = vld [vmem:[%s1808 + $0x169] sm:$0xff]
      %v1888 = vld [vmem:[%s1808 + $0x171] sm:$0xff]
      %v1889 = vpack.c.bf16 %v1858, %v1857
      %v1890 = vpack.c.bf16 %v1860, %v1859
      %v1891 = vpack.c.bf16 %v1862, %v1861
      %v1892 = vpack.c.bf16 %v1864, %v1863
      %v1893 = vpack.c.bf16 %v1866, %v1865
      %v1894 = vpack.c.bf16 %v1868, %v1867
      %v1895 = vpack.c.bf16 %v1870, %v1869
      %v1896 = vpack.c.bf16 %v1872, %v1871
      %v1897 = vpack.c.bf16 %v1874, %v1873
      %v1898 = vpack.c.bf16 %v1876, %v1875
      %v1899 = vpack.c.bf16 %v1878, %v1877
      %v1900 = vpack.c.bf16 %v1880, %v1879
      %v1901 = vpack.c.bf16 %v1882, %v1881
      %v1902 = vpack.c.bf16 %v1884, %v1883
      %v1903 = vpack.c.bf16 %v1886, %v1885
      %v1904 = vpack.c.bf16 %v1888, %v1887
      %v1905 = vld [vmem:[%s1808 + $0x2] sm:$0xff]
      %v1906 = vld [vmem:[%s1808 + $0xa] sm:$0xff]
      %v1907 = vld [vmem:[%s1808 + $0x1a] sm:$0xff]
      %v1908 = vld [vmem:[%s1808 + $0x22] sm:$0xff]
      %v1909 = vld [vmem:[%s1808 + $0x32] sm:$0xff]
      %v1910 = vld [vmem:[%s1808 + $0x3a] sm:$0xff]
      %v1911 = vld [vmem:[%s1808 + $0x4a] sm:$0xff]
      %v1912 = vld [vmem:[%s1808 + $0x52] sm:$0xff]
      %v1913 = vld [vmem:[%s1808 + $0x62] sm:$0xff]
      %v1914 = vld [vmem:[%s1808 + $0x6a] sm:$0xff]
      %v1915 = vld [vmem:[%s1808 + $0x7a] sm:$0xff]
      %v1916 = vld [vmem:[%s1808 + $0x82] sm:$0xff]
      %v1917 = vld [vmem:[%s1808 + $0x92] sm:$0xff]
      %v1918 = vld [vmem:[%s1808 + $0x9a] sm:$0xff]
      %v1919 = vld [vmem:[%s1808 + $0xaa] sm:$0xff]
      %v1920 = vld [vmem:[%s1808 + $0xb2] sm:$0xff]
      %v1921 = vld [vmem:[%s1808 + $0xc2] sm:$0xff]
      %v1922 = vld [vmem:[%s1808 + $0xca] sm:$0xff]
      %v1923 = vld [vmem:[%s1808 + $0xda] sm:$0xff]
      %v1924 = vld [vmem:[%s1808 + $0xe2] sm:$0xff]
      %v1925 = vld [vmem:[%s1808 + $0xf2] sm:$0xff]
      %v1926 = vld [vmem:[%s1808 + $0xfa] sm:$0xff]
      %v1927 = vld [vmem:[%s1808 + $0x10a] sm:$0xff]
      %v1928 = vld [vmem:[%s1808 + $0x112] sm:$0xff]
      %v1929 = vld [vmem:[%s1808 + $0x122] sm:$0xff]
      %v1930 = vld [vmem:[%s1808 + $0x12a] sm:$0xff]
      %v1931 = vld [vmem:[%s1808 + $0x13a] sm:$0xff]
      %v1932 = vld [vmem:[%s1808 + $0x142] sm:$0xff]
      %v1933 = vld [vmem:[%s1808 + $0x152] sm:$0xff]
      %v1934 = vld [vmem:[%s1808 + $0x15a] sm:$0xff]
      %v1935 = vld [vmem:[%s1808 + $0x16a] sm:$0xff]
      %v1936 = vld [vmem:[%s1808 + $0x172] sm:$0xff]
      %v1937 = vpack.c.bf16 %v1906, %v1905
      %v1938 = vpack.c.bf16 %v1908, %v1907
      %v1939 = vpack.c.bf16 %v1910, %v1909
      %v1940 = vpack.c.bf16 %v1912, %v1911
      %v1941 = vpack.c.bf16 %v1914, %v1913
      %v1942 = vpack.c.bf16 %v1916, %v1915
      %v1943 = vpack.c.bf16 %v1918, %v1917
      %v1944 = vpack.c.bf16 %v1920, %v1919
      %v1945 = vpack.c.bf16 %v1922, %v1921
      %v1946 = vpack.c.bf16 %v1924, %v1923
      %v1947 = vpack.c.bf16 %v1926, %v1925
      %v1948 = vpack.c.bf16 %v1928, %v1927
      %v1949 = vpack.c.bf16 %v1930, %v1929
      %v1950 = vpack.c.bf16 %v1932, %v1931
      %v1951 = vpack.c.bf16 %v1934, %v1933
      %v1952 = vpack.c.bf16 %v1936, %v1935
      %v1953 = vld [vmem:[%s2] sm:$0xf]
      %v1954 = vld [vmem:[%s2 + $0x4] sm:$0xf]
      %v1955 = vld [vmem:[%s2 + $0x8] sm:$0xf]
      %v1956 = vld [vmem:[%s2 + $0xc] sm:$0xf]
      %v1957 = vld [vmem:[%s2 + $0x10] sm:$0xf]
      %v1958 = vld [vmem:[%s2 + $0x14] sm:$0xf]
      %v1959 = vld [vmem:[%s2 + $0x18] sm:$0xf]
      %v1960 = vld [vmem:[%s2 + $0x1c] sm:$0xf]
      %v1961 = vld [vmem:[%s2 + $0x20] sm:$0xf]
      %v1962 = vld [vmem:[%s2 + $0x24] sm:$0xf]
      %v1963 = vld [vmem:[%s2 + $0x28] sm:$0xf]
      %v1964 = vld [vmem:[%s2 + $0x2c] sm:$0xf]
      %v1965 = vld [vmem:[%s2 + $0x30] sm:$0xf]
      %v1966 = vld [vmem:[%s2 + $0x34] sm:$0xf]
      %v1967 = vld [vmem:[%s2 + $0x38] sm:$0xf]
      %v1968 = vld [vmem:[%s2 + $0x3c] sm:$0xf]
      %v1969 = vld [vmem:[%s2 + $0x40] sm:$0xf]
      %v1970 = vld [vmem:[%s2 + $0x44] sm:$0xf]
      %v1971 = vld [vmem:[%s2 + $0x48] sm:$0xf]
      %v1972 = vld [vmem:[%s2 + $0x4c] sm:$0xf]
      %v1973 = vld [vmem:[%s2 + $0x50] sm:$0xf]
      %v1974 = vld [vmem:[%s2 + $0x54] sm:$0xf]
      %v1975 = vld [vmem:[%s2 + $0x58] sm:$0xf]
      %v1976 = vld [vmem:[%s2 + $0x5c] sm:$0xf]
      %v1977 = vld [vmem:[%s2 + $0x60] sm:$0xf]
      %v1978 = vld [vmem:[%s2 + $0x64] sm:$0xf]
      %v1979 = vld [vmem:[%s2 + $0x68] sm:$0xf]
      %v1980 = vld [vmem:[%s2 + $0x6c] sm:$0xf]
      %v1981 = vld [vmem:[%s2 + $0x70] sm:$0xf]
      %v1982 = vld [vmem:[%s2 + $0x74] sm:$0xf]
      %v1983 = vld [vmem:[%s2 + $0x78] sm:$0xf]
      %v1984 = vld [vmem:[%s2 + $0x7c] sm:$0xf]
      %v1985 = vld [vmem:[%s2 + $0x80] sm:$0xf]
      %v1986 = vld [vmem:[%s2 + $0x84] sm:$0xf]
      %v1987 = vld [vmem:[%s2 + $0x88] sm:$0xf]
      %v1988 = vld [vmem:[%s2 + $0x8c] sm:$0xf]
      %v1989 = vld [vmem:[%s2 + $0x90] sm:$0xf]
      %v1990 = vld [vmem:[%s2 + $0x94] sm:$0xf]
      %v1991 = vld [vmem:[%s2 + $0x98] sm:$0xf]
      %v1992 = vld [vmem:[%s2 + $0x9c] sm:$0xf]
      %v1993 = vld [vmem:[%s2 + $0xa0] sm:$0xf]
      %v1994 = vld [vmem:[%s2 + $0xa4] sm:$0xf]
      %v1995 = vld [vmem:[%s2 + $0xa8] sm:$0xf]
      %v1996 = vld [vmem:[%s2 + $0xac] sm:$0xf]
      %v1997 = vld [vmem:[%s2 + $0xb0] sm:$0xf]
      %v1998 = vld [vmem:[%s2 + $0xb4] sm:$0xf]
      %v1999 = vld [vmem:[%s2 + $0xb8] sm:$0xf]
      %v2000 = vld [vmem:[%s2 + $0xbc] sm:$0xf]
      %v2001 = vld [vmem:[%s2 + $0xc0] sm:$0xf]
      %v2002 = vld [vmem:[%s2 + $0xc4] sm:$0xf]
      %v2003 = vld [vmem:[%s2 + $0xc8] sm:$0xf]
      %v2004 = vld [vmem:[%s2 + $0xcc] sm:$0xf]
      %v2005 = vld [vmem:[%s2 + $0xd0] sm:$0xf]
      %v2006 = vld [vmem:[%s2 + $0xd4] sm:$0xf]
      %v2007 = vld [vmem:[%s2 + $0xd8] sm:$0xf]
      %v2008 = vld [vmem:[%s2 + $0xdc] sm:$0xf]
      %v2009 = vld [vmem:[%s2 + $0xe0] sm:$0xf]
      %v2010 = vld [vmem:[%s2 + $0xe4] sm:$0xf]
      %v2011 = vld [vmem:[%s2 + $0xe8] sm:$0xf]
      %v2012 = vld [vmem:[%s2 + $0xec] sm:$0xf]
      %v2013 = vld [vmem:[%s2 + $0xf0] sm:$0xf]
      %v2014 = vld [vmem:[%s2 + $0xf4] sm:$0xf]
      %v2015 = vld [vmem:[%s2 + $0xf8] sm:$0xf]
      %v2016 = vld [vmem:[%s2 + $0xfc] sm:$0xf]
      %v2017 = vld [vmem:[%s2 + $0x100] sm:$0xf]
      %v2018 = vld [vmem:[%s2 + $0x104] sm:$0xf]
      %v2019 = vld [vmem:[%s2 + $0x108] sm:$0xf]
      %v2020 = vld [vmem:[%s2 + $0x10c] sm:$0xf]
      %v2021 = vld [vmem:[%s2 + $0x110] sm:$0xf]
      %v2022 = vld [vmem:[%s2 + $0x114] sm:$0xf]
      %v2023 = vld [vmem:[%s2 + $0x118] sm:$0xf]
      %v2024 = vld [vmem:[%s2 + $0x11c] sm:$0xf]
      %v2025 = vld [vmem:[%s2 + $0x120] sm:$0xf]
      %v2026 = vld [vmem:[%s2 + $0x124] sm:$0xf]
      %v2027 = vld [vmem:[%s2 + $0x128] sm:$0xf]
      %v2028 = vld [vmem:[%s2 + $0x12c] sm:$0xf]
      %v2029 = vld [vmem:[%s2 + $0x130] sm:$0xf]
      %v2030 = vld [vmem:[%s2 + $0x134] sm:$0xf]
      %v2031 = vld [vmem:[%s2 + $0x138] sm:$0xf]
      %v2032 = vld [vmem:[%s2 + $0x13c] sm:$0xf]
      %v2033 = vld [vmem:[%s2 + $0x140] sm:$0xf]
      %v2034 = vld [vmem:[%s2 + $0x144] sm:$0xf]
      %v2035 = vld [vmem:[%s2 + $0x148] sm:$0xf]
      %v2036 = vld [vmem:[%s2 + $0x14c] sm:$0xf]
      %v2037 = vld [vmem:[%s2 + $0x150] sm:$0xf]
      %v2038 = vld [vmem:[%s2 + $0x154] sm:$0xf]
      %v2039 = vld [vmem:[%s2 + $0x158] sm:$0xf]
      %v2040 = vld [vmem:[%s2 + $0x15c] sm:$0xf]
      %v2041 = vld [vmem:[%s2 + $0x160] sm:$0xf]
      %v2042 = vld [vmem:[%s2 + $0x164] sm:$0xf]
      %v2043 = vld [vmem:[%s2 + $0x168] sm:$0xf]
      %v2044 = vld [vmem:[%s2 + $0x16c] sm:$0xf]
      %v2045 = vld [vmem:[%s2 + $0x170] sm:$0xf]
      %v2046 = vld [vmem:[%s2 + $0x174] sm:$0xf]
      %v2047 = vld [vmem:[%s2 + $0x178] sm:$0xf]
      %v2048 = vld [vmem:[%s2 + $0x17c] sm:$0xf]
      %v2049 = vld [vmem:[%s2 + $0x180] sm:$0xf]
      %v2050 = vld [vmem:[%s2 + $0x184] sm:$0xf]
      %v2051 = vld [vmem:[%s2 + $0x188] sm:$0xf]
      %v2052 = vld [vmem:[%s2 + $0x18c] sm:$0xf]
      %v2053 = vld [vmem:[%s2 + $0x190] sm:$0xf]
      %v2054 = vld [vmem:[%s2 + $0x194] sm:$0xf]
      %v2055 = vld [vmem:[%s2 + $0x198] sm:$0xf]
      %v2056 = vld [vmem:[%s2 + $0x19c] sm:$0xf]
      %v2057 = vld [vmem:[%s2 + $0x1a0] sm:$0xf]
      %v2058 = vld [vmem:[%s2 + $0x1a4] sm:$0xf]
      %v2059 = vld [vmem:[%s2 + $0x1a8] sm:$0xf]
      %v2060 = vld [vmem:[%s2 + $0x1ac] sm:$0xf]
      %v2061 = vld [vmem:[%s2 + $0x1b0] sm:$0xf]
      %v2062 = vld [vmem:[%s2 + $0x1b4] sm:$0xf]
      %v2063 = vld [vmem:[%s2 + $0x1b8] sm:$0xf]
      %v2064 = vld [vmem:[%s2 + $0x1bc] sm:$0xf]
      %v2065 = vld [vmem:[%s2 + $0x1c0] sm:$0xf]
      %v2066 = vld [vmem:[%s2 + $0x1c4] sm:$0xf]
      %v2067 = vld [vmem:[%s2 + $0x1c8] sm:$0xf]
      %v2068 = vld [vmem:[%s2 + $0x1cc] sm:$0xf]
      %v2069 = vld [vmem:[%s2 + $0x1d0] sm:$0xf]
      %v2070 = vld [vmem:[%s2 + $0x1d4] sm:$0xf]
      %v2071 = vld [vmem:[%s2 + $0x1d8] sm:$0xf]
      %v2072 = vld [vmem:[%s2 + $0x1dc] sm:$0xf]
      %v2073 = vld [vmem:[%s2 + $0x1e0] sm:$0xf]
      %v2074 = vld [vmem:[%s2 + $0x1e4] sm:$0xf]
      %v2075 = vld [vmem:[%s2 + $0x1e8] sm:$0xf]
      %v2076 = vld [vmem:[%s2 + $0x1ec] sm:$0xf]
      %v2077 = vld [vmem:[%s2 + $0x1f0] sm:$0xf]
      %v2078 = vld [vmem:[%s2 + $0x1f4] sm:$0xf]
      %v2079 = vld [vmem:[%s2 + $0x1f8] sm:$0xf]
      %v2080 = vld [vmem:[%s2 + $0x1fc] sm:$0xf]
      %v2081 = vld [vmem:[%s2 + $0x200] sm:$0xf]
      %v2082 = vld [vmem:[%s2 + $0x204] sm:$0xf]
      %v2083 = vld [vmem:[%s2 + $0x208] sm:$0xf]
      %v2084 = vld [vmem:[%s2 + $0x20c] sm:$0xf]
      %v2085 = vld [vmem:[%s2 + $0x210] sm:$0xf]
      %v2086 = vld [vmem:[%s2 + $0x214] sm:$0xf]
      %v2087 = vld [vmem:[%s2 + $0x218] sm:$0xf]
      %v2088 = vld [vmem:[%s2 + $0x21c] sm:$0xf]
      %v2089 = vld [vmem:[%s2 + $0x220] sm:$0xf]
      %v2090 = vld [vmem:[%s2 + $0x224] sm:$0xf]
      %v2091 = vld [vmem:[%s2 + $0x228] sm:$0xf]
      %v2092 = vld [vmem:[%s2 + $0x22c] sm:$0xf]
      %v2093 = vld [vmem:[%s2 + $0x230] sm:$0xf]
      %v2094 = vld [vmem:[%s2 + $0x234] sm:$0xf]
      %v2095 = vld [vmem:[%s2 + $0x238] sm:$0xf]
      %v2096 = vld [vmem:[%s2 + $0x23c] sm:$0xf]
      %v2241 = vunpack.c.l.b16 %v1953
      %v2242 = vunpack.c.l.b16 %v1954
      %v2243 = vunpack.c.l.b16 %v1955
      %v2244 = vunpack.c.l.b16 %v1956
      %v2245 = vunpack.c.l.b16 %v1957
      %v2246 = vunpack.c.l.b16 %v1958
      %v2247 = vunpack.c.l.b16 %v1959
      %v2248 = vunpack.c.l.b16 %v1960
      %v2249 = vunpack.c.l.b16 %v1961
      %v2250 = vunpack.c.l.b16 %v1962
      %v2251 = vunpack.c.l.b16 %v1963
      %v2252 = vunpack.c.l.b16 %v1964
      %v2253 = vunpack.c.l.b16 %v1965
      %v2254 = vunpack.c.l.b16 %v1966
      %v2255 = vunpack.c.l.b16 %v1967
      %v2256 = vunpack.c.l.b16 %v1968
      %v2257 = vunpack.c.l.b16 %v1969
      %v2258 = vunpack.c.l.b16 %v1970
      %v2259 = vunpack.c.l.b16 %v1971
      %v2260 = vunpack.c.l.b16 %v1972
      %v2261 = vunpack.c.l.b16 %v1973
      %v2262 = vunpack.c.l.b16 %v1974
      %v2263 = vunpack.c.l.b16 %v1975
      %v2264 = vunpack.c.l.b16 %v1976
      %v2265 = vunpack.c.l.b16 %v1977
      %v2266 = vunpack.c.l.b16 %v1978
      %v2267 = vunpack.c.l.b16 %v1979
      %v2268 = vunpack.c.l.b16 %v1980
      %v2269 = vunpack.c.l.b16 %v1981
      %v2270 = vunpack.c.l.b16 %v1982
      %v2271 = vunpack.c.l.b16 %v1983
      %v2272 = vunpack.c.l.b16 %v1984
      %v2273 = vunpack.c.l.b16 %v1985
      %v2274 = vunpack.c.l.b16 %v1986
      %v2275 = vunpack.c.l.b16 %v1987
      %v2276 = vunpack.c.l.b16 %v1988
      %v2277 = vunpack.c.l.b16 %v1989
      %v2278 = vunpack.c.l.b16 %v1990
      %v2279 = vunpack.c.l.b16 %v1991
      %v2280 = vunpack.c.l.b16 %v1992
      %v2281 = vunpack.c.l.b16 %v1993
      %v2282 = vunpack.c.l.b16 %v1994
      %v2283 = vunpack.c.l.b16 %v1995
      %v2284 = vunpack.c.l.b16 %v1996
      %v2285 = vunpack.c.l.b16 %v1997
      %v2286 = vunpack.c.l.b16 %v1998
      %v2287 = vunpack.c.l.b16 %v1999
      %v2288 = vunpack.c.l.b16 %v2000
      %v2289 = vunpack.c.l.b16 %v2001
      %v2290 = vunpack.c.l.b16 %v2002
      %v2291 = vunpack.c.l.b16 %v2003
      %v2292 = vunpack.c.l.b16 %v2004
      %v2293 = vunpack.c.l.b16 %v2005
      %v2294 = vunpack.c.l.b16 %v2006
      %v2295 = vunpack.c.l.b16 %v2007
      %v2296 = vunpack.c.l.b16 %v2008
      %v2297 = vunpack.c.l.b16 %v2009
      %v2298 = vunpack.c.l.b16 %v2010
      %v2299 = vunpack.c.l.b16 %v2011
      %v2300 = vunpack.c.l.b16 %v2012
      %v2301 = vunpack.c.l.b16 %v2013
      %v2302 = vunpack.c.l.b16 %v2014
      %v2303 = vunpack.c.l.b16 %v2015
      %v2304 = vunpack.c.l.b16 %v2016
      %v2305 = vunpack.c.l.b16 %v2017
      %v2306 = vunpack.c.l.b16 %v2018
      %v2307 = vunpack.c.l.b16 %v2019
      %v2308 = vunpack.c.l.b16 %v2020
      %v2309 = vunpack.c.l.b16 %v2021
      %v2310 = vunpack.c.l.b16 %v2022
      %v2311 = vunpack.c.l.b16 %v2023
      %v2312 = vunpack.c.l.b16 %v2024
      %v2313 = vunpack.c.l.b16 %v2025
      %v2314 = vunpack.c.l.b16 %v2026
      %v2315 = vunpack.c.l.b16 %v2027
      %v2316 = vunpack.c.l.b16 %v2028
      %v2317 = vunpack.c.l.b16 %v2029
      %v2318 = vunpack.c.l.b16 %v2030
      %v2319 = vunpack.c.l.b16 %v2031
      %v2320 = vunpack.c.l.b16 %v2032
      %v2321 = vunpack.c.l.b16 %v2033
      %v2322 = vunpack.c.l.b16 %v2034
      %v2323 = vunpack.c.l.b16 %v2035
      %v2324 = vunpack.c.l.b16 %v2036
      %v2325 = vunpack.c.l.b16 %v2037
      %v2326 = vunpack.c.l.b16 %v2038
      %v2327 = vunpack.c.l.b16 %v2039
      %v2328 = vunpack.c.l.b16 %v2040
      %v2329 = vunpack.c.l.b16 %v2041
      %v2330 = vunpack.c.l.b16 %v2042
      %v2331 = vunpack.c.l.b16 %v2043
      %v2332 = vunpack.c.l.b16 %v2044
      %v2333 = vunpack.c.l.b16 %v2045
      %v2334 = vunpack.c.l.b16 %v2046
      %v2335 = vunpack.c.l.b16 %v2047
      %v2336 = vunpack.c.l.b16 %v2048
      %v2337 = vunpack.c.l.b16 %v2049
      %v2338 = vunpack.c.l.b16 %v2050
      %v2339 = vunpack.c.l.b16 %v2051
      %v2340 = vunpack.c.l.b16 %v2052
      %v2341 = vunpack.c.l.b16 %v2053
      %v2342 = vunpack.c.l.b16 %v2054
      %v2343 = vunpack.c.l.b16 %v2055
      %v2344 = vunpack.c.l.b16 %v2056
      %v2345 = vunpack.c.l.b16 %v2057
      %v2346 = vunpack.c.l.b16 %v2058
      %v2347 = vunpack.c.l.b16 %v2059
      %v2348 = vunpack.c.l.b16 %v2060
      %v2349 = vunpack.c.l.b16 %v2061
      %v2350 = vunpack.c.l.b16 %v2062
      %v2351 = vunpack.c.l.b16 %v2063
      %v2352 = vunpack.c.l.b16 %v2064
      %v2353 = vunpack.c.l.b16 %v2065
      %v2354 = vunpack.c.l.b16 %v2066
      %v2355 = vunpack.c.l.b16 %v2067
      %v2356 = vunpack.c.l.b16 %v2068
      %v2357 = vunpack.c.l.b16 %v2069
      %v2358 = vunpack.c.l.b16 %v2070
      %v2359 = vunpack.c.l.b16 %v2071
      %v2360 = vunpack.c.l.b16 %v2072
      %v2361 = vunpack.c.l.b16 %v2073
      %v2362 = vunpack.c.l.b16 %v2074
      %v2363 = vunpack.c.l.b16 %v2075
      %v2364 = vunpack.c.l.b16 %v2076
      %v2365 = vunpack.c.l.b16 %v2077
      %v2366 = vunpack.c.l.b16 %v2078
      %v2367 = vunpack.c.l.b16 %v2079
      %v2368 = vunpack.c.l.b16 %v2080
      %v2369 = vunpack.c.l.b16 %v2081
      %v2370 = vunpack.c.l.b16 %v2082
      %v2371 = vunpack.c.l.b16 %v2083
      %v2372 = vunpack.c.l.b16 %v2084
      %v2373 = vunpack.c.l.b16 %v2085
      %v2374 = vunpack.c.l.b16 %v2086
      %v2375 = vunpack.c.l.b16 %v2087
      %v2376 = vunpack.c.l.b16 %v2088
      %v2377 = vunpack.c.l.b16 %v2089
      %v2378 = vunpack.c.l.b16 %v2090
      %v2379 = vunpack.c.l.b16 %v2091
      %v2380 = vunpack.c.l.b16 %v2092
      %v2381 = vunpack.c.l.b16 %v2093
      %v2382 = vunpack.c.l.b16 %v2094
      %v2383 = vunpack.c.l.b16 %v2095
      %v2384 = vunpack.c.l.b16 %v2096
      %v2385 = vpack.c.b16 %v2242, %v2241
      %v2386 = vpack.c.b16 %v2244, %v2243
      %v2387 = vpack.c.b16 %v2246, %v2245
      %v2388 = vpack.c.b16 %v2248, %v2247
      %v2389 = vpack.c.b16 %v2250, %v2249
      %v2390 = vpack.c.b16 %v2252, %v2251
      %v2391 = vpack.c.b16 %v2254, %v2253
      %v2392 = vpack.c.b16 %v2256, %v2255
      %v2393 = vpack.c.b16 %v2258, %v2257
      %v2394 = vpack.c.b16 %v2260, %v2259
      %v2395 = vpack.c.b16 %v2262, %v2261
      %v2396 = vpack.c.b16 %v2264, %v2263
      %v2397 = vpack.c.b16 %v2266, %v2265
      %v2398 = vpack.c.b16 %v2268, %v2267
      %v2399 = vpack.c.b16 %v2270, %v2269
      %v2400 = vpack.c.b16 %v2272, %v2271
      %v2401 = vpack.c.b16 %v2274, %v2273
      %v2402 = vpack.c.b16 %v2276, %v2275
      %v2403 = vpack.c.b16 %v2278, %v2277
      %v2404 = vpack.c.b16 %v2280, %v2279
      %v2405 = vpack.c.b16 %v2282, %v2281
      %v2406 = vpack.c.b16 %v2284, %v2283
      %v2407 = vpack.c.b16 %v2286, %v2285
      %v2408 = vpack.c.b16 %v2288, %v2287
      %v2409 = vpack.c.b16 %v2290, %v2289
      %v2410 = vpack.c.b16 %v2292, %v2291
      %v2411 = vpack.c.b16 %v2294, %v2293
      %v2412 = vpack.c.b16 %v2296, %v2295
      %v2413 = vpack.c.b16 %v2298, %v2297
      %v2414 = vpack.c.b16 %v2300, %v2299
      %v2415 = vpack.c.b16 %v2302, %v2301
      %v2416 = vpack.c.b16 %v2304, %v2303
      %v2417 = vpack.c.b16 %v2306, %v2305
      %v2418 = vpack.c.b16 %v2308, %v2307
      %v2419 = vpack.c.b16 %v2310, %v2309
      %v2420 = vpack.c.b16 %v2312, %v2311
      %v2421 = vpack.c.b16 %v2314, %v2313
      %v2422 = vpack.c.b16 %v2316, %v2315
      %v2423 = vpack.c.b16 %v2318, %v2317
      %v2424 = vpack.c.b16 %v2320, %v2319
      %v2425 = vpack.c.b16 %v2322, %v2321
      %v2426 = vpack.c.b16 %v2324, %v2323
      %v2427 = vpack.c.b16 %v2326, %v2325
      %v2428 = vpack.c.b16 %v2328, %v2327
      %v2429 = vpack.c.b16 %v2330, %v2329
      %v2430 = vpack.c.b16 %v2332, %v2331
      %v2431 = vpack.c.b16 %v2334, %v2333
      %v2432 = vpack.c.b16 %v2336, %v2335
      %v2433 = vpack.c.b16 %v2338, %v2337
      %v2434 = vpack.c.b16 %v2340, %v2339
      %v2435 = vpack.c.b16 %v2342, %v2341
      %v2436 = vpack.c.b16 %v2344, %v2343
      %v2437 = vpack.c.b16 %v2346, %v2345
      %v2438 = vpack.c.b16 %v2348, %v2347
      %v2439 = vpack.c.b16 %v2350, %v2349
      %v2440 = vpack.c.b16 %v2352, %v2351
      %v2441 = vpack.c.b16 %v2354, %v2353
      %v2442 = vpack.c.b16 %v2356, %v2355
      %v2443 = vpack.c.b16 %v2358, %v2357
      %v2444 = vpack.c.b16 %v2360, %v2359
      %v2445 = vpack.c.b16 %v2362, %v2361
      %v2446 = vpack.c.b16 %v2364, %v2363
      %v2447 = vpack.c.b16 %v2366, %v2365
      %v2448 = vpack.c.b16 %v2368, %v2367
      %v2449 = vpack.c.b16 %v2370, %v2369
      %v2450 = vpack.c.b16 %v2372, %v2371
      %v2451 = vpack.c.b16 %v2374, %v2373
      %v2452 = vpack.c.b16 %v2376, %v2375
      %v2453 = vpack.c.b16 %v2378, %v2377
      %v2454 = vpack.c.b16 %v2380, %v2379
      %v2455 = vpack.c.b16 %v2382, %v2381
      %v2456 = vpack.c.b16 %v2384, %v2383
      %2529 = vmatprep.subr.bf16.mxu0 0
      %2530 = vmatpush1.bf16.msra.mxu0 %v2392
      %2531 = vmatprep.subr.bf16.mxu0 0
      %2532 = vmatpush1.bf16.msra.mxu0 %v2391
      %2533 = vmatprep.subr.bf16.mxu0 0
      %2534 = vmatpush1.bf16.msra.mxu0 %v2390
      %2535 = vmatprep.subr.bf16.mxu0 0
      %2536 = vmatpush1.bf16.msra.mxu0 %v2389
      %2537 = vmatprep.subr.bf16.mxu0 0
      %2538 = vmatpush1.bf16.msra.mxu0 %v2388
      %2539 = vmatprep.subr.bf16.mxu0 0
      %2540 = vmatpush1.bf16.msra.mxu0 %v2387
      %2541 = vmatprep.subr.bf16.mxu0 0
      %2542 = vmatpush1.bf16.msra.mxu0 %v2386
      %2543 = vmatprep.subr.bf16.mxu0 0
      %2544 = vmatpush1.bf16.msra.mxu0 %v2385
      %2545 = vmatprep.subr.bf16.mxu0 0
      %2546 = vmatpush2.bf16.msra.mxu0 %v2400
      %2547 = vmatprep.subr.bf16.mxu0 0
      %2548 = vmatpush2.bf16.msra.mxu0 %v2399
      %2549 = vmatprep.subr.bf16.mxu0 0
      %2550 = vmatpush2.bf16.msra.mxu0 %v2398
      %2551 = vmatprep.subr.bf16.mxu0 0
      %2552 = vmatpush2.bf16.msra.mxu0 %v2397
      %2553 = vmatprep.subr.bf16.mxu0 0
      %2554 = vmatpush2.bf16.msra.mxu0 %v2396
      %2555 = vmatprep.subr.bf16.mxu0 0
      %2556 = vmatpush2.bf16.msra.mxu0 %v2395
      %2557 = vmatprep.subr.bf16.mxu0 0
      %2558 = vmatpush2.bf16.msra.mxu0 %v2394
      %2559 = vmatprep.subr.bf16.mxu0 0
      %2560 = vmatpush2.bf16.msra.mxu0 %v2393
      %2561 = vmatprep.mubr.bf16.mxu0 %v1600
      %2562 = vmatmul.mubr.bf16.gmra.mxu0 %v1552
      %v2563 = vpop.f32.mrf.mxu0
      %v2564 = vadd.f32 0.0, %v2563
      %v2565 = vpop.f32.mrf.mxu0
      %v2566 = vpop.f32.mrf.mxu0
      %v2567 = vadd.f32 0.0, %v2566
      %v2568 = vpop.f32.mrf.mxu0
      %2569 = vmatprep.mubr.bf16.mxu0 %v1601
      %2570 = vmatmul.mubr.bf16.gmra.mxu0 %v1553
      %v2571 = vpop.f32.mrf.mxu0
      %v2572 = vadd.f32 0.0, %v2571
      %v2573 = vpop.f32.mrf.mxu0
      %v2574 = vpop.f32.mrf.mxu0
      %v2575 = vadd.f32 0.0, %v2574
      %v2576 = vpop.f32.mrf.mxu0
      %2577 = vmatprep.mubr.bf16.mxu0 %v1602
      %2578 = vmatmul.mubr.bf16.gmra.mxu0 %v1554
      %v2579 = vpop.f32.mrf.mxu0
      %v2580 = vadd.f32 0.0, %v2579
      %v2581 = vpop.f32.mrf.mxu0
      %v2582 = vpop.f32.mrf.mxu0
      %v2583 = vadd.f32 0.0, %v2582
      %v2584 = vpop.f32.mrf.mxu0
      %2585 = vmatprep.mubr.bf16.mxu0 %v1603
      %2586 = vmatmul.mubr.bf16.gmra.mxu0 %v1555
      %v2587 = vpop.f32.mrf.mxu0
      %v2588 = vadd.f32 0.0, %v2587
      %v2589 = vpop.f32.mrf.mxu0
      %v2590 = vpop.f32.mrf.mxu0
      %v2591 = vadd.f32 0.0, %v2590
      %v2592 = vpop.f32.mrf.mxu0
      %2593 = vmatprep.mubr.bf16.mxu0 %v1604
      %2594 = vmatmul.mubr.bf16.gmra.mxu0 %v1556
      %v2595 = vpop.f32.mrf.mxu0
      %v2596 = vadd.f32 0.0, %v2595
      %v2597 = vpop.f32.mrf.mxu0
      %v2598 = vpop.f32.mrf.mxu0
      %v2599 = vadd.f32 0.0, %v2598
      %v2600 = vpop.f32.mrf.mxu0
      %2601 = vmatprep.mubr.bf16.mxu0 %v1605
      %2602 = vmatmul.mubr.bf16.gmra.mxu0 %v1557
      %v2603 = vpop.f32.mrf.mxu0
      %v2604 = vadd.f32 0.0, %v2603
      %v2605 = vpop.f32.mrf.mxu0
      %v2606 = vpop.f32.mrf.mxu0
      %v2607 = vadd.f32 0.0, %v2606
      %v2608 = vpop.f32.mrf.mxu0
      %2609 = vmatprep.mubr.bf16.mxu0 %v1606
      %2610 = vmatmul.mubr.bf16.gmra.mxu0 %v1558
      %v2611 = vpop.f32.mrf.mxu0
      %v2612 = vadd.f32 0.0, %v2611
      %v2613 = vpop.f32.mrf.mxu0
      %v2614 = vpop.f32.mrf.mxu0
      %v2615 = vadd.f32 0.0, %v2614
      %v2616 = vpop.f32.mrf.mxu0
      %2617 = vmatprep.mubr.bf16.mxu0 %v1607
      %2618 = vmatmul.mubr.bf16.gmra.mxu0 %v1559
      %v2619 = vpop.f32.mrf.mxu0
      %v2620 = vadd.f32 0.0, %v2619
      %v2621 = vpop.f32.mrf.mxu0
      %v2622 = vpop.f32.mrf.mxu0
      %v2623 = vadd.f32 0.0, %v2622
      %v2624 = vpop.f32.mrf.mxu0
      %2625 = vmatprep.mubr.bf16.mxu0 %v1608
      %2626 = vmatmul.mubr.bf16.gmra.mxu0 %v1560
      %v2627 = vpop.f32.mrf.mxu0
      %v2628 = vadd.f32 0.0, %v2627
      %v2629 = vpop.f32.mrf.mxu0
      %v2630 = vpop.f32.mrf.mxu0
      %v2631 = vadd.f32 0.0, %v2630
      %v2632 = vpop.f32.mrf.mxu0
      %2633 = vmatprep.mubr.bf16.mxu0 %v1609
      %2634 = vmatmul.mubr.bf16.gmra.mxu0 %v1561
      %v2635 = vpop.f32.mrf.mxu0
      %v2636 = vadd.f32 0.0, %v2635
      %v2637 = vpop.f32.mrf.mxu0
      %v2638 = vpop.f32.mrf.mxu0
      %v2639 = vadd.f32 0.0, %v2638
      %v2640 = vpop.f32.mrf.mxu0
      %2641 = vmatprep.mubr.bf16.mxu0 %v1610
      %2642 = vmatmul.mubr.bf16.gmra.mxu0 %v1562
      %v2643 = vpop.f32.mrf.mxu0
      %v2644 = vadd.f32 0.0, %v2643
      %v2645 = vpop.f32.mrf.mxu0
      %v2646 = vpop.f32.mrf.mxu0
      %v2647 = vadd.f32 0.0, %v2646
      %v2648 = vpop.f32.mrf.mxu0
      %2649 = vmatprep.mubr.bf16.mxu0 %v1611
      %2650 = vmatmul.mubr.bf16.gmra.mxu0 %v1563
      %v2651 = vpop.f32.mrf.mxu0
      %v2652 = vadd.f32 0.0, %v2651
      %v2653 = vpop.f32.mrf.mxu0
      %v2654 = vpop.f32.mrf.mxu0
      %v2655 = vadd.f32 0.0, %v2654
      %v2656 = vpop.f32.mrf.mxu0
      %2657 = vmatprep.mubr.bf16.mxu0 %v1612
      %2658 = vmatmul.mubr.bf16.gmra.mxu0 %v1564
      %v2659 = vpop.f32.mrf.mxu0
      %v2660 = vadd.f32 0.0, %v2659
      %v2661 = vpop.f32.mrf.mxu0
      %v2662 = vpop.f32.mrf.mxu0
      %v2663 = vadd.f32 0.0, %v2662
      %v2664 = vpop.f32.mrf.mxu0
      %2665 = vmatprep.mubr.bf16.mxu0 %v1613
      %2666 = vmatmul.mubr.bf16.gmra.mxu0 %v1565
      %v2667 = vpop.f32.mrf.mxu0
      %v2668 = vadd.f32 0.0, %v2667
      %v2669 = vpop.f32.mrf.mxu0
      %v2670 = vpop.f32.mrf.mxu0
      %v2671 = vadd.f32 0.0, %v2670
      %v2672 = vpop.f32.mrf.mxu0
      %2673 = vmatprep.mubr.bf16.mxu0 %v1614
      %2674 = vmatmul.mubr.bf16.gmra.mxu0 %v1566
      %v2675 = vpop.f32.mrf.mxu0
      %v2676 = vadd.f32 0.0, %v2675
      %v2677 = vpop.f32.mrf.mxu0
      %v2678 = vpop.f32.mrf.mxu0
      %v2679 = vadd.f32 0.0, %v2678
      %v2680 = vpop.f32.mrf.mxu0
      %2681 = vmatprep.mubr.bf16.mxu0 %v1615
      %2682 = vmatmul.mubr.bf16.gmra.mxu0 %v1567
      %v2683 = vpop.f32.mrf.mxu0
      %v2684 = vadd.f32 0.0, %v2683
      %v2685 = vpop.f32.mrf.mxu0
      %v2686 = vpop.f32.mrf.mxu0
      %v2687 = vadd.f32 0.0, %v2686
      %v2688 = vpop.f32.mrf.mxu0
      %2689 = vdwg.mxu0
      %2690 = vmatprep.subr.bf16.mxu0 0
      %2691 = vmatpush1.bf16.msra.mxu0 %v2408
      %2692 = vmatprep.subr.bf16.mxu0 0
      %2693 = vmatpush1.bf16.msra.mxu0 %v2407
      %2694 = vmatprep.subr.bf16.mxu0 0
      %2695 = vmatpush1.bf16.msra.mxu0 %v2406
      %2696 = vmatprep.subr.bf16.mxu0 0
      %2697 = vmatpush1.bf16.msra.mxu0 %v2405
      %2698 = vmatprep.subr.bf16.mxu0 0
      %2699 = vmatpush1.bf16.msra.mxu0 %v2404
      %2700 = vmatprep.subr.bf16.mxu0 0
      %2701 = vmatpush1.bf16.msra.mxu0 %v2403
      %2702 = vmatprep.subr.bf16.mxu0 0
      %2703 = vmatpush1.bf16.msra.mxu0 %v2402
      %2704 = vmatprep.subr.bf16.mxu0 0
      %2705 = vmatpush1.bf16.msra.mxu0 %v2401
      %2706 = vmatprep.subr.bf16.mxu0 0
      %2707 = vmatpush2.bf16.msra.mxu0 %v2416
      %2708 = vmatprep.subr.bf16.mxu0 0
      %2709 = vmatpush2.bf16.msra.mxu0 %v2415
      %2710 = vmatprep.subr.bf16.mxu0 0
      %2711 = vmatpush2.bf16.msra.mxu0 %v2414
      %2712 = vmatprep.subr.bf16.mxu0 0
      %2713 = vmatpush2.bf16.msra.mxu0 %v2413
      %2714 = vmatprep.subr.bf16.mxu0 0
      %2715 = vmatpush2.bf16.msra.mxu0 %v2412
      %2716 = vmatprep.subr.bf16.mxu0 0
      %2717 = vmatpush2.bf16.msra.mxu0 %v2411
      %2718 = vmatprep.subr.bf16.mxu0 0
      %2719 = vmatpush2.bf16.msra.mxu0 %v2410
      %2720 = vmatprep.subr.bf16.mxu0 0
      %2721 = vmatpush2.bf16.msra.mxu0 %v2409
      %2722 = vmatprep.mubr.bf16.mxu0 %v1696
      %2723 = vmatmul.mubr.bf16.gmra.mxu0 %v1648
      %v2724 = vpop.f32.mrf.mxu0
      %v2725 = vadd.f32 %v2564, %v2724
      %v2726 = vpop.f32.mrf.mxu0
      %v2727 = vpop.f32.mrf.mxu0
      %v2728 = vadd.f32 %v2567, %v2727
      %v2729 = vpop.f32.mrf.mxu0
      %2730 = vmatprep.mubr.bf16.mxu0 %v1697
      %2731 = vmatmul.mubr.bf16.gmra.mxu0 %v1649
      %v2732 = vpop.f32.mrf.mxu0
      %v2733 = vadd.f32 %v2572, %v2732
      %v2734 = vpop.f32.mrf.mxu0
      %v2735 = vpop.f32.mrf.mxu0
      %v2736 = vadd.f32 %v2575, %v2735
      %v2737 = vpop.f32.mrf.mxu0
      %2738 = vmatprep.mubr.bf16.mxu0 %v1698
      %2739 = vmatmul.mubr.bf16.gmra.mxu0 %v1650
      %v2740 = vpop.f32.mrf.mxu0
      %v2741 = vadd.f32 %v2580, %v2740
      %v2742 = vpop.f32.mrf.mxu0
      %v2743 = vpop.f32.mrf.mxu0
      %v2744 = vadd.f32 %v2583, %v2743
      %v2745 = vpop.f32.mrf.mxu0
      %2746 = vmatprep.mubr.bf16.mxu0 %v1699
      %2747 = vmatmul.mubr.bf16.gmra.mxu0 %v1651
      %v2748 = vpop.f32.mrf.mxu0
      %v2749 = vadd.f32 %v2588, %v2748
      %v2750 = vpop.f32.mrf.mxu0
      %v2751 = vpop.f32.mrf.mxu0
      %v2752 = vadd.f32 %v2591, %v2751
      %v2753 = vpop.f32.mrf.mxu0
      %2754 = vmatprep.mubr.bf16.mxu0 %v1700
      %2755 = vmatmul.mubr.bf16.gmra.mxu0 %v1652
      %v2756 = vpop.f32.mrf.mxu0
      %v2757 = vadd.f32 %v2596, %v2756
      %v2758 = vpop.f32.mrf.mxu0
      %v2759 = vpop.f32.mrf.mxu0
      %v2760 = vadd.f32 %v2599, %v2759
      %v2761 = vpop.f32.mrf.mxu0
      %2762 = vmatprep.mubr.bf16.mxu0 %v1701
      %2763 = vmatmul.mubr.bf16.gmra.mxu0 %v1653
      %v2764 = vpop.f32.mrf.mxu0
      %v2765 = vadd.f32 %v2604, %v2764
      %v2766 = vpop.f32.mrf.mxu0
      %v2767 = vpop.f32.mrf.mxu0
      %v2768 = vadd.f32 %v2607, %v2767
      %v2769 = vpop.f32.mrf.mxu0
      %2770 = vmatprep.mubr.bf16.mxu0 %v1702
      %2771 = vmatmul.mubr.bf16.gmra.mxu0 %v1654
      %v2772 = vpop.f32.mrf.mxu0
      %v2773 = vadd.f32 %v2612, %v2772
      %v2774 = vpop.f32.mrf.mxu0
      %v2775 = vpop.f32.mrf.mxu0
      %v2776 = vadd.f32 %v2615, %v2775
      %v2777 = vpop.f32.mrf.mxu0
      %2778 = vmatprep.mubr.bf16.mxu0 %v1703
      %2779 = vmatmul.mubr.bf16.gmra.mxu0 %v1655
      %v2780 = vpop.f32.mrf.mxu0
      %v2781 = vadd.f32 %v2620, %v2780
      %v2782 = vpop.f32.mrf.mxu0
      %v2783 = vpop.f32.mrf.mxu0
      %v2784 = vadd.f32 %v2623, %v2783
      %v2785 = vpop.f32.mrf.mxu0
      %2786 = vmatprep.mubr.bf16.mxu0 %v1704
      %2787 = vmatmul.mubr.bf16.gmra.mxu0 %v1656
      %v2788 = vpop.f32.mrf.mxu0
      %v2789 = vadd.f32 %v2628, %v2788
      %v2790 = vpop.f32.mrf.mxu0
      %v2791 = vpop.f32.mrf.mxu0
      %v2792 = vadd.f32 %v2631, %v2791
      %v2793 = vpop.f32.mrf.mxu0
      %2794 = vmatprep.mubr.bf16.mxu0 %v1705
      %2795 = vmatmul.mubr.bf16.gmra.mxu0 %v1657
      %v2796 = vpop.f32.mrf.mxu0
      %v2797 = vadd.f32 %v2636, %v2796
      %v2798 = vpop.f32.mrf.mxu0
      %v2799 = vpop.f32.mrf.mxu0
      %v2800 = vadd.f32 %v2639, %v2799
      %v2801 = vpop.f32.mrf.mxu0
      %2802 = vmatprep.mubr.bf16.mxu0 %v1706
      %2803 = vmatmul.mubr.bf16.gmra.mxu0 %v1658
      %v2804 = vpop.f32.mrf.mxu0
      %v2805 = vadd.f32 %v2644, %v2804
      %v2806 = vpop.f32.mrf.mxu0
      %v2807 = vpop.f32.mrf.mxu0
      %v2808 = vadd.f32 %v2647, %v2807
      %v2809 = vpop.f32.mrf.mxu0
      %2810 = vmatprep.mubr.bf16.mxu0 %v1707
      %2811 = vmatmul.mubr.bf16.gmra.mxu0 %v1659
      %v2812 = vpop.f32.mrf.mxu0
      %v2813 = vadd.f32 %v2652, %v2812
      %v2814 = vpop.f32.mrf.mxu0
      %v2815 = vpop.f32.mrf.mxu0
      %v2816 = vadd.f32 %v2655, %v2815
      %v2817 = vpop.f32.mrf.mxu0
      %2818 = vmatprep.mubr.bf16.mxu0 %v1708
      %2819 = vmatmul.mubr.bf16.gmra.mxu0 %v1660
      %v2820 = vpop.f32.mrf.mxu0
      %v2821 = vadd.f32 %v2660, %v2820
      %v2822 = vpop.f32.mrf.mxu0
      %v2823 = vpop.f32.mrf.mxu0
      %v2824 = vadd.f32 %v2663, %v2823
      %v2825 = vpop.f32.mrf.mxu0
      %2826 = vmatprep.mubr.bf16.mxu0 %v1709
      %2827 = vmatmul.mubr.bf16.gmra.mxu0 %v1661
      %v2828 = vpop.f32.mrf.mxu0
      %v2829 = vadd.f32 %v2668, %v2828
      %v2830 = vpop.f32.mrf.mxu0
      %v2831 = vpop.f32.mrf.mxu0
      %v2832 = vadd.f32 %v2671, %v2831
      %v2833 = vpop.f32.mrf.mxu0
      %2834 = vmatprep.mubr.bf16.mxu0 %v1710
      %2835 = vmatmul.mubr.bf16.gmra.mxu0 %v1662
      %v2836 = vpop.f32.mrf.mxu0
      %v2837 = vadd.f32 %v2676, %v2836
      %v2838 = vpop.f32.mrf.mxu0
      %v2839 = vpop.f32.mrf.mxu0
      %v2840 = vadd.f32 %v2679, %v2839
      %v2841 = vpop.f32.mrf.mxu0
      %2842 = vmatprep.mubr.bf16.mxu0 %v1711
      %2843 = vmatmul.mubr.bf16.gmra.mxu0 %v1663
      %v2844 = vpop.f32.mrf.mxu0
      %v2845 = vadd.f32 %v2684, %v2844
      %v2846 = vpop.f32.mrf.mxu0
      %v2847 = vpop.f32.mrf.mxu0
      %v2848 = vadd.f32 %v2687, %v2847
      %v2849 = vpop.f32.mrf.mxu0
      %2850 = vdwg.mxu0
      %2851 = vmatprep.subr.bf16.mxu0 0
      %2852 = vmatpush1.bf16.msra.mxu0 %v2424
      %2853 = vmatprep.subr.bf16.mxu0 0
      %2854 = vmatpush1.bf16.msra.mxu0 %v2423
      %2855 = vmatprep.subr.bf16.mxu0 0
      %2856 = vmatpush1.bf16.msra.mxu0 %v2422
      %2857 = vmatprep.subr.bf16.mxu0 0
      %2858 = vmatpush1.bf16.msra.mxu0 %v2421
      %2859 = vmatprep.subr.bf16.mxu0 0
      %2860 = vmatpush1.bf16.msra.mxu0 %v2420
      %2861 = vmatprep.subr.bf16.mxu0 0
      %2862 = vmatpush1.bf16.msra.mxu0 %v2419
      %2863 = vmatprep.subr.bf16.mxu0 0
      %2864 = vmatpush1.bf16.msra.mxu0 %v2418
      %2865 = vmatprep.subr.bf16.mxu0 0
      %2866 = vmatpush1.bf16.msra.mxu0 %v2417
      %2867 = vmatprep.subr.bf16.mxu0 0
      %2868 = vmatpush2.bf16.msra.mxu0 %v2432
      %2869 = vmatprep.subr.bf16.mxu0 0
      %2870 = vmatpush2.bf16.msra.mxu0 %v2431
      %2871 = vmatprep.subr.bf16.mxu0 0
      %2872 = vmatpush2.bf16.msra.mxu0 %v2430
      %2873 = vmatprep.subr.bf16.mxu0 0
      %2874 = vmatpush2.bf16.msra.mxu0 %v2429
      %2875 = vmatprep.subr.bf16.mxu0 0
      %2876 = vmatpush2.bf16.msra.mxu0 %v2428
      %2877 = vmatprep.subr.bf16.mxu0 0
      %2878 = vmatpush2.bf16.msra.mxu0 %v2427
      %2879 = vmatprep.subr.bf16.mxu0 0
      %2880 = vmatpush2.bf16.msra.mxu0 %v2426
      %2881 = vmatprep.subr.bf16.mxu0 0
      %2882 = vmatpush2.bf16.msra.mxu0 %v2425
      %2883 = vmatprep.mubr.bf16.mxu0 %v1792
      %2884 = vmatmul.mubr.bf16.gmra.mxu0 %v1744
      %v2885 = vpop.f32.mrf.mxu0
      %v2886 = vadd.f32 %v2725, %v2885
      %v2887 = vpop.f32.mrf.mxu0
      %v2888 = vpop.f32.mrf.mxu0
      %v2889 = vadd.f32 %v2728, %v2888
      %v2890 = vpop.f32.mrf.mxu0
      %2891 = vmatprep.mubr.bf16.mxu0 %v1793
      %2892 = vmatmul.mubr.bf16.gmra.mxu0 %v1745
      %v2893 = vpop.f32.mrf.mxu0
      %v2894 = vadd.f32 %v2733, %v2893
      %v2895 = vpop.f32.mrf.mxu0
      %v2896 = vpop.f32.mrf.mxu0
      %v2897 = vadd.f32 %v2736, %v2896
      %v2898 = vpop.f32.mrf.mxu0
      %2899 = vmatprep.mubr.bf16.mxu0 %v1794
      %2900 = vmatmul.mubr.bf16.gmra.mxu0 %v1746
      %v2901 = vpop.f32.mrf.mxu0
      %v2902 = vadd.f32 %v2741, %v2901
      %v2903 = vpop.f32.mrf.mxu0
      %v2904 = vpop.f32.mrf.mxu0
      %v2905 = vadd.f32 %v2744, %v2904
      %v2906 = vpop.f32.mrf.mxu0
      %2907 = vmatprep.mubr.bf16.mxu0 %v1795
      %2908 = vmatmul.mubr.bf16.gmra.mxu0 %v1747
      %v2909 = vpop.f32.mrf.mxu0
      %v2910 = vadd.f32 %v2749, %v2909
      %v2911 = vpop.f32.mrf.mxu0
      %v2912 = vpop.f32.mrf.mxu0
      %v2913 = vadd.f32 %v2752, %v2912
      %v2914 = vpop.f32.mrf.mxu0
      %2915 = vmatprep.mubr.bf16.mxu0 %v1796
      %2916 = vmatmul.mubr.bf16.gmra.mxu0 %v1748
      %v2917 = vpop.f32.mrf.mxu0
      %v2918 = vadd.f32 %v2757, %v2917
      %v2919 = vpop.f32.mrf.mxu0
      %v2920 = vpop.f32.mrf.mxu0
      %v2921 = vadd.f32 %v2760, %v2920
      %v2922 = vpop.f32.mrf.mxu0
      %2923 = vmatprep.mubr.bf16.mxu0 %v1797
      %2924 = vmatmul.mubr.bf16.gmra.mxu0 %v1749
      %v2925 = vpop.f32.mrf.mxu0
      %v2926 = vadd.f32 %v2765, %v2925
      %v2927 = vpop.f32.mrf.mxu0
      %v2928 = vpop.f32.mrf.mxu0
      %v2929 = vadd.f32 %v2768, %v2928
      %v2930 = vpop.f32.mrf.mxu0
      %2931 = vmatprep.mubr.bf16.mxu0 %v1798
      %2932 = vmatmul.mubr.bf16.gmra.mxu0 %v1750
      %v2933 = vpop.f32.mrf.mxu0
      %v2934 = vadd.f32 %v2773, %v2933
      %v2935 = vpop.f32.mrf.mxu0
      %v2936 = vpop.f32.mrf.mxu0
      %v2937 = vadd.f32 %v2776, %v2936
      %v2938 = vpop.f32.mrf.mxu0
      %2939 = vmatprep.mubr.bf16.mxu0 %v1799
      %2940 = vmatmul.mubr.bf16.gmra.mxu0 %v1751
      %v2941 = vpop.f32.mrf.mxu0
      %v2942 = vadd.f32 %v2781, %v2941
      %v2943 = vpop.f32.mrf.mxu0
      %v2944 = vpop.f32.mrf.mxu0
      %v2945 = vadd.f32 %v2784, %v2944
      %v2946 = vpop.f32.mrf.mxu0
      %2947 = vmatprep.mubr.bf16.mxu0 %v1800
      %2948 = vmatmul.mubr.bf16.gmra.mxu0 %v1752
      %v2949 = vpop.f32.mrf.mxu0
      %v2950 = vadd.f32 %v2789, %v2949
      %v2951 = vpop.f32.mrf.mxu0
      %v2952 = vpop.f32.mrf.mxu0
      %v2953 = vadd.f32 %v2792, %v2952
      %v2954 = vpop.f32.mrf.mxu0
      %2955 = vmatprep.mubr.bf16.mxu0 %v1801
      %2956 = vmatmul.mubr.bf16.gmra.mxu0 %v1753
      %v2957 = vpop.f32.mrf.mxu0
      %v2958 = vadd.f32 %v2797, %v2957
      %v2959 = vpop.f32.mrf.mxu0
      %v2960 = vpop.f32.mrf.mxu0
      %v2961 = vadd.f32 %v2800, %v2960
      %v2962 = vpop.f32.mrf.mxu0
      %2963 = vmatprep.mubr.bf16.mxu0 %v1802
      %2964 = vmatmul.mubr.bf16.gmra.mxu0 %v1754
      %v2965 = vpop.f32.mrf.mxu0
      %v2966 = vadd.f32 %v2805, %v2965
      %v2967 = vpop.f32.mrf.mxu0
      %v2968 = vpop.f32.mrf.mxu0
      %v2969 = vadd.f32 %v2808, %v2968
      %v2970 = vpop.f32.mrf.mxu0
      %2971 = vmatprep.mubr.bf16.mxu0 %v1803
      %2972 = vmatmul.mubr.bf16.gmra.mxu0 %v1755
      %v2973 = vpop.f32.mrf.mxu0
      %v2974 = vadd.f32 %v2813, %v2973
      %v2975 = vpop.f32.mrf.mxu0
      %v2976 = vpop.f32.mrf.mxu0
      %v2977 = vadd.f32 %v2816, %v2976
      %v2978 = vpop.f32.mrf.mxu0
      %2979 = vmatprep.mubr.bf16.mxu0 %v1804
      %2980 = vmatmul.mubr.bf16.gmra.mxu0 %v1756
      %v2981 = vpop.f32.mrf.mxu0
      %v2982 = vadd.f32 %v2821, %v2981
      %v2983 = vpop.f32.mrf.mxu0
      %v2984 = vpop.f32.mrf.mxu0
      %v2985 = vadd.f32 %v2824, %v2984
      %v2986 = vpop.f32.mrf.mxu0
      %2987 = vmatprep.mubr.bf16.mxu0 %v1805
      %2988 = vmatmul.mubr.bf16.gmra.mxu0 %v1757
      %v2989 = vpop.f32.mrf.mxu0
      %v2990 = vadd.f32 %v2829, %v2989
      %v2991 = vpop.f32.mrf.mxu0
      %v2992 = vpop.f32.mrf.mxu0
      %v2993 = vadd.f32 %v2832, %v2992
      %v2994 = vpop.f32.mrf.mxu0
      %2995 = vmatprep.mubr.bf16.mxu0 %v1806
      %2996 = vmatmul.mubr.bf16.gmra.mxu0 %v1758
      %v2997 = vpop.f32.mrf.mxu0
      %v2998 = vadd.f32 %v2837, %v2997
      %v2999 = vpop.f32.mrf.mxu0
      %v3000 = vpop.f32.mrf.mxu0
      %v3001 = vadd.f32 %v2840, %v3000
      %v3002 = vpop.f32.mrf.mxu0
      %3003 = vmatprep.mubr.bf16.mxu0 %v1807
      %3004 = vmatmul.mubr.bf16.gmra.mxu0 %v1759
      %v3005 = vpop.f32.mrf.mxu0
      %v3006 = vadd.f32 %v2845, %v3005
      %v3007 = vpop.f32.mrf.mxu0
      %v3008 = vpop.f32.mrf.mxu0
      %v3009 = vadd.f32 %v2848, %v3008
      %v3010 = vpop.f32.mrf.mxu0
      %3011 = vdwg.mxu0
      %3012 = vmatprep.subr.bf16.mxu0 0
      %3013 = vmatpush1.bf16.msra.mxu0 %v2440
      %3014 = vmatprep.subr.bf16.mxu0 0
      %3015 = vmatpush1.bf16.msra.mxu0 %v2439
      %3016 = vmatprep.subr.bf16.mxu0 0
      %3017 = vmatpush1.bf16.msra.mxu0 %v2438
      %3018 = vmatprep.subr.bf16.mxu0 0
      %3019 = vmatpush1.bf16.msra.mxu0 %v2437
      %3020 = vmatprep.subr.bf16.mxu0 0
      %3021 = vmatpush1.bf16.msra.mxu0 %v2436
      %3022 = vmatprep.subr.bf16.mxu0 0
      %3023 = vmatpush1.bf16.msra.mxu0 %v2435
      %3024 = vmatprep.subr.bf16.mxu0 0
      %3025 = vmatpush1.bf16.msra.mxu0 %v2434
      %3026 = vmatprep.subr.bf16.mxu0 0
      %3027 = vmatpush1.bf16.msra.mxu0 %v2433
      %3028 = vmatprep.subr.bf16.mxu0 0
      %3029 = vmatpush2.bf16.msra.mxu0 %v2448
      %3030 = vmatprep.subr.bf16.mxu0 0
      %3031 = vmatpush2.bf16.msra.mxu0 %v2447
      %3032 = vmatprep.subr.bf16.mxu0 0
      %3033 = vmatpush2.bf16.msra.mxu0 %v2446
      %3034 = vmatprep.subr.bf16.mxu0 0
      %3035 = vmatpush2.bf16.msra.mxu0 %v2445
      %3036 = vmatprep.subr.bf16.mxu0 0
      %3037 = vmatpush2.bf16.msra.mxu0 %v2444
      %3038 = vmatprep.subr.bf16.mxu0 0
      %3039 = vmatpush2.bf16.msra.mxu0 %v2443
      %3040 = vmatprep.subr.bf16.mxu0 0
      %3041 = vmatpush2.bf16.msra.mxu0 %v2442
      %3042 = vmatprep.subr.bf16.mxu0 0
      %3043 = vmatpush2.bf16.msra.mxu0 %v2441
      %3044 = vmatprep.mubr.bf16.mxu0 %v1889
      %3045 = vmatmul.mubr.bf16.gmra.mxu0 %v1841
      %v3046 = vpop.f32.mrf.mxu0
      %v3047 = vadd.f32 %v2886, %v3046
      %v3048 = vpop.f32.mrf.mxu0
      %v3049 = vpop.f32.mrf.mxu0
      %v3050 = vadd.f32 %v2889, %v3049
      %v3051 = vpop.f32.mrf.mxu0
      %3052 = vmatprep.mubr.bf16.mxu0 %v1890
      %3053 = vmatmul.mubr.bf16.gmra.mxu0 %v1842
      %v3054 = vpop.f32.mrf.mxu0
      %v3055 = vadd.f32 %v2894, %v3054
      %v3056 = vpop.f32.mrf.mxu0
      %v3057 = vpop.f32.mrf.mxu0
      %v3058 = vadd.f32 %v2897, %v3057
      %v3059 = vpop.f32.mrf.mxu0
      %3060 = vmatprep.mubr.bf16.mxu0 %v1891
      %3061 = vmatmul.mubr.bf16.gmra.mxu0 %v1843
      %v3062 = vpop.f32.mrf.mxu0
      %v3063 = vadd.f32 %v2902, %v3062
      %v3064 = vpop.f32.mrf.mxu0
      %v3065 = vpop.f32.mrf.mxu0
      %v3066 = vadd.f32 %v2905, %v3065
      %v3067 = vpop.f32.mrf.mxu0
      %3068 = vmatprep.mubr.bf16.mxu0 %v1892
      %3069 = vmatmul.mubr.bf16.gmra.mxu0 %v1844
      %v3070 = vpop.f32.mrf.mxu0
      %v3071 = vadd.f32 %v2910, %v3070
      %v3072 = vpop.f32.mrf.mxu0
      %v3073 = vpop.f32.mrf.mxu0
      %v3074 = vadd.f32 %v2913, %v3073
      %v3075 = vpop.f32.mrf.mxu0
      %3076 = vmatprep.mubr.bf16.mxu0 %v1893
      %3077 = vmatmul.mubr.bf16.gmra.mxu0 %v1845
      %v3078 = vpop.f32.mrf.mxu0
      %v3079 = vadd.f32 %v2918, %v3078
      %v3080 = vpop.f32.mrf.mxu0
      %v3081 = vpop.f32.mrf.mxu0
      %v3082 = vadd.f32 %v2921, %v3081
      %v3083 = vpop.f32.mrf.mxu0
      %3084 = vmatprep.mubr.bf16.mxu0 %v1894
      %3085 = vmatmul.mubr.bf16.gmra.mxu0 %v1846
      %v3086 = vpop.f32.mrf.mxu0
      %v3087 = vadd.f32 %v2926, %v3086
      %v3088 = vpop.f32.mrf.mxu0
      %v3089 = vpop.f32.mrf.mxu0
      %v3090 = vadd.f32 %v2929, %v3089
      %v3091 = vpop.f32.mrf.mxu0
      %3092 = vmatprep.mubr.bf16.mxu0 %v1895
      %3093 = vmatmul.mubr.bf16.gmra.mxu0 %v1847
      %v3094 = vpop.f32.mrf.mxu0
      %v3095 = vadd.f32 %v2934, %v3094
      %v3096 = vpop.f32.mrf.mxu0
      %v3097 = vpop.f32.mrf.mxu0
      %v3098 = vadd.f32 %v2937, %v3097
      %v3099 = vpop.f32.mrf.mxu0
      %3100 = vmatprep.mubr.bf16.mxu0 %v1896
      %3101 = vmatmul.mubr.bf16.gmra.mxu0 %v1848
      %v3102 = vpop.f32.mrf.mxu0
      %v3103 = vadd.f32 %v2942, %v3102
      %v3104 = vpop.f32.mrf.mxu0
      %v3105 = vpop.f32.mrf.mxu0
      %v3106 = vadd.f32 %v2945, %v3105
      %v3107 = vpop.f32.mrf.mxu0
      %3108 = vmatprep.mubr.bf16.mxu0 %v1897
      %3109 = vmatmul.mubr.bf16.gmra.mxu0 %v1849
      %v3110 = vpop.f32.mrf.mxu0
      %v3111 = vadd.f32 %v2950, %v3110
      %v3112 = vpop.f32.mrf.mxu0
      %v3113 = vpop.f32.mrf.mxu0
      %v3114 = vadd.f32 %v2953, %v3113
      %v3115 = vpop.f32.mrf.mxu0
      %3116 = vmatprep.mubr.bf16.mxu0 %v1898
      %3117 = vmatmul.mubr.bf16.gmra.mxu0 %v1850
      %v3118 = vpop.f32.mrf.mxu0
      %v3119 = vadd.f32 %v2958, %v3118
      %v3120 = vpop.f32.mrf.mxu0
      %v3121 = vpop.f32.mrf.mxu0
      %v3122 = vadd.f32 %v2961, %v3121
      %v3123 = vpop.f32.mrf.mxu0
      %3124 = vmatprep.mubr.bf16.mxu0 %v1899
      %3125 = vmatmul.mubr.bf16.gmra.mxu0 %v1851
      %v3126 = vpop.f32.mrf.mxu0
      %v3127 = vadd.f32 %v2966, %v3126
      %v3128 = vpop.f32.mrf.mxu0
      %v3129 = vpop.f32.mrf.mxu0
      %v3130 = vadd.f32 %v2969, %v3129
      %v3131 = vpop.f32.mrf.mxu0
      %3132 = vmatprep.mubr.bf16.mxu0 %v1900
      %3133 = vmatmul.mubr.bf16.gmra.mxu0 %v1852
      %v3134 = vpop.f32.mrf.mxu0
      %v3135 = vadd.f32 %v2974, %v3134
      %v3136 = vpop.f32.mrf.mxu0
      %v3137 = vpop.f32.mrf.mxu0
      %v3138 = vadd.f32 %v2977, %v3137
      %v3139 = vpop.f32.mrf.mxu0
      %3140 = vmatprep.mubr.bf16.mxu0 %v1901
      %3141 = vmatmul.mubr.bf16.gmra.mxu0 %v1853
      %v3142 = vpop.f32.mrf.mxu0
      %v3143 = vadd.f32 %v2982, %v3142
      %v3144 = vpop.f32.mrf.mxu0
      %v3145 = vpop.f32.mrf.mxu0
      %v3146 = vadd.f32 %v2985, %v3145
      %v3147 = vpop.f32.mrf.mxu0
      %3148 = vmatprep.mubr.bf16.mxu0 %v1902
      %3149 = vmatmul.mubr.bf16.gmra.mxu0 %v1854
      %v3150 = vpop.f32.mrf.mxu0
      %v3151 = vadd.f32 %v2990, %v3150
      %v3152 = vpop.f32.mrf.mxu0
      %v3153 = vpop.f32.mrf.mxu0
      %v3154 = vadd.f32 %v2993, %v3153
      %v3155 = vpop.f32.mrf.mxu0
      %3156 = vmatprep.mubr.bf16.mxu0 %v1903
      %3157 = vmatmul.mubr.bf16.gmra.mxu0 %v1855
      %v3158 = vpop.f32.mrf.mxu0
      %v3159 = vadd.f32 %v2998, %v3158
      %v3160 = vpop.f32.mrf.mxu0
      %v3161 = vpop.f32.mrf.mxu0
      %v3162 = vadd.f32 %v3001, %v3161
      %v3163 = vpop.f32.mrf.mxu0
      %3164 = vmatprep.mubr.bf16.mxu0 %v1904
      %3165 = vmatmul.mubr.bf16.gmra.mxu0 %v1856
      %v3166 = vpop.f32.mrf.mxu0
      %v3167 = vadd.f32 %v3006, %v3166
      %v3168 = vpop.f32.mrf.mxu0
      %v3169 = vpop.f32.mrf.mxu0
      %v3170 = vadd.f32 %v3009, %v3169
      %v3171 = vpop.f32.mrf.mxu0
      %3172 = vdwg.mxu0
      %3173 = vmatprep.subr.bf16.mxu0 0
      %3174 = vmatpush1.bf16.msra.mxu0 %v2456
      %3175 = vmatprep.subr.bf16.mxu0 0
      %3176 = vmatpush1.bf16.msra.mxu0 %v2455
      %3177 = vmatprep.subr.bf16.mxu0 0
      %3178 = vmatpush1.bf16.msra.mxu0 %v2454
      %3179 = vmatprep.subr.bf16.mxu0 0
      %3180 = vmatpush1.bf16.msra.mxu0 %v2453
      %3181 = vmatprep.subr.bf16.mxu0 0
      %3182 = vmatpush1.bf16.msra.mxu0 %v2452
      %3183 = vmatprep.subr.bf16.mxu0 0
      %3184 = vmatpush1.bf16.msra.mxu0 %v2451
      %3185 = vmatprep.subr.bf16.mxu0 0
      %3186 = vmatpush1.bf16.msra.mxu0 %v2450
      %3187 = vmatprep.subr.bf16.mxu0 0
      %3188 = vmatpush1.bf16.msra.mxu0 %v2449
      %3189 = vmatprep.subr.bf16.mxu0 0
      %3190 = vmatpush2.bf16.msra.mxu0 0
      %3191 = vmatprep.subr.bf16.mxu0 0
      %3192 = vmatpush2.bf16.msra.mxu0 0
      %3193 = vmatprep.subr.bf16.mxu0 0
      %3194 = vmatpush2.bf16.msra.mxu0 0
      %3195 = vmatprep.subr.bf16.mxu0 0
      %3196 = vmatpush2.bf16.msra.mxu0 0
      %3197 = vmatprep.subr.bf16.mxu0 0
      %3198 = vmatpush2.bf16.msra.mxu0 0
      %3199 = vmatprep.subr.bf16.mxu0 0
      %3200 = vmatpush2.bf16.msra.mxu0 0
      %3201 = vmatprep.subr.bf16.mxu0 0
      %3202 = vmatpush2.bf16.msra.mxu0 0
      %3203 = vmatprep.subr.bf16.mxu0 0
      %3204 = vmatpush2.bf16.msra.mxu0 0
      %3205 = vmatprep.mubr.bf16.mxu0 0
      %3206 = vmatmul.mubr.bf16.gmra.mxu0 %v1937
      %v3207 = vpop.f32.mrf.mxu0
      %v3208 = vadd.f32 %v3047, %v3207
      %v3209 = vpop.f32.mrf.mxu0
      %v3210 = vpop.f32.mrf.mxu0
      %v3211 = vadd.f32 %v3050, %v3210
      %v3212 = vpop.f32.mrf.mxu0
      %3213 = vmatprep.mubr.bf16.mxu0 0
      %3214 = vmatmul.mubr.bf16.gmra.mxu0 %v1938
      %v3215 = vpop.f32.mrf.mxu0
      %v3216 = vadd.f32 %v3055, %v3215
      %v3217 = vpop.f32.mrf.mxu0
      %v3218 = vpop.f32.mrf.mxu0
      %v3219 = vadd.f32 %v3058, %v3218
      %v3220 = vpop.f32.mrf.mxu0
      %3221 = vmatprep.mubr.bf16.mxu0 0
      %3222 = vmatmul.mubr.bf16.gmra.mxu0 %v1939
      %v3223 = vpop.f32.mrf.mxu0
      %v3224 = vadd.f32 %v3063, %v3223
      %v3225 = vpop.f32.mrf.mxu0
      %v3226 = vpop.f32.mrf.mxu0
      %v3227 = vadd.f32 %v3066, %v3226
      %v3228 = vpop.f32.mrf.mxu0
      %3229 = vmatprep.mubr.bf16.mxu0 0
      %3230 = vmatmul.mubr.bf16.gmra.mxu0 %v1940
      %v3231 = vpop.f32.mrf.mxu0
      %v3232 = vadd.f32 %v3071, %v3231
      %v3233 = vpop.f32.mrf.mxu0
      %v3234 = vpop.f32.mrf.mxu0
      %v3235 = vadd.f32 %v3074, %v3234
      %v3236 = vpop.f32.mrf.mxu0
      %3237 = vmatprep.mubr.bf16.mxu0 0
      %3238 = vmatmul.mubr.bf16.gmra.mxu0 %v1941
      %v3239 = vpop.f32.mrf.mxu0
      %v3240 = vadd.f32 %v3079, %v3239
      %v3241 = vpop.f32.mrf.mxu0
      %v3242 = vpop.f32.mrf.mxu0
      %v3243 = vadd.f32 %v3082, %v3242
      %v3244 = vpop.f32.mrf.mxu0
      %3245 = vmatprep.mubr.bf16.mxu0 0
      %3246 = vmatmul.mubr.bf16.gmra.mxu0 %v1942
      %v3247 = vpop.f32.mrf.mxu0
      %v3248 = vadd.f32 %v3087, %v3247
      %v3249 = vpop.f32.mrf.mxu0
      %v3250 = vpop.f32.mrf.mxu0
      %v3251 = vadd.f32 %v3090, %v3250
      %v3252 = vpop.f32.mrf.mxu0
      %3253 = vmatprep.mubr.bf16.mxu0 0
      %3254 = vmatmul.mubr.bf16.gmra.mxu0 %v1943
      %v3255 = vpop.f32.mrf.mxu0
      %v3256 = vadd.f32 %v3095, %v3255
      %v3257 = vpop.f32.mrf.mxu0
      %v3258 = vpop.f32.mrf.mxu0
      %v3259 = vadd.f32 %v3098, %v3258
      %v3260 = vpop.f32.mrf.mxu0
      %3261 = vmatprep.mubr.bf16.mxu0 0
      %3262 = vmatmul.mubr.bf16.gmra.mxu0 %v1944
      %v3263 = vpop.f32.mrf.mxu0
      %v3264 = vadd.f32 %v3103, %v3263
      %v3265 = vpop.f32.mrf.mxu0
      %v3266 = vpop.f32.mrf.mxu0
      %v3267 = vadd.f32 %v3106, %v3266
      %v3268 = vpop.f32.mrf.mxu0
      %3269 = vmatprep.mubr.bf16.mxu0 0
      %3270 = vmatmul.mubr.bf16.gmra.mxu0 %v1945
      %v3271 = vpop.f32.mrf.mxu0
      %v3272 = vadd.f32 %v3111, %v3271
      %v3273 = vpop.f32.mrf.mxu0
      %v3274 = vpop.f32.mrf.mxu0
      %v3275 = vadd.f32 %v3114, %v3274
      %v3276 = vpop.f32.mrf.mxu0
      %3277 = vmatprep.mubr.bf16.mxu0 0
      %3278 = vmatmul.mubr.bf16.gmra.mxu0 %v1946
      %v3279 = vpop.f32.mrf.mxu0
      %v3280 = vadd.f32 %v3119, %v3279
      %v3281 = vpop.f32.mrf.mxu0
      %v3282 = vpop.f32.mrf.mxu0
      %v3283 = vadd.f32 %v3122, %v3282
      %v3284 = vpop.f32.mrf.mxu0
      %3285 = vmatprep.mubr.bf16.mxu0 0
      %3286 = vmatmul.mubr.bf16.gmra.mxu0 %v1947
      %v3287 = vpop.f32.mrf.mxu0
      %v3288 = vadd.f32 %v3127, %v3287
      %v3289 = vpop.f32.mrf.mxu0
      %v3290 = vpop.f32.mrf.mxu0
      %v3291 = vadd.f32 %v3130, %v3290
      %v3292 = vpop.f32.mrf.mxu0
      %3293 = vmatprep.mubr.bf16.mxu0 0
      %3294 = vmatmul.mubr.bf16.gmra.mxu0 %v1948
      %v3295 = vpop.f32.mrf.mxu0
      %v3296 = vadd.f32 %v3135, %v3295
      %v3297 = vpop.f32.mrf.mxu0
      %v3298 = vpop.f32.mrf.mxu0
      %v3299 = vadd.f32 %v3138, %v3298
      %v3300 = vpop.f32.mrf.mxu0
      %3301 = vmatprep.mubr.bf16.mxu0 0
      %3302 = vmatmul.mubr.bf16.gmra.mxu0 %v1949
      %v3303 = vpop.f32.mrf.mxu0
      %v3304 = vadd.f32 %v3143, %v3303
      %v3305 = vpop.f32.mrf.mxu0
      %v3306 = vpop.f32.mrf.mxu0
      %v3307 = vadd.f32 %v3146, %v3306
      %v3308 = vpop.f32.mrf.mxu0
      %3309 = vmatprep.mubr.bf16.mxu0 0
      %3310 = vmatmul.mubr.bf16.gmra.mxu0 %v1950
      %v3311 = vpop.f32.mrf.mxu0
      %v3312 = vadd.f32 %v3151, %v3311
      %v3313 = vpop.f32.mrf.mxu0
      %v3314 = vpop.f32.mrf.mxu0
      %v3315 = vadd.f32 %v3154, %v3314
      %v3316 = vpop.f32.mrf.mxu0
      %3317 = vmatprep.mubr.bf16.mxu0 0
      %3318 = vmatmul.mubr.bf16.gmra.mxu0 %v1951
      %v3319 = vpop.f32.mrf.mxu0
      %v3320 = vadd.f32 %v3159, %v3319
      %v3321 = vpop.f32.mrf.mxu0
      %v3322 = vpop.f32.mrf.mxu0
      %v3323 = vadd.f32 %v3162, %v3322
      %v3324 = vpop.f32.mrf.mxu0
      %3325 = vmatprep.mubr.bf16.mxu0 0
      %3326 = vmatmul.mubr.bf16.gmra.mxu0 %v1952
      %v3327 = vpop.f32.mrf.mxu0
      %v3328 = vadd.f32 %v3167, %v3327
      %v3329 = vpop.f32.mrf.mxu0
      %v3330 = vpop.f32.mrf.mxu0
      %v3331 = vadd.f32 %v3170, %v3330
      %v3332 = vpop.f32.mrf.mxu0
      %3333 = vdwg.mxu0
      %v3334 = vld [vmem:[%s6] sm:$0x1]
      %v3336 = vlaneseq
      %v3337 = vshrl.u32 %v3336, 7
      %v3338 = vsub.s32 0, %v3337
      %v3339 = vrot.slane %v3334, %v3338
      %v3341 = vmul.f32 %v3208, %v3339
      %v3342 = vmul.f32 %v3211, %v3339
      %v3343 = vmul.f32 %v3216, %v3339
      %v3344 = vmul.f32 %v3219, %v3339
      %v3345 = vmul.f32 %v3224, %v3339
      %v3346 = vmul.f32 %v3227, %v3339
      %v3347 = vmul.f32 %v3232, %v3339
      %v3348 = vmul.f32 %v3235, %v3339
      %v3349 = vmul.f32 %v3240, %v3339
      %v3350 = vmul.f32 %v3243, %v3339
      %v3351 = vmul.f32 %v3248, %v3339
      %v3352 = vmul.f32 %v3251, %v3339
      %v3353 = vmul.f32 %v3256, %v3339
      %v3354 = vmul.f32 %v3259, %v3339
      %v3355 = vmul.f32 %v3264, %v3339
      %v3356 = vmul.f32 %v3267, %v3339
      %v3357 = vmul.f32 %v3272, %v3339
      %v3358 = vmul.f32 %v3275, %v3339
      %v3359 = vmul.f32 %v3280, %v3339
      %v3360 = vmul.f32 %v3283, %v3339
      %v3361 = vmul.f32 %v3288, %v3339
      %v3362 = vmul.f32 %v3291, %v3339
      %v3363 = vmul.f32 %v3296, %v3339
      %v3364 = vmul.f32 %v3299, %v3339
      %v3365 = vmul.f32 %v3304, %v3339
      %v3366 = vmul.f32 %v3307, %v3339
      %v3367 = vmul.f32 %v3312, %v3339
      %v3368 = vmul.f32 %v3315, %v3339
      %v3369 = vmul.f32 %v3320, %v3339
      %v3370 = vmul.f32 %v3323, %v3339
      %v3371 = vmul.f32 %v3328, %v3339
      %v3372 = vmul.f32 %v3331, %v3339
      %v3373 = vld [vmem:[%s7] sm:$0x1]
      %v3375 = vlaneseq
      %v3376 = vshrl.u32 %v3375, 7
      %v3377 = vsub.s32 0, %v3376
      %v3378 = vrot.slane %v3373, %v3377
      %v3380 = vadd.f32 %v3341, %v3378
      %v3381 = vadd.f32 %v3342, %v3378
      %v3382 = vadd.f32 %v3343, %v3378
      %v3383 = vadd.f32 %v3344, %v3378
      %v3384 = vadd.f32 %v3345, %v3378
      %v3385 = vadd.f32 %v3346, %v3378
      %v3386 = vadd.f32 %v3347, %v3378
      %v3387 = vadd.f32 %v3348, %v3378
      %v3388 = vadd.f32 %v3349, %v3378
      %v3389 = vadd.f32 %v3350, %v3378
      %v3390 = vadd.f32 %v3351, %v3378
      %v3391 = vadd.f32 %v3352, %v3378
      %v3392 = vadd.f32 %v3353, %v3378
      %v3393 = vadd.f32 %v3354, %v3378
      %v3394 = vadd.f32 %v3355, %v3378
      %v3395 = vadd.f32 %v3356, %v3378
      %v3396 = vadd.f32 %v3357, %v3378
      %v3397 = vadd.f32 %v3358, %v3378
      %v3398 = vadd.f32 %v3359, %v3378
      %v3399 = vadd.f32 %v3360, %v3378
      %v3400 = vadd.f32 %v3361, %v3378
      %v3401 = vadd.f32 %v3362, %v3378
      %v3402 = vadd.f32 %v3363, %v3378
      %v3403 = vadd.f32 %v3364, %v3378
      %v3404 = vadd.f32 %v3365, %v3378
      %v3405 = vadd.f32 %v3366, %v3378
      %v3406 = vadd.f32 %v3367, %v3378
      %v3407 = vadd.f32 %v3368, %v3378
      %v3408 = vadd.f32 %v3369, %v3378
      %v3409 = vadd.f32 %v3370, %v3378
      %v3410 = vadd.f32 %v3371, %v3378
      %v3411 = vadd.f32 %v3372, %v3378
      %v3412 = vmax.f32 %v3380, 0.0
      %v3413 = vmax.f32 %v3381, 0.0
      %v3414 = vmax.f32 %v3382, 0.0
      %v3415 = vmax.f32 %v3383, 0.0
      %v3416 = vmax.f32 %v3384, 0.0
      %v3417 = vmax.f32 %v3385, 0.0
      %v3418 = vmax.f32 %v3386, 0.0
      %v3419 = vmax.f32 %v3387, 0.0
      %v3420 = vmax.f32 %v3388, 0.0
      %v3421 = vmax.f32 %v3389, 0.0
      %v3422 = vmax.f32 %v3390, 0.0
      %v3423 = vmax.f32 %v3391, 0.0
      %v3424 = vmax.f32 %v3392, 0.0
      %v3425 = vmax.f32 %v3393, 0.0
      %v3426 = vmax.f32 %v3394, 0.0
      %v3427 = vmax.f32 %v3395, 0.0
      %v3428 = vmax.f32 %v3396, 0.0
      %v3429 = vmax.f32 %v3397, 0.0
      %v3430 = vmax.f32 %v3398, 0.0
      %v3431 = vmax.f32 %v3399, 0.0
      %v3432 = vmax.f32 %v3400, 0.0
      %v3433 = vmax.f32 %v3401, 0.0
      %v3434 = vmax.f32 %v3402, 0.0
      %v3435 = vmax.f32 %v3403, 0.0
      %v3436 = vmax.f32 %v3404, 0.0
      %v3437 = vmax.f32 %v3405, 0.0
      %v3438 = vmax.f32 %v3406, 0.0
      %v3439 = vmax.f32 %v3407, 0.0
      %v3440 = vmax.f32 %v3408, 0.0
      %v3441 = vmax.f32 %v3409, 0.0
      %v3442 = vmax.f32 %v3410, 0.0
      %v3443 = vmax.f32 %v3411, 0.0
      %v3444 = vpack.c.bf16 %v3413, %v3412
      %v3445 = vpack.c.bf16 %v3415, %v3414
      %v3446 = vpack.c.bf16 %v3417, %v3416
      %v3447 = vpack.c.bf16 %v3419, %v3418
      %v3448 = vpack.c.bf16 %v3421, %v3420
      %v3449 = vpack.c.bf16 %v3423, %v3422
      %v3450 = vpack.c.bf16 %v3425, %v3424
      %v3451 = vpack.c.bf16 %v3427, %v3426
      %v3452 = vpack.c.bf16 %v3429, %v3428
      %v3453 = vpack.c.bf16 %v3431, %v3430
      %v3454 = vpack.c.bf16 %v3433, %v3432
      %v3455 = vpack.c.bf16 %v3435, %v3434
      %v3456 = vpack.c.bf16 %v3437, %v3436
      %v3457 = vpack.c.bf16 %v3439, %v3438
      %v3458 = vpack.c.bf16 %v3441, %v3440
      %v3459 = vpack.c.bf16 %v3443, %v3442
      %v3460 = vld [vmem:[%s3] sm:$0xff]
      %v3461 = vld [vmem:[%s3 + $0x8] sm:$0xff]
      %v3462 = vld [vmem:[%s3 + $0x10] sm:$0xff]
      %v3463 = vld [vmem:[%s3 + $0x18] sm:$0xff]
      %v3464 = vld [vmem:[%s3 + $0x20] sm:$0xff]
      %v3465 = vld [vmem:[%s3 + $0x28] sm:$0xff]
      %v3466 = vld [vmem:[%s3 + $0x30] sm:$0xff]
      %v3467 = vld [vmem:[%s3 + $0x38] sm:$0xff]
      %v3468 = vld [vmem:[%s3 + $0x40] sm:$0xff]
      %v3469 = vld [vmem:[%s3 + $0x48] sm:$0xff]
      %v3470 = vld [vmem:[%s3 + $0x50] sm:$0xff]
      %v3471 = vld [vmem:[%s3 + $0x58] sm:$0xff]
      %v3472 = vld [vmem:[%s3 + $0x60] sm:$0xff]
      %v3473 = vld [vmem:[%s3 + $0x68] sm:$0xff]
      %v3474 = vld [vmem:[%s3 + $0x70] sm:$0xff]
      %v3475 = vld [vmem:[%s3 + $0x78] sm:$0xff]
      %v3476 = vld [vmem:[%s3 + $0x80] sm:$0xff]
      %v3477 = vld [vmem:[%s3 + $0x88] sm:$0xff]
      %v3478 = vld [vmem:[%s3 + $0x90] sm:$0xff]
      %v3479 = vld [vmem:[%s3 + $0x98] sm:$0xff]
      %v3480 = vld [vmem:[%s3 + $0xa0] sm:$0xff]
      %v3481 = vld [vmem:[%s3 + $0xa8] sm:$0xff]
      %v3482 = vld [vmem:[%s3 + $0xb0] sm:$0xff]
      %v3483 = vld [vmem:[%s3 + $0xb8] sm:$0xff]
      %v3484 = vld [vmem:[%s3 + $0xc0] sm:$0xff]
      %v3485 = vld [vmem:[%s3 + $0xc8] sm:$0xff]
      %v3486 = vld [vmem:[%s3 + $0xd0] sm:$0xff]
      %v3487 = vld [vmem:[%s3 + $0xd8] sm:$0xff]
      %v3488 = vld [vmem:[%s3 + $0xe0] sm:$0xff]
      %v3489 = vld [vmem:[%s3 + $0xe8] sm:$0xff]
      %v3490 = vld [vmem:[%s3 + $0xf0] sm:$0xff]
      %v3491 = vld [vmem:[%s3 + $0xf8] sm:$0xff]
      %v3524 = vunpack.c.l.b16 %v3460
      %v3525 = vunpack.c.h.b16 %v3460
      %v3526 = vunpack.c.l.b16 %v3461
      %v3527 = vunpack.c.h.b16 %v3461
      %v3528 = vunpack.c.l.b16 %v3462
      %v3529 = vunpack.c.h.b16 %v3462
      %v3530 = vunpack.c.l.b16 %v3463
      %v3531 = vunpack.c.h.b16 %v3463
      %v3532 = vunpack.c.l.b16 %v3464
      %v3533 = vunpack.c.h.b16 %v3464
      %v3534 = vunpack.c.l.b16 %v3465
      %v3535 = vunpack.c.h.b16 %v3465
      %v3536 = vunpack.c.l.b16 %v3466
      %v3537 = vunpack.c.h.b16 %v3466
      %v3538 = vunpack.c.l.b16 %v3467
      %v3539 = vunpack.c.h.b16 %v3467
      %v3540 = vunpack.c.l.b16 %v3468
      %v3541 = vunpack.c.h.b16 %v3468
      %v3542 = vunpack.c.l.b16 %v3469
      %v3543 = vunpack.c.h.b16 %v3469
      %v3544 = vunpack.c.l.b16 %v3470
      %v3545 = vunpack.c.h.b16 %v3470
      %v3546 = vunpack.c.l.b16 %v3471
      %v3547 = vunpack.c.h.b16 %v3471
      %v3548 = vunpack.c.l.b16 %v3472
      %v3549 = vunpack.c.h.b16 %v3472
      %v3550 = vunpack.c.l.b16 %v3473
      %v3551 = vunpack.c.h.b16 %v3473
      %v3552 = vunpack.c.l.b16 %v3474
      %v3553 = vunpack.c.h.b16 %v3474
      %v3554 = vunpack.c.l.b16 %v3475
      %v3555 = vunpack.c.h.b16 %v3475
      %v3556 = vunpack.c.l.b16 %v3476
      %v3557 = vunpack.c.h.b16 %v3476
      %v3558 = vunpack.c.l.b16 %v3477
      %v3559 = vunpack.c.h.b16 %v3477
      %v3560 = vunpack.c.l.b16 %v3478
      %v3561 = vunpack.c.h.b16 %v3478
      %v3562 = vunpack.c.l.b16 %v3479
      %v3563 = vunpack.c.h.b16 %v3479
      %v3564 = vunpack.c.l.b16 %v3480
      %v3565 = vunpack.c.h.b16 %v3480
      %v3566 = vunpack.c.l.b16 %v3481
      %v3567 = vunpack.c.h.b16 %v3481
      %v3568 = vunpack.c.l.b16 %v3482
      %v3569 = vunpack.c.h.b16 %v3482
      %v3570 = vunpack.c.l.b16 %v3483
      %v3571 = vunpack.c.h.b16 %v3483
      %v3572 = vunpack.c.l.b16 %v3484
      %v3573 = vunpack.c.h.b16 %v3484
      %v3574 = vunpack.c.l.b16 %v3485
      %v3575 = vunpack.c.h.b16 %v3485
      %v3576 = vunpack.c.l.b16 %v3486
      %v3577 = vunpack.c.h.b16 %v3486
      %v3578 = vunpack.c.l.b16 %v3487
      %v3579 = vunpack.c.h.b16 %v3487
      %v3580 = vunpack.c.l.b16 %v3488
      %v3581 = vunpack.c.h.b16 %v3488
      %v3582 = vunpack.c.l.b16 %v3489
      %v3583 = vunpack.c.h.b16 %v3489
      %v3584 = vunpack.c.l.b16 %v3490
      %v3585 = vunpack.c.h.b16 %v3490
      %v3586 = vunpack.c.l.b16 %v3491
      %v3587 = vunpack.c.h.b16 %v3491
      %v3588 = vpack.c.b16 %v3528, %v3524
      %v3589 = vpack.c.b16 %v3529, %v3525
      %v3590 = vpack.c.b16 %v3530, %v3526
      %v3591 = vpack.c.b16 %v3531, %v3527
      %v3592 = vpack.c.b16 %v3536, %v3532
      %v3593 = vpack.c.b16 %v3537, %v3533
      %v3594 = vpack.c.b16 %v3538, %v3534
      %v3595 = vpack.c.b16 %v3539, %v3535
      %v3596 = vpack.c.b16 %v3544, %v3540
      %v3597 = vpack.c.b16 %v3545, %v3541
      %v3598 = vpack.c.b16 %v3546, %v3542
      %v3599 = vpack.c.b16 %v3547, %v3543
      %v3600 = vpack.c.b16 %v3552, %v3548
      %v3601 = vpack.c.b16 %v3553, %v3549
      %v3602 = vpack.c.b16 %v3554, %v3550
      %v3603 = vpack.c.b16 %v3555, %v3551
      %v3604 = vpack.c.b16 %v3560, %v3556
      %v3605 = vpack.c.b16 %v3561, %v3557
      %v3606 = vpack.c.b16 %v3562, %v3558
      %v3607 = vpack.c.b16 %v3563, %v3559
      %v3608 = vpack.c.b16 %v3568, %v3564
      %v3609 = vpack.c.b16 %v3569, %v3565
      %v3610 = vpack.c.b16 %v3570, %v3566
      %v3611 = vpack.c.b16 %v3571, %v3567
      %v3612 = vpack.c.b16 %v3576, %v3572
      %v3613 = vpack.c.b16 %v3577, %v3573
      %v3614 = vpack.c.b16 %v3578, %v3574
      %v3615 = vpack.c.b16 %v3579, %v3575
      %v3616 = vpack.c.b16 %v3584, %v3580
      %v3617 = vpack.c.b16 %v3585, %v3581
      %v3618 = vpack.c.b16 %v3586, %v3582
      %v3619 = vpack.c.b16 %v3587, %v3583
      %3652 = vmatprep.subr.bf16.mxu0 %v3617
      %3653 = vmatpush1.bf16.msra.mxu0 %v3616
      %3654 = vmatprep.subr.bf16.mxu0 %v3613
      %3655 = vmatpush1.bf16.msra.mxu0 %v3612
      %3656 = vmatprep.subr.bf16.mxu0 %v3609
      %3657 = vmatpush1.bf16.msra.mxu0 %v3608
      %3658 = vmatprep.subr.bf16.mxu0 %v3605
      %3659 = vmatpush1.bf16.msra.mxu0 %v3604
      %3660 = vmatprep.subr.bf16.mxu0 %v3601
      %3661 = vmatpush1.bf16.msra.mxu0 %v3600
      %3662 = vmatprep.subr.bf16.mxu0 %v3597
      %3663 = vmatpush1.bf16.msra.mxu0 %v3596
      %3664 = vmatprep.subr.bf16.mxu0 %v3593
      %3665 = vmatpush1.bf16.msra.mxu0 %v3592
      %3666 = vmatprep.subr.bf16.mxu0 %v3589
      %3667 = vmatpush1.bf16.msra.mxu0 %v3588
      %3668 = vmatprep.subr.bf16.mxu0 0
      %3669 = vmatpush2.bf16.msra.mxu0 0
      %3670 = vmatprep.subr.bf16.mxu0 0
      %3671 = vmatpush2.bf16.msra.mxu0 0
      %3672 = vmatprep.subr.bf16.mxu0 0
      %3673 = vmatpush2.bf16.msra.mxu0 0
      %3674 = vmatprep.subr.bf16.mxu0 0
      %3675 = vmatpush2.bf16.msra.mxu0 0
      %3676 = vmatprep.subr.bf16.mxu0 0
      %3677 = vmatpush2.bf16.msra.mxu0 0
      %3678 = vmatprep.subr.bf16.mxu0 0
      %3679 = vmatpush2.bf16.msra.mxu0 0
      %3680 = vmatprep.subr.bf16.mxu0 0
      %3681 = vmatpush2.bf16.msra.mxu0 0
      %3682 = vmatprep.subr.bf16.mxu0 0
      %3683 = vmatpush2.bf16.msra.mxu0 0
      %3684 = vmatprep.mubr.bf16.mxu0 0
      %3685 = vmatmul.mubr.bf16.gmra.mxu0 %v3444
      %v3686 = vpop.f32.mrf.mxu0
      %v3687 = vadd.f32 0.0, %v3686
      %v3688 = vpop.f32.mrf.mxu0
      %v3689 = vadd.f32 0.0, %v3688
      %v3690 = vpop.f32.mrf.mxu0
      %v3691 = vadd.f32 0.0, %v3690
      %v3692 = vpop.f32.mrf.mxu0
      %v3693 = vadd.f32 0.0, %v3692
      %3694 = vmatprep.mubr.bf16.mxu0 0
      %3695 = vmatmul.mubr.bf16.gmra.mxu0 %v3445
      %v3696 = vpop.f32.mrf.mxu0
      %v3697 = vadd.f32 0.0, %v3696
      %v3698 = vpop.f32.mrf.mxu0
      %v3699 = vadd.f32 0.0, %v3698
      %v3700 = vpop.f32.mrf.mxu0
      %v3701 = vadd.f32 0.0, %v3700
      %v3702 = vpop.f32.mrf.mxu0
      %v3703 = vadd.f32 0.0, %v3702
      %3704 = vmatprep.mubr.bf16.mxu0 0
      %3705 = vmatmul.mubr.bf16.gmra.mxu0 %v3446
      %v3706 = vpop.f32.mrf.mxu0
      %v3707 = vadd.f32 0.0, %v3706
      %v3708 = vpop.f32.mrf.mxu0
      %v3709 = vadd.f32 0.0, %v3708
      %v3710 = vpop.f32.mrf.mxu0
      %v3711 = vadd.f32 0.0, %v3710
      %v3712 = vpop.f32.mrf.mxu0
      %v3713 = vadd.f32 0.0, %v3712
      %3714 = vmatprep.mubr.bf16.mxu0 0
      %3715 = vmatmul.mubr.bf16.gmra.mxu0 %v3447
      %v3716 = vpop.f32.mrf.mxu0
      %v3717 = vadd.f32 0.0, %v3716
      %v3718 = vpop.f32.mrf.mxu0
      %v3719 = vadd.f32 0.0, %v3718
      %v3720 = vpop.f32.mrf.mxu0
      %v3721 = vadd.f32 0.0, %v3720
      %v3722 = vpop.f32.mrf.mxu0
      %v3723 = vadd.f32 0.0, %v3722
      %3724 = vmatprep.mubr.bf16.mxu0 0
      %3725 = vmatmul.mubr.bf16.gmra.mxu0 %v3448
      %v3726 = vpop.f32.mrf.mxu0
      %v3727 = vadd.f32 0.0, %v3726
      %v3728 = vpop.f32.mrf.mxu0
      %v3729 = vadd.f32 0.0, %v3728
      %v3730 = vpop.f32.mrf.mxu0
      %v3731 = vadd.f32 0.0, %v3730
      %v3732 = vpop.f32.mrf.mxu0
      %v3733 = vadd.f32 0.0, %v3732
      %3734 = vmatprep.mubr.bf16.mxu0 0
      %3735 = vmatmul.mubr.bf16.gmra.mxu0 %v3449
      %v3736 = vpop.f32.mrf.mxu0
      %v3737 = vadd.f32 0.0, %v3736
      %v3738 = vpop.f32.mrf.mxu0
      %v3739 = vadd.f32 0.0, %v3738
      %v3740 = vpop.f32.mrf.mxu0
      %v3741 = vadd.f32 0.0, %v3740
      %v3742 = vpop.f32.mrf.mxu0
      %v3743 = vadd.f32 0.0, %v3742
      %3744 = vmatprep.mubr.bf16.mxu0 0
      %3745 = vmatmul.mubr.bf16.gmra.mxu0 %v3450
      %v3746 = vpop.f32.mrf.mxu0
      %v3747 = vadd.f32 0.0, %v3746
      %v3748 = vpop.f32.mrf.mxu0
      %v3749 = vadd.f32 0.0, %v3748
      %v3750 = vpop.f32.mrf.mxu0
      %v3751 = vadd.f32 0.0, %v3750
      %v3752 = vpop.f32.mrf.mxu0
      %v3753 = vadd.f32 0.0, %v3752
      %3754 = vmatprep.mubr.bf16.mxu0 0
      %3755 = vmatmul.mubr.bf16.gmra.mxu0 %v3451
      %v3756 = vpop.f32.mrf.mxu0
      %v3757 = vadd.f32 0.0, %v3756
      %v3758 = vpop.f32.mrf.mxu0
      %v3759 = vadd.f32 0.0, %v3758
      %v3760 = vpop.f32.mrf.mxu0
      %v3761 = vadd.f32 0.0, %v3760
      %v3762 = vpop.f32.mrf.mxu0
      %v3763 = vadd.f32 0.0, %v3762
      %3764 = vmatprep.mubr.bf16.mxu0 0
      %3765 = vmatmul.mubr.bf16.gmra.mxu0 %v3452
      %v3766 = vpop.f32.mrf.mxu0
      %v3767 = vadd.f32 0.0, %v3766
      %v3768 = vpop.f32.mrf.mxu0
      %v3769 = vadd.f32 0.0, %v3768
      %v3770 = vpop.f32.mrf.mxu0
      %v3771 = vadd.f32 0.0, %v3770
      %v3772 = vpop.f32.mrf.mxu0
      %v3773 = vadd.f32 0.0, %v3772
      %3774 = vmatprep.mubr.bf16.mxu0 0
      %3775 = vmatmul.mubr.bf16.gmra.mxu0 %v3453
      %v3776 = vpop.f32.mrf.mxu0
      %v3777 = vadd.f32 0.0, %v3776
      %v3778 = vpop.f32.mrf.mxu0
      %v3779 = vadd.f32 0.0, %v3778
      %v3780 = vpop.f32.mrf.mxu0
      %v3781 = vadd.f32 0.0, %v3780
      %v3782 = vpop.f32.mrf.mxu0
      %v3783 = vadd.f32 0.0, %v3782
      %3784 = vmatprep.mubr.bf16.mxu0 0
      %3785 = vmatmul.mubr.bf16.gmra.mxu0 %v3454
      %v3786 = vpop.f32.mrf.mxu0
      %v3787 = vadd.f32 0.0, %v3786
      %v3788 = vpop.f32.mrf.mxu0
      %v3789 = vadd.f32 0.0, %v3788
      %v3790 = vpop.f32.mrf.mxu0
      %v3791 = vadd.f32 0.0, %v3790
      %v3792 = vpop.f32.mrf.mxu0
      %v3793 = vadd.f32 0.0, %v3792
      %3794 = vmatprep.mubr.bf16.mxu0 0
      %3795 = vmatmul.mubr.bf16.gmra.mxu0 %v3455
      %v3796 = vpop.f32.mrf.mxu0
      %v3797 = vadd.f32 0.0, %v3796
      %v3798 = vpop.f32.mrf.mxu0
      %v3799 = vadd.f32 0.0, %v3798
      %v3800 = vpop.f32.mrf.mxu0
      %v3801 = vadd.f32 0.0, %v3800
      %v3802 = vpop.f32.mrf.mxu0
      %v3803 = vadd.f32 0.0, %v3802
      %3804 = vmatprep.mubr.bf16.mxu0 0
      %3805 = vmatmul.mubr.bf16.gmra.mxu0 %v3456
      %v3806 = vpop.f32.mrf.mxu0
      %v3807 = vadd.f32 0.0, %v3806
      %v3808 = vpop.f32.mrf.mxu0
      %v3809 = vadd.f32 0.0, %v3808
      %v3810 = vpop.f32.mrf.mxu0
      %v3811 = vadd.f32 0.0, %v3810
      %v3812 = vpop.f32.mrf.mxu0
      %v3813 = vadd.f32 0.0, %v3812
      %3814 = vmatprep.mubr.bf16.mxu0 0
      %3815 = vmatmul.mubr.bf16.gmra.mxu0 %v3457
      %v3816 = vpop.f32.mrf.mxu0
      %v3817 = vadd.f32 0.0, %v3816
      %v3818 = vpop.f32.mrf.mxu0
      %v3819 = vadd.f32 0.0, %v3818
      %v3820 = vpop.f32.mrf.mxu0
      %v3821 = vadd.f32 0.0, %v3820
      %v3822 = vpop.f32.mrf.mxu0
      %v3823 = vadd.f32 0.0, %v3822
      %3824 = vmatprep.mubr.bf16.mxu0 0
      %3825 = vmatmul.mubr.bf16.gmra.mxu0 %v3458
      %v3826 = vpop.f32.mrf.mxu0
      %v3827 = vadd.f32 0.0, %v3826
      %v3828 = vpop.f32.mrf.mxu0
      %v3829 = vadd.f32 0.0, %v3828
      %v3830 = vpop.f32.mrf.mxu0
      %v3831 = vadd.f32 0.0, %v3830
      %v3832 = vpop.f32.mrf.mxu0
      %v3833 = vadd.f32 0.0, %v3832
      %3834 = vmatprep.mubr.bf16.mxu0 0
      %3835 = vmatmul.mubr.bf16.gmra.mxu0 %v3459
      %v3836 = vpop.f32.mrf.mxu0
      %v3837 = vadd.f32 0.0, %v3836
      %v3838 = vpop.f32.mrf.mxu0
      %v3839 = vadd.f32 0.0, %v3838
      %v3840 = vpop.f32.mrf.mxu0
      %v3841 = vadd.f32 0.0, %v3840
      %v3842 = vpop.f32.mrf.mxu0
      %v3843 = vadd.f32 0.0, %v3842
      %3844 = vdwg.mxu0
      %3845 = vmatprep.subr.bf16.mxu0 %v3619
      %3846 = vmatpush1.bf16.msra.mxu0 %v3618
      %3847 = vmatprep.subr.bf16.mxu0 %v3615
      %3848 = vmatpush1.bf16.msra.mxu0 %v3614
      %3849 = vmatprep.subr.bf16.mxu0 %v3611
      %3850 = vmatpush1.bf16.msra.mxu0 %v3610
      %3851 = vmatprep.subr.bf16.mxu0 %v3607
      %3852 = vmatpush1.bf16.msra.mxu0 %v3606
      %3853 = vmatprep.subr.bf16.mxu0 %v3603
      %3854 = vmatpush1.bf16.msra.mxu0 %v3602
      %3855 = vmatprep.subr.bf16.mxu0 %v3599
      %3856 = vmatpush1.bf16.msra.mxu0 %v3598
      %3857 = vmatprep.subr.bf16.mxu0 %v3595
      %3858 = vmatpush1.bf16.msra.mxu0 %v3594
      %3859 = vmatprep.subr.bf16.mxu0 %v3591
      %3860 = vmatpush1.bf16.msra.mxu0 %v3590
      %3861 = vmatprep.subr.bf16.mxu0 0
      %3862 = vmatpush2.bf16.msra.mxu0 0
      %3863 = vmatprep.subr.bf16.mxu0 0
      %3864 = vmatpush2.bf16.msra.mxu0 0
      %3865 = vmatprep.subr.bf16.mxu0 0
      %3866 = vmatpush2.bf16.msra.mxu0 0
      %3867 = vmatprep.subr.bf16.mxu0 0
      %3868 = vmatpush2.bf16.msra.mxu0 0
      %3869 = vmatprep.subr.bf16.mxu0 0
      %3870 = vmatpush2.bf16.msra.mxu0 0
      %3871 = vmatprep.subr.bf16.mxu0 0
      %3872 = vmatpush2.bf16.msra.mxu0 0
      %3873 = vmatprep.subr.bf16.mxu0 0
      %3874 = vmatpush2.bf16.msra.mxu0 0
      %3875 = vmatprep.subr.bf16.mxu0 0
      %3876 = vmatpush2.bf16.msra.mxu0 0
      %3877 = vmatprep.mubr.bf16.mxu0 0
      %3878 = vmatmul.mubr.bf16.gmra.mxu0 %v3444
      %v3879 = vpop.f32.mrf.mxu0
      %v3880 = vadd.f32 0.0, %v3879
      %v3881 = vpop.f32.mrf.mxu0
      %v3882 = vadd.f32 0.0, %v3881
      %v3883 = vpop.f32.mrf.mxu0
      %v3884 = vadd.f32 0.0, %v3883
      %v3885 = vpop.f32.mrf.mxu0
      %v3886 = vadd.f32 0.0, %v3885
      %3887 = vmatprep.mubr.bf16.mxu0 0
      %3888 = vmatmul.mubr.bf16.gmra.mxu0 %v3445
      %v3889 = vpop.f32.mrf.mxu0
      %v3890 = vadd.f32 0.0, %v3889
      %v3891 = vpop.f32.mrf.mxu0
      %v3892 = vadd.f32 0.0, %v3891
      %v3893 = vpop.f32.mrf.mxu0
      %v3894 = vadd.f32 0.0, %v3893
      %v3895 = vpop.f32.mrf.mxu0
      %v3896 = vadd.f32 0.0, %v3895
      %3897 = vmatprep.mubr.bf16.mxu0 0
      %3898 = vmatmul.mubr.bf16.gmra.mxu0 %v3446
      %v3899 = vpop.f32.mrf.mxu0
      %v3900 = vadd.f32 0.0, %v3899
      %v3901 = vpop.f32.mrf.mxu0
      %v3902 = vadd.f32 0.0, %v3901
      %v3903 = vpop.f32.mrf.mxu0
      %v3904 = vadd.f32 0.0, %v3903
      %v3905 = vpop.f32.mrf.mxu0
      %v3906 = vadd.f32 0.0, %v3905
      %3907 = vmatprep.mubr.bf16.mxu0 0
      %3908 = vmatmul.mubr.bf16.gmra.mxu0 %v3447
      %v3909 = vpop.f32.mrf.mxu0
      %v3910 = vadd.f32 0.0, %v3909
      %v3911 = vpop.f32.mrf.mxu0
      %v3912 = vadd.f32 0.0, %v3911
      %v3913 = vpop.f32.mrf.mxu0
      %v3914 = vadd.f32 0.0, %v3913
      %v3915 = vpop.f32.mrf.mxu0
      %v3916 = vadd.f32 0.0, %v3915
      %3917 = vmatprep.mubr.bf16.mxu0 0
      %3918 = vmatmul.mubr.bf16.gmra.mxu0 %v3448
      %v3919 = vpop.f32.mrf.mxu0
      %v3920 = vadd.f32 0.0, %v3919
      %v3921 = vpop.f32.mrf.mxu0
      %v3922 = vadd.f32 0.0, %v3921
      %v3923 = vpop.f32.mrf.mxu0
      %v3924 = vadd.f32 0.0, %v3923
      %v3925 = vpop.f32.mrf.mxu0
      %v3926 = vadd.f32 0.0, %v3925
      %3927 = vmatprep.mubr.bf16.mxu0 0
      %3928 = vmatmul.mubr.bf16.gmra.mxu0 %v3449
      %v3929 = vpop.f32.mrf.mxu0
      %v3930 = vadd.f32 0.0, %v3929
      %v3931 = vpop.f32.mrf.mxu0
      %v3932 = vadd.f32 0.0, %v3931
      %v3933 = vpop.f32.mrf.mxu0
      %v3934 = vadd.f32 0.0, %v3933
      %v3935 = vpop.f32.mrf.mxu0
      %v3936 = vadd.f32 0.0, %v3935
      %3937 = vmatprep.mubr.bf16.mxu0 0
      %3938 = vmatmul.mubr.bf16.gmra.mxu0 %v3450
      %v3939 = vpop.f32.mrf.mxu0
      %v3940 = vadd.f32 0.0, %v3939
      %v3941 = vpop.f32.mrf.mxu0
      %v3942 = vadd.f32 0.0, %v3941
      %v3943 = vpop.f32.mrf.mxu0
      %v3944 = vadd.f32 0.0, %v3943
      %v3945 = vpop.f32.mrf.mxu0
      %v3946 = vadd.f32 0.0, %v3945
      %3947 = vmatprep.mubr.bf16.mxu0 0
      %3948 = vmatmul.mubr.bf16.gmra.mxu0 %v3451
      %v3949 = vpop.f32.mrf.mxu0
      %v3950 = vadd.f32 0.0, %v3949
      %v3951 = vpop.f32.mrf.mxu0
      %v3952 = vadd.f32 0.0, %v3951
      %v3953 = vpop.f32.mrf.mxu0
      %v3954 = vadd.f32 0.0, %v3953
      %v3955 = vpop.f32.mrf.mxu0
      %v3956 = vadd.f32 0.0, %v3955
      %3957 = vmatprep.mubr.bf16.mxu0 0
      %3958 = vmatmul.mubr.bf16.gmra.mxu0 %v3452
      %v3959 = vpop.f32.mrf.mxu0
      %v3960 = vadd.f32 0.0, %v3959
      %v3961 = vpop.f32.mrf.mxu0
      %v3962 = vadd.f32 0.0, %v3961
      %v3963 = vpop.f32.mrf.mxu0
      %v3964 = vadd.f32 0.0, %v3963
      %v3965 = vpop.f32.mrf.mxu0
      %v3966 = vadd.f32 0.0, %v3965
      %3967 = vmatprep.mubr.bf16.mxu0 0
      %3968 = vmatmul.mubr.bf16.gmra.mxu0 %v3453
      %v3969 = vpop.f32.mrf.mxu0
      %v3970 = vadd.f32 0.0, %v3969
      %v3971 = vpop.f32.mrf.mxu0
      %v3972 = vadd.f32 0.0, %v3971
      %v3973 = vpop.f32.mrf.mxu0
      %v3974 = vadd.f32 0.0, %v3973
      %v3975 = vpop.f32.mrf.mxu0
      %v3976 = vadd.f32 0.0, %v3975
      %3977 = vmatprep.mubr.bf16.mxu0 0
      %3978 = vmatmul.mubr.bf16.gmra.mxu0 %v3454
      %v3979 = vpop.f32.mrf.mxu0
      %v3980 = vadd.f32 0.0, %v3979
      %v3981 = vpop.f32.mrf.mxu0
      %v3982 = vadd.f32 0.0, %v3981
      %v3983 = vpop.f32.mrf.mxu0
      %v3984 = vadd.f32 0.0, %v3983
      %v3985 = vpop.f32.mrf.mxu0
      %v3986 = vadd.f32 0.0, %v3985
      %3987 = vmatprep.mubr.bf16.mxu0 0
      %3988 = vmatmul.mubr.bf16.gmra.mxu0 %v3455
      %v3989 = vpop.f32.mrf.mxu0
      %v3990 = vadd.f32 0.0, %v3989
      %v3991 = vpop.f32.mrf.mxu0
      %v3992 = vadd.f32 0.0, %v3991
      %v3993 = vpop.f32.mrf.mxu0
      %v3994 = vadd.f32 0.0, %v3993
      %v3995 = vpop.f32.mrf.mxu0
      %v3996 = vadd.f32 0.0, %v3995
      %3997 = vmatprep.mubr.bf16.mxu0 0
      %3998 = vmatmul.mubr.bf16.gmra.mxu0 %v3456
      %v3999 = vpop.f32.mrf.mxu0
      %v4000 = vadd.f32 0.0, %v3999
      %v4001 = vpop.f32.mrf.mxu0
      %v4002 = vadd.f32 0.0, %v4001
      %v4003 = vpop.f32.mrf.mxu0
      %v4004 = vadd.f32 0.0, %v4003
      %v4005 = vpop.f32.mrf.mxu0
      %v4006 = vadd.f32 0.0, %v4005
      %4007 = vmatprep.mubr.bf16.mxu0 0
      %4008 = vmatmul.mubr.bf16.gmra.mxu0 %v3457
      %v4009 = vpop.f32.mrf.mxu0
      %v4010 = vadd.f32 0.0, %v4009
      %v4011 = vpop.f32.mrf.mxu0
      %v4012 = vadd.f32 0.0, %v4011
      %v4013 = vpop.f32.mrf.mxu0
      %v4014 = vadd.f32 0.0, %v4013
      %v4015 = vpop.f32.mrf.mxu0
      %v4016 = vadd.f32 0.0, %v4015
      %4017 = vmatprep.mubr.bf16.mxu0 0
      %4018 = vmatmul.mubr.bf16.gmra.mxu0 %v3458
      %v4019 = vpop.f32.mrf.mxu0
      %v4020 = vadd.f32 0.0, %v4019
      %v4021 = vpop.f32.mrf.mxu0
      %v4022 = vadd.f32 0.0, %v4021
      %v4023 = vpop.f32.mrf.mxu0
      %v4024 = vadd.f32 0.0, %v4023
      %v4025 = vpop.f32.mrf.mxu0
      %v4026 = vadd.f32 0.0, %v4025
      %4027 = vmatprep.mubr.bf16.mxu0 0
      %4028 = vmatmul.mubr.bf16.gmra.mxu0 %v3459
      %v4029 = vpop.f32.mrf.mxu0
      %v4030 = vadd.f32 0.0, %v4029
      %v4031 = vpop.f32.mrf.mxu0
      %v4032 = vadd.f32 0.0, %v4031
      %v4033 = vpop.f32.mrf.mxu0
      %v4034 = vadd.f32 0.0, %v4033
      %v4035 = vpop.f32.mrf.mxu0
      %v4036 = vadd.f32 0.0, %v4035
      %4037 = vdwg.mxu0
      %v4038 = vld [vmem:[%s8] sm:$0xf]
      %v4040 = vlaneseq
      %v4041 = vshrl.u32 %v4040, 7
      %v4042 = vsub.s32 0, %v4041
      %v4043 = vrot.slane %v4038, %v4042
      %v4044 = vlaneseq
      %v4045 = vshrl.u32 %v4044, 7
      %v4046 = vsub.s32 1, %v4045
      %v4047 = vrot.slane %v4038, %v4046
      %v4048 = vlaneseq
      %v4049 = vshrl.u32 %v4048, 7
      %v4050 = vsub.s32 2, %v4049
      %v4051 = vrot.slane %v4038, %v4050
      %v4052 = vlaneseq
      %v4053 = vshrl.u32 %v4052, 7
      %v4054 = vsub.s32 3, %v4053
      %v4055 = vrot.slane %v4038, %v4054
      %v4060 = vmul.f32 %v3687, %v4043
      %v4061 = vmul.f32 %v3689, %v4047
      %v4062 = vmul.f32 %v3880, %v4051
      %v4063 = vmul.f32 %v3882, %v4055
      %v4064 = vmul.f32 %v3691, %v4043
      %v4065 = vmul.f32 %v3693, %v4047
      %v4066 = vmul.f32 %v3884, %v4051
      %v4067 = vmul.f32 %v3886, %v4055
      %v4068 = vmul.f32 %v3697, %v4043
      %v4069 = vmul.f32 %v3699, %v4047
      %v4070 = vmul.f32 %v3890, %v4051
      %v4071 = vmul.f32 %v3892, %v4055
      %v4072 = vmul.f32 %v3701, %v4043
      %v4073 = vmul.f32 %v3703, %v4047
      %v4074 = vmul.f32 %v3894, %v4051
      %v4075 = vmul.f32 %v3896, %v4055
      %v4076 = vmul.f32 %v3707, %v4043
      %v4077 = vmul.f32 %v3709, %v4047
      %v4078 = vmul.f32 %v3900, %v4051
      %v4079 = vmul.f32 %v3902, %v4055
      %v4080 = vmul.f32 %v3711, %v4043
      %v4081 = vmul.f32 %v3713, %v4047
      %v4082 = vmul.f32 %v3904, %v4051
      %v4083 = vmul.f32 %v3906, %v4055
      %v4084 = vmul.f32 %v3717, %v4043
      %v4085 = vmul.f32 %v3719, %v4047
      %v4086 = vmul.f32 %v3910, %v4051
      %v4087 = vmul.f32 %v3912, %v4055
      %v4088 = vmul.f32 %v3721, %v4043
      %v4089 = vmul.f32 %v3723, %v4047
      %v4090 = vmul.f32 %v3914, %v4051
      %v4091 = vmul.f32 %v3916, %v4055
      %v4092 = vmul.f32 %v3727, %v4043
      %v4093 = vmul.f32 %v3729, %v4047
      %v4094 = vmul.f32 %v3920, %v4051
      %v4095 = vmul.f32 %v3922, %v4055
      %v4096 = vmul.f32 %v3731, %v4043
      %v4097 = vmul.f32 %v3733, %v4047
      %v4098 = vmul.f32 %v3924, %v4051
      %v4099 = vmul.f32 %v3926, %v4055
      %v4100 = vmul.f32 %v3737, %v4043
      %v4101 = vmul.f32 %v3739, %v4047
      %v4102 = vmul.f32 %v3930, %v4051
      %v4103 = vmul.f32 %v3932, %v4055
      %v4104 = vmul.f32 %v3741, %v4043
      %v4105 = vmul.f32 %v3743, %v4047
      %v4106 = vmul.f32 %v3934, %v4051
      %v4107 = vmul.f32 %v3936, %v4055
      %v4108 = vmul.f32 %v3747, %v4043
      %v4109 = vmul.f32 %v3749, %v4047
      %v4110 = vmul.f32 %v3940, %v4051
      %v4111 = vmul.f32 %v3942, %v4055
      %v4112 = vmul.f32 %v3751, %v4043
      %v4113 = vmul.f32 %v3753, %v4047
      %v4114 = vmul.f32 %v3944, %v4051
      %v4115 = vmul.f32 %v3946, %v4055
      %v4116 = vmul.f32 %v3757, %v4043
      %v4117 = vmul.f32 %v3759, %v4047
      %v4118 = vmul.f32 %v3950, %v4051
      %v4119 = vmul.f32 %v3952, %v4055
      %v4120 = vmul.f32 %v3761, %v4043
      %v4121 = vmul.f32 %v3763, %v4047
      %v4122 = vmul.f32 %v3954, %v4051
      %v4123 = vmul.f32 %v3956, %v4055
      %v4124 = vmul.f32 %v3767, %v4043
      %v4125 = vmul.f32 %v3769, %v4047
      %v4126 = vmul.f32 %v3960, %v4051
      %v4127 = vmul.f32 %v3962, %v4055
      %v4128 = vmul.f32 %v3771, %v4043
      %v4129 = vmul.f32 %v3773, %v4047
      %v4130 = vmul.f32 %v3964, %v4051
      %v4131 = vmul.f32 %v3966, %v4055
      %v4132 = vmul.f32 %v3777, %v4043
      %v4133 = vmul.f32 %v3779, %v4047
      %v4134 = vmul.f32 %v3970, %v4051
      %v4135 = vmul.f32 %v3972, %v4055
      %v4136 = vmul.f32 %v3781, %v4043
      %v4137 = vmul.f32 %v3783, %v4047
      %v4138 = vmul.f32 %v3974, %v4051
      %v4139 = vmul.f32 %v3976, %v4055
      %v4140 = vmul.f32 %v3787, %v4043
      %v4141 = vmul.f32 %v3789, %v4047
      %v4142 = vmul.f32 %v3980, %v4051
      %v4143 = vmul.f32 %v3982, %v4055
      %v4144 = vmul.f32 %v3791, %v4043
      %v4145 = vmul.f32 %v3793, %v4047
      %v4146 = vmul.f32 %v3984, %v4051
      %v4147 = vmul.f32 %v3986, %v4055
      %v4148 = vmul.f32 %v3797, %v4043
      %v4149 = vmul.f32 %v3799, %v4047
      %v4150 = vmul.f32 %v3990, %v4051
      %v4151 = vmul.f32 %v3992, %v4055
      %v4152 = vmul.f32 %v3801, %v4043
      %v4153 = vmul.f32 %v3803, %v4047
      %v4154 = vmul.f32 %v3994, %v4051
      %v4155 = vmul.f32 %v3996, %v4055
      %v4156 = vmul.f32 %v3807, %v4043
      %v4157 = vmul.f32 %v3809, %v4047
      %v4158 = vmul.f32 %v4000, %v4051
      %v4159 = vmul.f32 %v4002, %v4055
      %v4160 = vmul.f32 %v3811, %v4043
      %v4161 = vmul.f32 %v3813, %v4047
      %v4162 = vmul.f32 %v4004, %v4051
      %v4163 = vmul.f32 %v4006, %v4055
      %v4164 = vmul.f32 %v3817, %v4043
      %v4165 = vmul.f32 %v3819, %v4047
      %v4166 = vmul.f32 %v4010, %v4051
      %v4167 = vmul.f32 %v4012, %v4055
      %v4168 = vmul.f32 %v3821, %v4043
      %v4169 = vmul.f32 %v3823, %v4047
      %v4170 = vmul.f32 %v4014, %v4051
      %v4171 = vmul.f32 %v4016, %v4055
      %v4172 = vmul.f32 %v3827, %v4043
      %v4173 = vmul.f32 %v3829, %v4047
      %v4174 = vmul.f32 %v4020, %v4051
      %v4175 = vmul.f32 %v4022, %v4055
      %v4176 = vmul.f32 %v3831, %v4043
      %v4177 = vmul.f32 %v3833, %v4047
      %v4178 = vmul.f32 %v4024, %v4051
      %v4179 = vmul.f32 %v4026, %v4055
      %v4180 = vmul.f32 %v3837, %v4043
      %v4181 = vmul.f32 %v3839, %v4047
      %v4182 = vmul.f32 %v4030, %v4051
      %v4183 = vmul.f32 %v4032, %v4055
      %v4184 = vmul.f32 %v3841, %v4043
      %v4185 = vmul.f32 %v3843, %v4047
      %v4186 = vmul.f32 %v4034, %v4051
      %v4187 = vmul.f32 %v4036, %v4055
      %v4188 = vld [vmem:[%s9] sm:$0xf]
      %v4190 = vlaneseq
      %v4191 = vshrl.u32 %v4190, 7
      %v4192 = vsub.s32 0, %v4191
      %v4193 = vrot.slane %v4188, %v4192
      %v4194 = vlaneseq
      %v4195 = vshrl.u32 %v4194, 7
      %v4196 = vsub.s32 1, %v4195
      %v4197 = vrot.slane %v4188, %v4196
      %v4198 = vlaneseq
      %v4199 = vshrl.u32 %v4198, 7
      %v4200 = vsub.s32 2, %v4199
      %v4201 = vrot.slane %v4188, %v4200
      %v4202 = vlaneseq
      %v4203 = vshrl.u32 %v4202, 7
      %v4204 = vsub.s32 3, %v4203
      %v4205 = vrot.slane %v4188, %v4204
      %v4210 = vadd.f32 %v4060, %v4193
      %v4211 = vadd.f32 %v4061, %v4197
      %v4212 = vadd.f32 %v4062, %v4201
      %v4213 = vadd.f32 %v4063, %v4205
      %v4214 = vadd.f32 %v4064, %v4193
      %v4215 = vadd.f32 %v4065, %v4197
      %v4216 = vadd.f32 %v4066, %v4201
      %v4217 = vadd.f32 %v4067, %v4205
      %v4218 = vadd.f32 %v4068, %v4193
      %v4219 = vadd.f32 %v4069, %v4197
      %v4220 = vadd.f32 %v4070, %v4201
      %v4221 = vadd.f32 %v4071, %v4205
      %v4222 = vadd.f32 %v4072, %v4193
      %v4223 = vadd.f32 %v4073, %v4197
      %v4224 = vadd.f32 %v4074, %v4201
      %v4225 = vadd.f32 %v4075, %v4205
      %v4226 = vadd.f32 %v4076, %v4193
      %v4227 = vadd.f32 %v4077, %v4197
      %v4228 = vadd.f32 %v4078, %v4201
      %v4229 = vadd.f32 %v4079, %v4205
      %v4230 = vadd.f32 %v4080, %v4193
      %v4231 = vadd.f32 %v4081, %v4197
      %v4232 = vadd.f32 %v4082, %v4201
      %v4233 = vadd.f32 %v4083, %v4205
      %v4234 = vadd.f32 %v4084, %v4193
      %v4235 = vadd.f32 %v4085, %v4197
      %v4236 = vadd.f32 %v4086, %v4201
      %v4237 = vadd.f32 %v4087, %v4205
      %v4238 = vadd.f32 %v4088, %v4193
      %v4239 = vadd.f32 %v4089, %v4197
      %v4240 = vadd.f32 %v4090, %v4201
      %v4241 = vadd.f32 %v4091, %v4205
      %v4242 = vadd.f32 %v4092, %v4193
      %v4243 = vadd.f32 %v4093, %v4197
      %v4244 = vadd.f32 %v4094, %v4201
      %v4245 = vadd.f32 %v4095, %v4205
      %v4246 = vadd.f32 %v4096, %v4193
      %v4247 = vadd.f32 %v4097, %v4197
      %v4248 = vadd.f32 %v4098, %v4201
      %v4249 = vadd.f32 %v4099, %v4205
      %v4250 = vadd.f32 %v4100, %v4193
      %v4251 = vadd.f32 %v4101, %v4197
      %v4252 = vadd.f32 %v4102, %v4201
      %v4253 = vadd.f32 %v4103, %v4205
      %v4254 = vadd.f32 %v4104, %v4193
      %v4255 = vadd.f32 %v4105, %v4197
      %v4256 = vadd.f32 %v4106, %v4201
      %v4257 = vadd.f32 %v4107, %v4205
      %v4258 = vadd.f32 %v4108, %v4193
      %v4259 = vadd.f32 %v4109, %v4197
      %v4260 = vadd.f32 %v4110, %v4201
      %v4261 = vadd.f32 %v4111, %v4205
      %v4262 = vadd.f32 %v4112, %v4193
      %v4263 = vadd.f32 %v4113, %v4197
      %v4264 = vadd.f32 %v4114, %v4201
      %v4265 = vadd.f32 %v4115, %v4205
      %v4266 = vadd.f32 %v4116, %v4193
      %v4267 = vadd.f32 %v4117, %v4197
      %v4268 = vadd.f32 %v4118, %v4201
      %v4269 = vadd.f32 %v4119, %v4205
      %v4270 = vadd.f32 %v4120, %v4193
      %v4271 = vadd.f32 %v4121, %v4197
      %v4272 = vadd.f32 %v4122, %v4201
      %v4273 = vadd.f32 %v4123, %v4205
      %v4274 = vadd.f32 %v4124, %v4193
      %v4275 = vadd.f32 %v4125, %v4197
      %v4276 = vadd.f32 %v4126, %v4201
      %v4277 = vadd.f32 %v4127, %v4205
      %v4278 = vadd.f32 %v4128, %v4193
      %v4279 = vadd.f32 %v4129, %v4197
      %v4280 = vadd.f32 %v4130, %v4201
      %v4281 = vadd.f32 %v4131, %v4205
      %v4282 = vadd.f32 %v4132, %v4193
      %v4283 = vadd.f32 %v4133, %v4197
      %v4284 = vadd.f32 %v4134, %v4201
      %v4285 = vadd.f32 %v4135, %v4205
      %v4286 = vadd.f32 %v4136, %v4193
      %v4287 = vadd.f32 %v4137, %v4197
      %v4288 = vadd.f32 %v4138, %v4201
      %v4289 = vadd.f32 %v4139, %v4205
      %v4290 = vadd.f32 %v4140, %v4193
      %v4291 = vadd.f32 %v4141, %v4197
      %v4292 = vadd.f32 %v4142, %v4201
      %v4293 = vadd.f32 %v4143, %v4205
      %v4294 = vadd.f32 %v4144, %v4193
      %v4295 = vadd.f32 %v4145, %v4197
      %v4296 = vadd.f32 %v4146, %v4201
      %v4297 = vadd.f32 %v4147, %v4205
      %v4298 = vadd.f32 %v4148, %v4193
      %v4299 = vadd.f32 %v4149, %v4197
      %v4300 = vadd.f32 %v4150, %v4201
      %v4301 = vadd.f32 %v4151, %v4205
      %v4302 = vadd.f32 %v4152, %v4193
      %v4303 = vadd.f32 %v4153, %v4197
      %v4304 = vadd.f32 %v4154, %v4201
      %v4305 = vadd.f32 %v4155, %v4205
      %v4306 = vadd.f32 %v4156, %v4193
      %v4307 = vadd.f32 %v4157, %v4197
      %v4308 = vadd.f32 %v4158, %v4201
      %v4309 = vadd.f32 %v4159, %v4205
      %v4310 = vadd.f32 %v4160, %v4193
      %v4311 = vadd.f32 %v4161, %v4197
      %v4312 = vadd.f32 %v4162, %v4201
      %v4313 = vadd.f32 %v4163, %v4205
      %v4314 = vadd.f32 %v4164, %v4193
      %v4315 = vadd.f32 %v4165, %v4197
      %v4316 = vadd.f32 %v4166, %v4201
      %v4317 = vadd.f32 %v4167, %v4205
      %v4318 = vadd.f32 %v4168, %v4193
      %v4319 = vadd.f32 %v4169, %v4197
      %v4320 = vadd.f32 %v4170, %v4201
      %v4321 = vadd.f32 %v4171, %v4205
      %v4322 = vadd.f32 %v4172, %v4193
      %v4323 = vadd.f32 %v4173, %v4197
      %v4324 = vadd.f32 %v4174, %v4201
      %v4325 = vadd.f32 %v4175, %v4205
      %v4326 = vadd.f32 %v4176, %v4193
      %v4327 = vadd.f32 %v4177, %v4197
      %v4328 = vadd.f32 %v4178, %v4201
      %v4329 = vadd.f32 %v4179, %v4205
      %v4330 = vadd.f32 %v4180, %v4193
      %v4331 = vadd.f32 %v4181, %v4197
      %v4332 = vadd.f32 %v4182, %v4201
      %v4333 = vadd.f32 %v4183, %v4205
      %v4334 = vadd.f32 %v4184, %v4193
      %v4335 = vadd.f32 %v4185, %v4197
      %v4336 = vadd.f32 %v4186, %v4201
      %v4337 = vadd.f32 %v4187, %v4205
      %v4338 = vunpack.c.l.bf16 %v361
      %v4339 = vunpack.c.h.bf16 %v361
      %v4340 = vunpack.c.l.bf16 %v362
      %v4341 = vunpack.c.h.bf16 %v362
      %v4342 = vunpack.c.l.bf16 %v363
      %v4343 = vunpack.c.h.bf16 %v363
      %v4344 = vunpack.c.l.bf16 %v364
      %v4345 = vunpack.c.h.bf16 %v364
      %v4346 = vunpack.c.l.bf16 %v365
      %v4347 = vunpack.c.h.bf16 %v365
      %v4348 = vunpack.c.l.bf16 %v366
      %v4349 = vunpack.c.h.bf16 %v366
      %v4350 = vunpack.c.l.bf16 %v367
      %v4351 = vunpack.c.h.bf16 %v367
      %v4352 = vunpack.c.l.bf16 %v368
      %v4353 = vunpack.c.h.bf16 %v368
      %v4354 = vunpack.c.l.bf16 %v369
      %v4355 = vunpack.c.h.bf16 %v369
      %v4356 = vunpack.c.l.bf16 %v370
      %v4357 = vunpack.c.h.bf16 %v370
      %v4358 = vunpack.c.l.bf16 %v371
      %v4359 = vunpack.c.h.bf16 %v371
      %v4360 = vunpack.c.l.bf16 %v372
      %v4361 = vunpack.c.h.bf16 %v372
      %v4362 = vunpack.c.l.bf16 %v373
      %v4363 = vunpack.c.h.bf16 %v373
      %v4364 = vunpack.c.l.bf16 %v374
      %v4365 = vunpack.c.h.bf16 %v374
      %v4366 = vunpack.c.l.bf16 %v375
      %v4367 = vunpack.c.h.bf16 %v375
      %v4368 = vunpack.c.l.bf16 %v376
      %v4369 = vunpack.c.h.bf16 %v376
      %v4370 = vunpack.c.l.bf16 %v377
      %v4371 = vunpack.c.h.bf16 %v377
      %v4372 = vunpack.c.l.bf16 %v378
      %v4373 = vunpack.c.h.bf16 %v378
      %v4374 = vunpack.c.l.bf16 %v379
      %v4375 = vunpack.c.h.bf16 %v379
      %v4376 = vunpack.c.l.bf16 %v380
      %v4377 = vunpack.c.h.bf16 %v380
      %v4378 = vunpack.c.l.bf16 %v381
      %v4379 = vunpack.c.h.bf16 %v381
      %v4380 = vunpack.c.l.bf16 %v382
      %v4381 = vunpack.c.h.bf16 %v382
      %v4382 = vunpack.c.l.bf16 %v383
      %v4383 = vunpack.c.h.bf16 %v383
      %v4384 = vunpack.c.l.bf16 %v384
      %v4385 = vunpack.c.h.bf16 %v384
      %v4386 = vunpack.c.l.bf16 %v385
      %v4387 = vunpack.c.h.bf16 %v385
      %v4388 = vunpack.c.l.bf16 %v386
      %v4389 = vunpack.c.h.bf16 %v386
      %v4390 = vunpack.c.l.bf16 %v387
      %v4391 = vunpack.c.h.bf16 %v387
      %v4392 = vunpack.c.l.bf16 %v388
      %v4393 = vunpack.c.h.bf16 %v388
      %v4394 = vunpack.c.l.bf16 %v389
      %v4395 = vunpack.c.h.bf16 %v389
      %v4396 = vunpack.c.l.bf16 %v390
      %v4397 = vunpack.c.h.bf16 %v390
      %v4398 = vunpack.c.l.bf16 %v391
      %v4399 = vunpack.c.h.bf16 %v391
      %v4400 = vunpack.c.l.bf16 %v392
      %v4401 = vunpack.c.h.bf16 %v392
      %v4402 = vunpack.c.l.bf16 %v393
      %v4403 = vunpack.c.h.bf16 %v393
      %v4404 = vunpack.c.l.bf16 %v394
      %v4405 = vunpack.c.h.bf16 %v394
      %v4406 = vunpack.c.l.bf16 %v395
      %v4407 = vunpack.c.h.bf16 %v395
      %v4408 = vunpack.c.l.bf16 %v396
      %v4409 = vunpack.c.h.bf16 %v396
      %v4410 = vunpack.c.l.bf16 %v397
      %v4411 = vunpack.c.h.bf16 %v397
      %v4412 = vunpack.c.l.bf16 %v398
      %v4413 = vunpack.c.h.bf16 %v398
      %v4414 = vunpack.c.l.bf16 %v399
      %v4415 = vunpack.c.h.bf16 %v399
      %v4416 = vunpack.c.l.bf16 %v400
      %v4417 = vunpack.c.h.bf16 %v400
      %v4418 = vunpack.c.l.bf16 %v401
      %v4419 = vunpack.c.h.bf16 %v401
      %v4420 = vunpack.c.l.bf16 %v402
      %v4421 = vunpack.c.h.bf16 %v402
      %v4422 = vunpack.c.l.bf16 %v403
      %v4423 = vunpack.c.h.bf16 %v403
      %v4424 = vunpack.c.l.bf16 %v404
      %v4425 = vunpack.c.h.bf16 %v404
      %v4426 = vunpack.c.l.bf16 %v405
      %v4427 = vunpack.c.h.bf16 %v405
      %v4428 = vunpack.c.l.bf16 %v406
      %v4429 = vunpack.c.h.bf16 %v406
      %v4430 = vunpack.c.l.bf16 %v407
      %v4431 = vunpack.c.h.bf16 %v407
      %v4432 = vunpack.c.l.bf16 %v408
      %v4433 = vunpack.c.h.bf16 %v408
      %v4434 = vunpack.c.l.bf16 %v409
      %v4435 = vunpack.c.h.bf16 %v409
      %v4436 = vunpack.c.l.bf16 %v410
      %v4437 = vunpack.c.h.bf16 %v410
      %v4438 = vunpack.c.l.bf16 %v411
      %v4439 = vunpack.c.h.bf16 %v411
      %v4440 = vunpack.c.l.bf16 %v412
      %v4441 = vunpack.c.h.bf16 %v412
      %v4442 = vunpack.c.l.bf16 %v413
      %v4443 = vunpack.c.h.bf16 %v413
      %v4444 = vunpack.c.l.bf16 %v414
      %v4445 = vunpack.c.h.bf16 %v414
      %v4446 = vunpack.c.l.bf16 %v415
      %v4447 = vunpack.c.h.bf16 %v415
      %v4448 = vunpack.c.l.bf16 %v416
      %v4449 = vunpack.c.h.bf16 %v416
      %v4450 = vunpack.c.l.bf16 %v417
      %v4451 = vunpack.c.h.bf16 %v417
      %v4452 = vunpack.c.l.bf16 %v418
      %v4453 = vunpack.c.h.bf16 %v418
      %v4454 = vunpack.c.l.bf16 %v419
      %v4455 = vunpack.c.h.bf16 %v419
      %v4456 = vunpack.c.l.bf16 %v420
      %v4457 = vunpack.c.h.bf16 %v420
      %v4458 = vunpack.c.l.bf16 %v421
      %v4459 = vunpack.c.h.bf16 %v421
      %v4460 = vunpack.c.l.bf16 %v422
      %v4461 = vunpack.c.h.bf16 %v422
      %v4462 = vunpack.c.l.bf16 %v423
      %v4463 = vunpack.c.h.bf16 %v423
      %v4464 = vunpack.c.l.bf16 %v424
      %v4465 = vunpack.c.h.bf16 %v424
      %v4466 = vadd.f32 %v4210, %v4338
      %v4467 = vadd.f32 %v4211, %v4339
      %v4468 = vadd.f32 %v4212, %v4340
      %v4469 = vadd.f32 %v4213, %v4341
      %v4470 = vadd.f32 %v4214, %v4342
      %v4471 = vadd.f32 %v4215, %v4343
      %v4472 = vadd.f32 %v4216, %v4344
      %v4473 = vadd.f32 %v4217, %v4345
      %v4474 = vadd.f32 %v4218, %v4346
      %v4475 = vadd.f32 %v4219, %v4347
      %v4476 = vadd.f32 %v4220, %v4348
      %v4477 = vadd.f32 %v4221, %v4349
      %v4478 = vadd.f32 %v4222, %v4350
      %v4479 = vadd.f32 %v4223, %v4351
      %v4480 = vadd.f32 %v4224, %v4352
      %v4481 = vadd.f32 %v4225, %v4353
      %v4482 = vadd.f32 %v4226, %v4354
      %v4483 = vadd.f32 %v4227, %v4355
      %v4484 = vadd.f32 %v4228, %v4356
      %v4485 = vadd.f32 %v4229, %v4357
      %v4486 = vadd.f32 %v4230, %v4358
      %v4487 = vadd.f32 %v4231, %v4359
      %v4488 = vadd.f32 %v4232, %v4360
      %v4489 = vadd.f32 %v4233, %v4361
      %v4490 = vadd.f32 %v4234, %v4362
      %v4491 = vadd.f32 %v4235, %v4363
      %v4492 = vadd.f32 %v4236, %v4364
      %v4493 = vadd.f32 %v4237, %v4365
      %v4494 = vadd.f32 %v4238, %v4366
      %v4495 = vadd.f32 %v4239, %v4367
      %v4496 = vadd.f32 %v4240, %v4368
      %v4497 = vadd.f32 %v4241, %v4369
      %v4498 = vadd.f32 %v4242, %v4370
      %v4499 = vadd.f32 %v4243, %v4371
      %v4500 = vadd.f32 %v4244, %v4372
      %v4501 = vadd.f32 %v4245, %v4373
      %v4502 = vadd.f32 %v4246, %v4374
      %v4503 = vadd.f32 %v4247, %v4375
      %v4504 = vadd.f32 %v4248, %v4376
      %v4505 = vadd.f32 %v4249, %v4377
      %v4506 = vadd.f32 %v4250, %v4378
      %v4507 = vadd.f32 %v4251, %v4379
      %v4508 = vadd.f32 %v4252, %v4380
      %v4509 = vadd.f32 %v4253, %v4381
      %v4510 = vadd.f32 %v4254, %v4382
      %v4511 = vadd.f32 %v4255, %v4383
      %v4512 = vadd.f32 %v4256, %v4384
      %v4513 = vadd.f32 %v4257, %v4385
      %v4514 = vadd.f32 %v4258, %v4386
      %v4515 = vadd.f32 %v4259, %v4387
      %v4516 = vadd.f32 %v4260, %v4388
      %v4517 = vadd.f32 %v4261, %v4389
      %v4518 = vadd.f32 %v4262, %v4390
      %v4519 = vadd.f32 %v4263, %v4391
      %v4520 = vadd.f32 %v4264, %v4392
      %v4521 = vadd.f32 %v4265, %v4393
      %v4522 = vadd.f32 %v4266, %v4394
      %v4523 = vadd.f32 %v4267, %v4395
      %v4524 = vadd.f32 %v4268, %v4396
      %v4525 = vadd.f32 %v4269, %v4397
      %v4526 = vadd.f32 %v4270, %v4398
      %v4527 = vadd.f32 %v4271, %v4399
      %v4528 = vadd.f32 %v4272, %v4400
      %v4529 = vadd.f32 %v4273, %v4401
      %v4530 = vadd.f32 %v4274, %v4402
      %v4531 = vadd.f32 %v4275, %v4403
      %v4532 = vadd.f32 %v4276, %v4404
      %v4533 = vadd.f32 %v4277, %v4405
      %v4534 = vadd.f32 %v4278, %v4406
      %v4535 = vadd.f32 %v4279, %v4407
      %v4536 = vadd.f32 %v4280, %v4408
      %v4537 = vadd.f32 %v4281, %v4409
      %v4538 = vadd.f32 %v4282, %v4410
      %v4539 = vadd.f32 %v4283, %v4411
      %v4540 = vadd.f32 %v4284, %v4412
      %v4541 = vadd.f32 %v4285, %v4413
      %v4542 = vadd.f32 %v4286, %v4414
      %v4543 = vadd.f32 %v4287, %v4415
      %v4544 = vadd.f32 %v4288, %v4416
      %v4545 = vadd.f32 %v4289, %v4417
      %v4546 = vadd.f32 %v4290, %v4418
      %v4547 = vadd.f32 %v4291, %v4419
      %v4548 = vadd.f32 %v4292, %v4420
      %v4549 = vadd.f32 %v4293, %v4421
      %v4550 = vadd.f32 %v4294, %v4422
      %v4551 = vadd.f32 %v4295, %v4423
      %v4552 = vadd.f32 %v4296, %v4424
      %v4553 = vadd.f32 %v4297, %v4425
      %v4554 = vadd.f32 %v4298, %v4426
      %v4555 = vadd.f32 %v4299, %v4427
      %v4556 = vadd.f32 %v4300, %v4428
      %v4557 = vadd.f32 %v4301, %v4429
      %v4558 = vadd.f32 %v4302, %v4430
      %v4559 = vadd.f32 %v4303, %v4431
      %v4560 = vadd.f32 %v4304, %v4432
      %v4561 = vadd.f32 %v4305, %v4433
      %v4562 = vadd.f32 %v4306, %v4434
      %v4563 = vadd.f32 %v4307, %v4435
      %v4564 = vadd.f32 %v4308, %v4436
      %v4565 = vadd.f32 %v4309, %v4437
      %v4566 = vadd.f32 %v4310, %v4438
      %v4567 = vadd.f32 %v4311, %v4439
      %v4568 = vadd.f32 %v4312, %v4440
      %v4569 = vadd.f32 %v4313, %v4441
      %v4570 = vadd.f32 %v4314, %v4442
      %v4571 = vadd.f32 %v4315, %v4443
      %v4572 = vadd.f32 %v4316, %v4444
      %v4573 = vadd.f32 %v4317, %v4445
      %v4574 = vadd.f32 %v4318, %v4446
      %v4575 = vadd.f32 %v4319, %v4447
      %v4576 = vadd.f32 %v4320, %v4448
      %v4577 = vadd.f32 %v4321, %v4449
      %v4578 = vadd.f32 %v4322, %v4450
      %v4579 = vadd.f32 %v4323, %v4451
      %v4580 = vadd.f32 %v4324, %v4452
      %v4581 = vadd.f32 %v4325, %v4453
      %v4582 = vadd.f32 %v4326, %v4454
      %v4583 = vadd.f32 %v4327, %v4455
      %v4584 = vadd.f32 %v4328, %v4456
      %v4585 = vadd.f32 %v4329, %v4457
      %v4586 = vadd.f32 %v4330, %v4458
      %v4587 = vadd.f32 %v4331, %v4459
      %v4588 = vadd.f32 %v4332, %v4460
      %v4589 = vadd.f32 %v4333, %v4461
      %v4590 = vadd.f32 %v4334, %v4462
      %v4591 = vadd.f32 %v4335, %v4463
      %v4592 = vadd.f32 %v4336, %v4464
      %v4593 = vadd.f32 %v4337, %v4465
      %v4594 = vmax.f32 %v4466, 0.0
      %v4595 = vmax.f32 %v4467, 0.0
      %v4596 = vmax.f32 %v4468, 0.0
      %v4597 = vmax.f32 %v4469, 0.0
      %v4598 = vmax.f32 %v4470, 0.0
      %v4599 = vmax.f32 %v4471, 0.0
      %v4600 = vmax.f32 %v4472, 0.0
      %v4601 = vmax.f32 %v4473, 0.0
      %v4602 = vmax.f32 %v4474, 0.0
      %v4603 = vmax.f32 %v4475, 0.0
      %v4604 = vmax.f32 %v4476, 0.0
      %v4605 = vmax.f32 %v4477, 0.0
      %v4606 = vmax.f32 %v4478, 0.0
      %v4607 = vmax.f32 %v4479, 0.0
      %v4608 = vmax.f32 %v4480, 0.0
      %v4609 = vmax.f32 %v4481, 0.0
      %v4610 = vmax.f32 %v4482, 0.0
      %v4611 = vmax.f32 %v4483, 0.0
      %v4612 = vmax.f32 %v4484, 0.0
      %v4613 = vmax.f32 %v4485, 0.0
      %v4614 = vmax.f32 %v4486, 0.0
      %v4615 = vmax.f32 %v4487, 0.0
      %v4616 = vmax.f32 %v4488, 0.0
      %v4617 = vmax.f32 %v4489, 0.0
      %v4618 = vmax.f32 %v4490, 0.0
      %v4619 = vmax.f32 %v4491, 0.0
      %v4620 = vmax.f32 %v4492, 0.0
      %v4621 = vmax.f32 %v4493, 0.0
      %v4622 = vmax.f32 %v4494, 0.0
      %v4623 = vmax.f32 %v4495, 0.0
      %v4624 = vmax.f32 %v4496, 0.0
      %v4625 = vmax.f32 %v4497, 0.0
      %v4626 = vmax.f32 %v4498, 0.0
      %v4627 = vmax.f32 %v4499, 0.0
      %v4628 = vmax.f32 %v4500, 0.0
      %v4629 = vmax.f32 %v4501, 0.0
      %v4630 = vmax.f32 %v4502, 0.0
      %v4631 = vmax.f32 %v4503, 0.0
      %v4632 = vmax.f32 %v4504, 0.0
      %v4633 = vmax.f32 %v4505, 0.0
      %v4634 = vmax.f32 %v4506, 0.0
      %v4635 = vmax.f32 %v4507, 0.0
      %v4636 = vmax.f32 %v4508, 0.0
      %v4637 = vmax.f32 %v4509, 0.0
      %v4638 = vmax.f32 %v4510, 0.0
      %v4639 = vmax.f32 %v4511, 0.0
      %v4640 = vmax.f32 %v4512, 0.0
      %v4641 = vmax.f32 %v4513, 0.0
      %v4642 = vmax.f32 %v4514, 0.0
      %v4643 = vmax.f32 %v4515, 0.0
      %v4644 = vmax.f32 %v4516, 0.0
      %v4645 = vmax.f32 %v4517, 0.0
      %v4646 = vmax.f32 %v4518, 0.0
      %v4647 = vmax.f32 %v4519, 0.0
      %v4648 = vmax.f32 %v4520, 0.0
      %v4649 = vmax.f32 %v4521, 0.0
      %v4650 = vmax.f32 %v4522, 0.0
      %v4651 = vmax.f32 %v4523, 0.0
      %v4652 = vmax.f32 %v4524, 0.0
      %v4653 = vmax.f32 %v4525, 0.0
      %v4654 = vmax.f32 %v4526, 0.0
      %v4655 = vmax.f32 %v4527, 0.0
      %v4656 = vmax.f32 %v4528, 0.0
      %v4657 = vmax.f32 %v4529, 0.0
      %v4658 = vmax.f32 %v4530, 0.0
      %v4659 = vmax.f32 %v4531, 0.0
      %v4660 = vmax.f32 %v4532, 0.0
      %v4661 = vmax.f32 %v4533, 0.0
      %v4662 = vmax.f32 %v4534, 0.0
      %v4663 = vmax.f32 %v4535, 0.0
      %v4664 = vmax.f32 %v4536, 0.0
      %v4665 = vmax.f32 %v4537, 0.0
      %v4666 = vmax.f32 %v4538, 0.0
      %v4667 = vmax.f32 %v4539, 0.0
      %v4668 = vmax.f32 %v4540, 0.0
      %v4669 = vmax.f32 %v4541, 0.0
      %v4670 = vmax.f32 %v4542, 0.0
      %v4671 = vmax.f32 %v4543, 0.0
      %v4672 = vmax.f32 %v4544, 0.0
      %v4673 = vmax.f32 %v4545, 0.0
      %v4674 = vmax.f32 %v4546, 0.0
      %v4675 = vmax.f32 %v4547, 0.0
      %v4676 = vmax.f32 %v4548, 0.0
      %v4677 = vmax.f32 %v4549, 0.0
      %v4678 = vmax.f32 %v4550, 0.0
      %v4679 = vmax.f32 %v4551, 0.0
      %v4680 = vmax.f32 %v4552, 0.0
      %v4681 = vmax.f32 %v4553, 0.0
      %v4682 = vmax.f32 %v4554, 0.0
      %v4683 = vmax.f32 %v4555, 0.0
      %v4684 = vmax.f32 %v4556, 0.0
      %v4685 = vmax.f32 %v4557, 0.0
      %v4686 = vmax.f32 %v4558, 0.0
      %v4687 = vmax.f32 %v4559, 0.0
      %v4688 = vmax.f32 %v4560, 0.0
      %v4689 = vmax.f32 %v4561, 0.0
      %v4690 = vmax.f32 %v4562, 0.0
      %v4691 = vmax.f32 %v4563, 0.0
      %v4692 = vmax.f32 %v4564, 0.0
      %v4693 = vmax.f32 %v4565, 0.0
      %v4694 = vmax.f32 %v4566, 0.0
      %v4695 = vmax.f32 %v4567, 0.0
      %v4696 = vmax.f32 %v4568, 0.0
      %v4697 = vmax.f32 %v4569, 0.0
      %v4698 = vmax.f32 %v4570, 0.0
      %v4699 = vmax.f32 %v4571, 0.0
      %v4700 = vmax.f32 %v4572, 0.0
      %v4701 = vmax.f32 %v4573, 0.0
      %v4702 = vmax.f32 %v4574, 0.0
      %v4703 = vmax.f32 %v4575, 0.0
      %v4704 = vmax.f32 %v4576, 0.0
      %v4705 = vmax.f32 %v4577, 0.0
      %v4706 = vmax.f32 %v4578, 0.0
      %v4707 = vmax.f32 %v4579, 0.0
      %v4708 = vmax.f32 %v4580, 0.0
      %v4709 = vmax.f32 %v4581, 0.0
      %v4710 = vmax.f32 %v4582, 0.0
      %v4711 = vmax.f32 %v4583, 0.0
      %v4712 = vmax.f32 %v4584, 0.0
      %v4713 = vmax.f32 %v4585, 0.0
      %v4714 = vmax.f32 %v4586, 0.0
      %v4715 = vmax.f32 %v4587, 0.0
      %v4716 = vmax.f32 %v4588, 0.0
      %v4717 = vmax.f32 %v4589, 0.0
      %v4718 = vmax.f32 %v4590, 0.0
      %v4719 = vmax.f32 %v4591, 0.0
      %v4720 = vmax.f32 %v4592, 0.0
      %v4721 = vmax.f32 %v4593, 0.0
      %v4722 = vpack.c.bf16 %v4598, %v4594
      %v4723 = vpack.c.bf16 %v4599, %v4595
      %v4724 = vpack.c.bf16 %v4600, %v4596
      %v4725 = vpack.c.bf16 %v4601, %v4597
      %v4726 = vpack.c.bf16 %v4606, %v4602
      %v4727 = vpack.c.bf16 %v4607, %v4603
      %v4728 = vpack.c.bf16 %v4608, %v4604
      %v4729 = vpack.c.bf16 %v4609, %v4605
      %v4730 = vpack.c.bf16 %v4614, %v4610
      %v4731 = vpack.c.bf16 %v4615, %v4611
      %v4732 = vpack.c.bf16 %v4616, %v4612
      %v4733 = vpack.c.bf16 %v4617, %v4613
      %v4734 = vpack.c.bf16 %v4622, %v4618
      %v4735 = vpack.c.bf16 %v4623, %v4619
      %v4736 = vpack.c.bf16 %v4624, %v4620
      %v4737 = vpack.c.bf16 %v4625, %v4621
      %v4738 = vpack.c.bf16 %v4630, %v4626
      %v4739 = vpack.c.bf16 %v4631, %v4627
      %v4740 = vpack.c.bf16 %v4632, %v4628
      %v4741 = vpack.c.bf16 %v4633, %v4629
      %v4742 = vpack.c.bf16 %v4638, %v4634
      %v4743 = vpack.c.bf16 %v4639, %v4635
      %v4744 = vpack.c.bf16 %v4640, %v4636
      %v4745 = vpack.c.bf16 %v4641, %v4637
      %v4746 = vpack.c.bf16 %v4646, %v4642
      %v4747 = vpack.c.bf16 %v4647, %v4643
      %v4748 = vpack.c.bf16 %v4648, %v4644
      %v4749 = vpack.c.bf16 %v4649, %v4645
      %v4750 = vpack.c.bf16 %v4654, %v4650
      %v4751 = vpack.c.bf16 %v4655, %v4651
      %v4752 = vpack.c.bf16 %v4656, %v4652
      %v4753 = vpack.c.bf16 %v4657, %v4653
      %v4754 = vpack.c.bf16 %v4662, %v4658
      %v4755 = vpack.c.bf16 %v4663, %v4659
      %v4756 = vpack.c.bf16 %v4664, %v4660
      %v4757 = vpack.c.bf16 %v4665, %v4661
      %v4758 = vpack.c.bf16 %v4670, %v4666
      %v4759 = vpack.c.bf16 %v4671, %v4667
      %v4760 = vpack.c.bf16 %v4672, %v4668
      %v4761 = vpack.c.bf16 %v4673, %v4669
      %v4762 = vpack.c.bf16 %v4678, %v4674
      %v4763 = vpack.c.bf16 %v4679, %v4675
      %v4764 = vpack.c.bf16 %v4680, %v4676
      %v4765 = vpack.c.bf16 %v4681, %v4677
      %v4766 = vpack.c.bf16 %v4686, %v4682
      %v4767 = vpack.c.bf16 %v4687, %v4683
      %v4768 = vpack.c.bf16 %v4688, %v4684
      %v4769 = vpack.c.bf16 %v4689, %v4685
      %v4770 = vpack.c.bf16 %v4694, %v4690
      %v4771 = vpack.c.bf16 %v4695, %v4691
      %v4772 = vpack.c.bf16 %v4696, %v4692
      %v4773 = vpack.c.bf16 %v4697, %v4693
      %v4774 = vpack.c.bf16 %v4702, %v4698
      %v4775 = vpack.c.bf16 %v4703, %v4699
      %v4776 = vpack.c.bf16 %v4704, %v4700
      %v4777 = vpack.c.bf16 %v4705, %v4701
      %v4778 = vpack.c.bf16 %v4710, %v4706
      %v4779 = vpack.c.bf16 %v4711, %v4707
      %v4780 = vpack.c.bf16 %v4712, %v4708
      %v4781 = vpack.c.bf16 %v4713, %v4709
      %v4782 = vpack.c.bf16 %v4718, %v4714
      %v4783 = vpack.c.bf16 %v4719, %v4715
      %v4784 = vpack.c.bf16 %v4720, %v4716
      %v4785 = vpack.c.bf16 %v4721, %v4717
      %v4850 = vunpack.c.l.b16 %v4722
      %v4851 = vunpack.c.l.b16 %v4723
      %v4852 = vunpack.c.l.b16 %v4724
      %v4853 = vunpack.c.l.b16 %v4725
      %v4854 = vunpack.c.h.b16 %v4722
      %v4855 = vunpack.c.h.b16 %v4723
      %v4856 = vunpack.c.h.b16 %v4724
      %v4857 = vunpack.c.h.b16 %v4725
      %v4858 = vunpack.c.l.b16 %v4726
      %v4859 = vunpack.c.l.b16 %v4727
      %v4860 = vunpack.c.l.b16 %v4728
      %v4861 = vunpack.c.l.b16 %v4729
      %v4862 = vunpack.c.h.b16 %v4726
      %v4863 = vunpack.c.h.b16 %v4727
      %v4864 = vunpack.c.h.b16 %v4728
      %v4865 = vunpack.c.h.b16 %v4729
      %v4866 = vunpack.c.l.b16 %v4730
      %v4867 = vunpack.c.l.b16 %v4731
      %v4868 = vunpack.c.l.b16 %v4732
      %v4869 = vunpack.c.l.b16 %v4733
      %v4870 = vunpack.c.h.b16 %v4730
      %v4871 = vunpack.c.h.b16 %v4731
      %v4872 = vunpack.c.h.b16 %v4732
      %v4873 = vunpack.c.h.b16 %v4733
      %v4874 = vunpack.c.l.b16 %v4734
      %v4875 = vunpack.c.l.b16 %v4735
      %v4876 = vunpack.c.l.b16 %v4736
      %v4877 = vunpack.c.l.b16 %v4737
      %v4878 = vunpack.c.h.b16 %v4734
      %v4879 = vunpack.c.h.b16 %v4735
      %v4880 = vunpack.c.h.b16 %v4736
      %v4881 = vunpack.c.h.b16 %v4737
      %v4882 = vunpack.c.l.b16 %v4738
      %v4883 = vunpack.c.l.b16 %v4739
      %v4884 = vunpack.c.l.b16 %v4740
      %v4885 = vunpack.c.l.b16 %v4741
      %v4886 = vunpack.c.h.b16 %v4738
      %v4887 = vunpack.c.h.b16 %v4739
      %v4888 = vunpack.c.h.b16 %v4740
      %v4889 = vunpack.c.h.b16 %v4741
      %v4890 = vunpack.c.l.b16 %v4742
      %v4891 = vunpack.c.l.b16 %v4743
      %v4892 = vunpack.c.l.b16 %v4744
      %v4893 = vunpack.c.l.b16 %v4745
      %v4894 = vunpack.c.h.b16 %v4742
      %v4895 = vunpack.c.h.b16 %v4743
      %v4896 = vunpack.c.h.b16 %v4744
      %v4897 = vunpack.c.h.b16 %v4745
      %v4898 = vunpack.c.l.b16 %v4746
      %v4899 = vunpack.c.l.b16 %v4747
      %v4900 = vunpack.c.l.b16 %v4748
      %v4901 = vunpack.c.l.b16 %v4749
      %v4902 = vunpack.c.h.b16 %v4746
      %v4903 = vunpack.c.h.b16 %v4747
      %v4904 = vunpack.c.h.b16 %v4748
      %v4905 = vunpack.c.h.b16 %v4749
      %v4906 = vunpack.c.l.b16 %v4750
      %v4907 = vunpack.c.l.b16 %v4751
      %v4908 = vunpack.c.l.b16 %v4752
      %v4909 = vunpack.c.l.b16 %v4753
      %v4910 = vunpack.c.h.b16 %v4750
      %v4911 = vunpack.c.h.b16 %v4751
      %v4912 = vunpack.c.h.b16 %v4752
      %v4913 = vunpack.c.h.b16 %v4753
      %v4914 = vunpack.c.l.b16 %v4754
      %v4915 = vunpack.c.l.b16 %v4755
      %v4916 = vunpack.c.l.b16 %v4756
      %v4917 = vunpack.c.l.b16 %v4757
      %v4918 = vunpack.c.h.b16 %v4754
      %v4919 = vunpack.c.h.b16 %v4755
      %v4920 = vunpack.c.h.b16 %v4756
      %v4921 = vunpack.c.h.b16 %v4757
      %v4922 = vunpack.c.l.b16 %v4758
      %v4923 = vunpack.c.l.b16 %v4759
      %v4924 = vunpack.c.l.b16 %v4760
      %v4925 = vunpack.c.l.b16 %v4761
      %v4926 = vunpack.c.h.b16 %v4758
      %v4927 = vunpack.c.h.b16 %v4759
      %v4928 = vunpack.c.h.b16 %v4760
      %v4929 = vunpack.c.h.b16 %v4761
      %v4930 = vunpack.c.l.b16 %v4762
      %v4931 = vunpack.c.l.b16 %v4763
      %v4932 = vunpack.c.l.b16 %v4764
      %v4933 = vunpack.c.l.b16 %v4765
      %v4934 = vunpack.c.h.b16 %v4762
      %v4935 = vunpack.c.h.b16 %v4763
      %v4936 = vunpack.c.h.b16 %v4764
      %v4937 = vunpack.c.h.b16 %v4765
      %v4938 = vunpack.c.l.b16 %v4766
      %v4939 = vunpack.c.l.b16 %v4767
      %v4940 = vunpack.c.l.b16 %v4768
      %v4941 = vunpack.c.l.b16 %v4769
      %v4942 = vunpack.c.h.b16 %v4766
      %v4943 = vunpack.c.h.b16 %v4767
      %v4944 = vunpack.c.h.b16 %v4768
      %v4945 = vunpack.c.h.b16 %v4769
      %v4946 = vunpack.c.l.b16 %v4770
      %v4947 = vunpack.c.l.b16 %v4771
      %v4948 = vunpack.c.l.b16 %v4772
      %v4949 = vunpack.c.l.b16 %v4773
      %v4950 = vunpack.c.h.b16 %v4770
      %v4951 = vunpack.c.h.b16 %v4771
      %v4952 = vunpack.c.h.b16 %v4772
      %v4953 = vunpack.c.h.b16 %v4773
      %v4954 = vunpack.c.l.b16 %v4774
      %v4955 = vunpack.c.l.b16 %v4775
      %v4956 = vunpack.c.l.b16 %v4776
      %v4957 = vunpack.c.l.b16 %v4777
      %v4958 = vunpack.c.h.b16 %v4774
      %v4959 = vunpack.c.h.b16 %v4775
      %v4960 = vunpack.c.h.b16 %v4776
      %v4961 = vunpack.c.h.b16 %v4777
      %v4962 = vunpack.c.l.b16 %v4778
      %v4963 = vunpack.c.l.b16 %v4779
      %v4964 = vunpack.c.l.b16 %v4780
      %v4965 = vunpack.c.l.b16 %v4781
      %v4966 = vunpack.c.h.b16 %v4778
      %v4967 = vunpack.c.h.b16 %v4779
      %v4968 = vunpack.c.h.b16 %v4780
      %v4969 = vunpack.c.h.b16 %v4781
      %v4970 = vunpack.c.l.b16 %v4782
      %v4971 = vunpack.c.l.b16 %v4783
      %v4972 = vunpack.c.l.b16 %v4784
      %v4973 = vunpack.c.l.b16 %v4785
      %v4974 = vunpack.c.h.b16 %v4782
      %v4975 = vunpack.c.h.b16 %v4783
      %v4976 = vunpack.c.h.b16 %v4784
      %v4977 = vunpack.c.h.b16 %v4785
      %v4978 = vpack.c.b16 %v4851, %v4850
      %v4979 = vpack.c.b16 %v4853, %v4852
      %v4980 = vpack.c.b16 %v4855, %v4854
      %v4981 = vpack.c.b16 %v4857, %v4856
      %v4982 = vpack.c.b16 %v4859, %v4858
      %v4983 = vpack.c.b16 %v4861, %v4860
      %v4984 = vpack.c.b16 %v4863, %v4862
      %v4985 = vpack.c.b16 %v4865, %v4864
      %v4986 = vpack.c.b16 %v4867, %v4866
      %v4987 = vpack.c.b16 %v4869, %v4868
      %v4988 = vpack.c.b16 %v4871, %v4870
      %v4989 = vpack.c.b16 %v4873, %v4872
      %v4990 = vpack.c.b16 %v4875, %v4874
      %v4991 = vpack.c.b16 %v4877, %v4876
      %v4992 = vpack.c.b16 %v4879, %v4878
      %v4993 = vpack.c.b16 %v4881, %v4880
      %v4994 = vpack.c.b16 %v4883, %v4882
      %v4995 = vpack.c.b16 %v4885, %v4884
      %v4996 = vpack.c.b16 %v4887, %v4886
      %v4997 = vpack.c.b16 %v4889, %v4888
      %v4998 = vpack.c.b16 %v4891, %v4890
      %v4999 = vpack.c.b16 %v4893, %v4892
      %v5000 = vpack.c.b16 %v4895, %v4894
      %v5001 = vpack.c.b16 %v4897, %v4896
      %v5002 = vpack.c.b16 %v4899, %v4898
      %v5003 = vpack.c.b16 %v4901, %v4900
      %v5004 = vpack.c.b16 %v4903, %v4902
      %v5005 = vpack.c.b16 %v4905, %v4904
      %v5006 = vpack.c.b16 %v4907, %v4906
      %v5007 = vpack.c.b16 %v4909, %v4908
      %v5008 = vpack.c.b16 %v4911, %v4910
      %v5009 = vpack.c.b16 %v4913, %v4912
      %v5010 = vpack.c.b16 %v4915, %v4914
      %v5011 = vpack.c.b16 %v4917, %v4916
      %v5012 = vpack.c.b16 %v4919, %v4918
      %v5013 = vpack.c.b16 %v4921, %v4920
      %v5014 = vpack.c.b16 %v4923, %v4922
      %v5015 = vpack.c.b16 %v4925, %v4924
      %v5016 = vpack.c.b16 %v4927, %v4926
      %v5017 = vpack.c.b16 %v4929, %v4928
      %v5018 = vpack.c.b16 %v4931, %v4930
      %v5019 = vpack.c.b16 %v4933, %v4932
      %v5020 = vpack.c.b16 %v4935, %v4934
      %v5021 = vpack.c.b16 %v4937, %v4936
      %v5022 = vpack.c.b16 %v4939, %v4938
      %v5023 = vpack.c.b16 %v4941, %v4940
      %v5024 = vpack.c.b16 %v4943, %v4942
      %v5025 = vpack.c.b16 %v4945, %v4944
      %v5026 = vpack.c.b16 %v4947, %v4946
      %v5027 = vpack.c.b16 %v4949, %v4948
      %v5028 = vpack.c.b16 %v4951, %v4950
      %v5029 = vpack.c.b16 %v4953, %v4952
      %v5030 = vpack.c.b16 %v4955, %v4954
      %v5031 = vpack.c.b16 %v4957, %v4956
      %v5032 = vpack.c.b16 %v4959, %v4958
      %v5033 = vpack.c.b16 %v4961, %v4960
      %v5034 = vpack.c.b16 %v4963, %v4962
      %v5035 = vpack.c.b16 %v4965, %v4964
      %v5036 = vpack.c.b16 %v4967, %v4966
      %v5037 = vpack.c.b16 %v4969, %v4968
      %v5038 = vpack.c.b16 %v4971, %v4970
      %v5039 = vpack.c.b16 %v4973, %v4972
      %v5040 = vpack.c.b16 %v4975, %v4974
      %v5041 = vpack.c.b16 %v4977, %v4976
      %5106 = vst [vmem:[%s359] sm:$0xff] %v4978
      %5107 = vst [vmem:[%s359 + $0x8] sm:$0xff] %v4979
      %5108 = vst [vmem:[%s359 + $0x10] sm:$0xff] %v4980
      %5109 = vst [vmem:[%s359 + $0x18] sm:$0xff] %v4981
      %5110 = vst [vmem:[%s359 + $0x20] sm:$0xff] %v4982
      %5111 = vst [vmem:[%s359 + $0x28] sm:$0xff] %v4983
      %5112 = vst [vmem:[%s359 + $0x30] sm:$0xff] %v4984
      %5113 = vst [vmem:[%s359 + $0x38] sm:$0xff] %v4985
      %5114 = vst [vmem:[%s359 + $0x40] sm:$0xff] %v4986
      %5115 = vst [vmem:[%s359 + $0x48] sm:$0xff] %v4987
      %5116 = vst [vmem:[%s359 + $0x50] sm:$0xff] %v4988
      %5117 = vst [vmem:[%s359 + $0x58] sm:$0xff] %v4989
      %5118 = vst [vmem:[%s359 + $0x60] sm:$0xff] %v4990
      %5119 = vst [vmem:[%s359 + $0x68] sm:$0xff] %v4991
      %5120 = vst [vmem:[%s359 + $0x70] sm:$0xff] %v4992
      %5121 = vst [vmem:[%s359 + $0x78] sm:$0xff] %v4993
      %5122 = vst [vmem:[%s359 + $0x80] sm:$0xff] %v4994
      %5123 = vst [vmem:[%s359 + $0x88] sm:$0xff] %v4995
      %5124 = vst [vmem:[%s359 + $0x90] sm:$0xff] %v4996
      %5125 = vst [vmem:[%s359 + $0x98] sm:$0xff] %v4997
      %5126 = vst [vmem:[%s359 + $0xa0] sm:$0xff] %v4998
      %5127 = vst [vmem:[%s359 + $0xa8] sm:$0xff] %v4999
      %5128 = vst [vmem:[%s359 + $0xb0] sm:$0xff] %v5000
      %5129 = vst [vmem:[%s359 + $0xb8] sm:$0xff] %v5001
      %5130 = vst [vmem:[%s359 + $0xc0] sm:$0xff] %v5002
      %5131 = vst [vmem:[%s359 + $0xc8] sm:$0xff] %v5003
      %5132 = vst [vmem:[%s359 + $0xd0] sm:$0xff] %v5004
      %5133 = vst [vmem:[%s359 + $0xd8] sm:$0xff] %v5005
      %5134 = vst [vmem:[%s359 + $0xe0] sm:$0xff] %v5006
      %5135 = vst [vmem:[%s359 + $0xe8] sm:$0xff] %v5007
      %5136 = vst [vmem:[%s359 + $0xf0] sm:$0xff] %v5008
      %5137 = vst [vmem:[%s359 + $0xf8] sm:$0xff] %v5009
      %5138 = vst [vmem:[%s359 + $0x100] sm:$0xff] %v5010
      %5139 = vst [vmem:[%s359 + $0x108] sm:$0xff] %v5011
      %5140 = vst [vmem:[%s359 + $0x110] sm:$0xff] %v5012
      %5141 = vst [vmem:[%s359 + $0x118] sm:$0xff] %v5013
      %5142 = vst [vmem:[%s359 + $0x120] sm:$0xff] %v5014
      %5143 = vst [vmem:[%s359 + $0x128] sm:$0xff] %v5015
      %5144 = vst [vmem:[%s359 + $0x130] sm:$0xff] %v5016
      %5145 = vst [vmem:[%s359 + $0x138] sm:$0xff] %v5017
      %5146 = vst [vmem:[%s359 + $0x140] sm:$0xff] %v5018
      %5147 = vst [vmem:[%s359 + $0x148] sm:$0xff] %v5019
      %5148 = vst [vmem:[%s359 + $0x150] sm:$0xff] %v5020
      %5149 = vst [vmem:[%s359 + $0x158] sm:$0xff] %v5021
      %5150 = vst [vmem:[%s359 + $0x160] sm:$0xff] %v5022
      %5151 = vst [vmem:[%s359 + $0x168] sm:$0xff] %v5023
      %5152 = vst [vmem:[%s359 + $0x170] sm:$0xff] %v5024
      %5153 = vst [vmem:[%s359 + $0x178] sm:$0xff] %v5025
      %5154 = vst [vmem:[%s359 + $0x180] sm:$0xff] %v5026
      %5155 = vst [vmem:[%s359 + $0x188] sm:$0xff] %v5027
      %5156 = vst [vmem:[%s359 + $0x190] sm:$0xff] %v5028
      %5157 = vst [vmem:[%s359 + $0x198] sm:$0xff] %v5029
      %5158 = vst [vmem:[%s359 + $0x1a0] sm:$0xff] %v5030
      %5159 = vst [vmem:[%s359 + $0x1a8] sm:$0xff] %v5031
      %5160 = vst [vmem:[%s359 + $0x1b0] sm:$0xff] %v5032
      %5161 = vst [vmem:[%s359 + $0x1b8] sm:$0xff] %v5033
      %5162 = vst [vmem:[%s359 + $0x1c0] sm:$0xff] %v5034
      %5163 = vst [vmem:[%s359 + $0x1c8] sm:$0xff] %v5035
      %5164 = vst [vmem:[%s359 + $0x1d0] sm:$0xff] %v5036
      %5165 = vst [vmem:[%s359 + $0x1d8] sm:$0xff] %v5037
      %5166 = vst [vmem:[%s359 + $0x1e0] sm:$0xff] %v5038
      %5167 = vst [vmem:[%s359 + $0x1e8] sm:$0xff] %v5039
      %5168 = vst [vmem:[%s359 + $0x1f0] sm:$0xff] %v5040
      %5169 = vst [vmem:[%s359 + $0x1f8] sm:$0xff] %v5041
      %p5170 = scmp.lt.s32.totalorder %s21, 1
      %s5171 = scalar_select %p5170, %s21, 1
      %s5172 = smul.addr %s5171, 128
      %s5173 = smul.addr %s5172, 4
      %s5174 = scalar_lea.vmem %s10, %s5173
      // Predicated region
      $region61: #{bottleneck_forward.1} parent=59 // pred_check
        %p5175 = pneg %p254
      $region62: #{bottleneck_forward.1} parent=59 // pred_check_branch
        %5177 = sbr.rel (%p5175) target = $region64
      $region63: #{bottleneck_forward.1} parent=59 // pred_region
        _
      $region64: #{bottleneck_forward.1} parent=59 // pred_fallthru
        _
    $region60: #{bottleneck_forward.1} parent=5 // pred_fallthru
      _
    %p5178 = scmp.le.s32.totalorder 2, %s16
    // Predicated region
    $region65: #{bottleneck_forward.1} parent=5 // pred_check
      %p5179 = pneg %p5178
    $region66: #{bottleneck_forward.1} parent=5 // pred_check_branch
      %5181 = sbr.rel (%p5179) target = $region68
    $region67: #{bottleneck_forward.1} parent=5 // pred_region
      %s5182 = ssub.s32 %s16, 2
      // Predicated region
      $region69: #{bottleneck_forward.1} parent=67 // pred_check
        %p5183 = pneg %p260
      $region70: #{bottleneck_forward.1} parent=67 // pred_check_branch
        %5185 = sbr.rel (%p5183) target = $region72
      $region71: #{bottleneck_forward.1} parent=67 // pred_region
        %p5186 = scmp.lt.s32.totalorder %s22, 1
        %s5187 = scalar_select %p5186, %s22, 1
        %s5188 = smul.addr %s5187, 128
        %s5189 = smul.addr %s5188, 4
        %s5190 = scalar_lea.vmem %s10, %s5189
      $region72: #{bottleneck_forward.1} parent=67 // pred_fallthru
        _
    $region68: #{bottleneck_forward.1} parent=5 // pred_fallthru
      _
  $region6: #{bottleneck_forward.1} parent=0 // loop_footer
    %s20 = sadd.s32 1, %s16
  $region7: #{bottleneck_forward.1} parent=0 // loop_footer_branch
    %15 = sbr.rel target = $region3
  $region8: #{bottleneck_forward.1} parent=0 // loop_exit
    _

</llo_original>
